<compile_context>
chip_gen: v6e
topology: v6e:2x2x1
jax: 0.10.0
libtpu: 0.0.40
codegen_flags: <defaults>
</compile_context>

<pallas_src>
import numpy as np
import jax
import jax.numpy as jnp
from jax.experimental import pallas as pl
from jax.experimental.pallas import tpu as pltpu


def _round_up(a, b):
    return -(-a // b) * b


def _basis_terms(n_order):
    """Lagrange basis / 1st / 2nd derivatives expressed as sums of
    constant-scaled products of (x - nodes[m]) factors.

    Returns (nodes, phi_terms, dphi_terms, ddphi_terms); each *_terms is a list
    over j of term lists [(python_const, [node indices of vector factors]), ...].
    """
    nodes = np.linspace(-1.0, 1.0, n_order + 1)
    rng = range(n_order + 1)
    phi_t, dphi_t, ddphi_t = [], [], []
    for j in rng:
        # phi_j : single product term
        ms = [m for m in rng if m != j]
        c = 1.0
        for m in ms:
            c /= (nodes[j] - nodes[m])
        phi_t.append([(float(c), ms)])

        # dphi_j : sum over i != j
        terms = []
        for i in rng:
            if i == j:
                continue
            ms = [m for m in rng if m not in (i, j)]
            c = 1.0 / (nodes[j] - nodes[i])
            for m in ms:
                c /= (nodes[j] - nodes[m])
            terms.append((float(c), ms))
        dphi_t.append(terms)

        # ddphi_j : sum over i != j, m != i,j
        terms = []
        for i in rng:
            if i == j:
                continue
            for m in rng:
                if m in (i, j):
                    continue
                ns = [n for n in rng if n not in (i, j, m)]
                c = 1.0 / ((nodes[j] - nodes[i]) * (nodes[j] - nodes[m]))
                for n in ns:
                    c /= (nodes[j] - nodes[n])
                terms.append((float(c), ns))
        ddphi_t.append(terms)
    return nodes, phi_t, dphi_t, ddphi_t


def _eval_terms(x_t, terms, nodes, scale):
    """sum_k (scale * const_k) * prod_m (x_t - nodes[m]) — no ones/zeros init."""
    total = None
    for c, ms in terms:
        cc = float(c) * float(scale)
        if ms:
            p = (x_t - float(nodes[ms[0]])) * cc
            for m in ms[1:]:
                p = p * (x_t - float(nodes[m]))
        else:
            p = jnp.full(x_t.shape, cc, x_t.dtype)
        total = p if total is None else total + p
    if total is None:  # e.g. ddphi for n_order < 2
        total = jnp.zeros_like(x_t)
    return total


def _make_kernel(n_order, n_elements, x_min, x_max):
    n_nodes = n_elements * n_order + 1
    nodes, phi_t, dphi_t, ddphi_t = _basis_terms(n_order)
    delta_x = 0.5 * n_order * (x_max - x_min) / (n_nodes - 1)
    inv_dx1 = 1.0 / delta_x
    inv_dx2 = 1.0 / (delta_x * delta_x)
    shift_scale = float(n_nodes - 1) / float(x_max - x_min)
    half_order = 0.5 * float(n_order)
    two_over_order = 2.0 / float(n_order)

    def kernel(x_ref, w_ref, phi_ref, dphi_ref, ddphi_ref,
               t_ref, dt_ref, ddt_ref):
        n_width, ts = x_ref.shape
        x = x_ref[...]                                     # (W, TS) f32

        # Shift to the natural line and locate the element (clamped).
        x_shift = (x - float(x_min)) * shift_scale
        id_elem = jnp.floor(x_shift / float(n_order))
        id_elem = jnp.clip(id_elem, 0.0, float(n_elements - 1))
        nodes_l_f = id_elem * float(n_order)
        nodes_l = nodes_l_f.astype(jnp.int32)              # (W, TS)

        # Reference coordinate in [-1, 1]: constant multiply, no vector divide.
        x_t = (x_shift - nodes_l_f - half_order) * two_over_order

        # Local basis / derivatives; delta_x scalings folded into the constants.
        phi_loc = [_eval_terms(x_t, phi_t[j], nodes, 1.0)
                   for j in range(n_order + 1)]
        dphi_loc = [_eval_terms(x_t, dphi_t[j], nodes, inv_dx1)
                    for j in range(n_order + 1)]
        ddphi_loc = [_eval_terms(x_t, ddphi_t[j], nodes, inv_dx2)
                     for j in range(n_order + 1)]

        # One-hot scatter into the global node axis.  The relative node index
        # is computed once and reused across the j loop (hoisted broadcast).
        rel = (jax.lax.broadcasted_iota(jnp.int32, (n_width, n_nodes, ts), 1)
               - nodes_l[:, None, :])                      # (W, P, TS)
        phi = jnp.zeros((n_width, n_nodes, ts), jnp.float32)
        dphi = jnp.zeros_like(phi)
        ddphi = jnp.zeros_like(phi)
        for j in range(n_order + 1):
            msk = rel == j
            phi = jnp.where(msk, phi_loc[j][:, None, :], phi)
            dphi = jnp.where(msk, dphi_loc[j][:, None, :], dphi)
            ddphi = jnp.where(msk, ddphi_loc[j][:, None, :], ddphi)

        phi_ref[...] = phi
        dphi_ref[...] = dphi
        ddphi_ref[...] = ddphi

        # 'kp,ikp->ik' contractions fused in-kernel on the lane-dense tile
        # (reduction over the tiny node/sublane axis; MXU not worth it here).
        w_b = w_ref[...][:, :, None]                       # (W, P, 1)
        t_ref[...] = jnp.sum(phi * w_b, axis=1)
        dt_ref[...] = jnp.sum(dphi * w_b, axis=1)
        ddt_ref[...] = jnp.sum(ddphi * w_b, axis=1)

    return kernel, delta_x, n_nodes


def lagrange_kann_forward(x, weight, *, n_width, n_order, n_elements,
                          n_samples, x_min, x_max, tile_samples=512):
    """JAX/Pallas equivalent of LagrangeKANNmanouter.forward."""
    x = jnp.asarray(x, jnp.float32)
    weight = jnp.asarray(weight, jnp.float32)

    # Lane-dense layout: width on sublanes, samples on lanes.
    if x.ndim == 2:
        x_ws = x.T                                         # (W, S)
    else:
        # torch: unsqueeze(-1) + repeat_interleave(n_width, -1)
        x_ws = jnp.broadcast_to(x[None, :], (n_width, x.shape[0]))
    s = x_ws.shape[1]
    assert s == n_samples and x_ws.shape[0] == n_width

    kernel, delta_x, n_nodes = _make_kernel(n_order, n_elements, x_min, x_max)

    # Sample tiling: lane-aligned (multiples of 128), padded to a whole grid.
    ts = min(int(tile_samples), _round_up(s, 128))
    ts = _round_up(ts, 128)
    s_pad = _round_up(s, ts)
    if s_pad != s:
        x_ws = jnp.pad(x_ws, ((0, 0), (0, s_pad - s)),
                       constant_values=float(x_min))
    grid = (s_pad // ts,)

    out_shape = (
        jax.ShapeDtypeStruct((n_width, n_nodes, s_pad), jnp.float32),  # phi
        jax.ShapeDtypeStruct((n_width, n_nodes, s_pad), jnp.float32),  # dphi
        jax.ShapeDtypeStruct((n_width, n_nodes, s_pad), jnp.float32),  # ddphi
        jax.ShapeDtypeStruct((n_width, s_pad), jnp.float32),           # t
        jax.ShapeDtypeStruct((n_width, s_pad), jnp.float32),           # dt
        jax.ShapeDtypeStruct((n_width, s_pad), jnp.float32),           # ddt
    )
    basis_spec = pl.BlockSpec((n_width, n_nodes, ts), lambda i: (0, 0, i))
    vec_spec = pl.BlockSpec((n_width, ts), lambda i: (0, i))

    phi, dphi, ddphi, t_ik, dt_ik, ddt_ik = pl.pallas_call(
        kernel,
        out_shape=out_shape,
        grid=grid,
        in_specs=[vec_spec,
                  pl.BlockSpec((n_width, n_nodes), lambda i: (0, 0))],
        out_specs=(basis_spec, basis_spec, basis_spec,
                   vec_spec, vec_spec, vec_spec),
        compiler_params=pltpu.CompilerParams(
            dimension_semantics=("parallel",)),
    )(x_ws, weight)

    # Back to the module's (samples, width, nodes) layout (wrapper-side layout
    # plumbing; the kernel itself stays lane-dense).
    phi = jnp.transpose(phi[:, :, :s], (2, 0, 1))
    dphi = jnp.transpose(dphi[:, :, :s], (2, 0, 1))
    ddphi = jnp.transpose(ddphi[:, :, :s], (2, 0, 1))
    t_ik = t_ik[:, :s].T
    dt_ik = dt_ik[:, :s].T
    ddt_ik = ddt_ik[:, :s].T

    # TODO(synk): if downstream only needs t/dt/ddt, drop (or store as bf16)
    # the phi/dphi/ddphi writeback — it dominates HBM bytes on all chips.
    return {'t_ik': t_ik, 'dt_ik': dt_ik, 'ddt_ik': ddt_ik,
            'phi_ikp': phi, 'dphi_ikp': dphi, 'ddphi_ikp': ddphi,
            'delta_x': delta_x}


def _reference_forward(x, weight, *, n_width, n_order, n_elements,
                       n_samples, x_min, x_max):
    """Pure-numpy (float64) mirror of the PyTorch module, for verification."""
    x = np.asarray(x, np.float64)
    w = np.asarray(weight, np.float64)
    if x.ndim != 2:
        x = np.repeat(x[:, None], n_width, axis=-1)
    n_nodes = n_elements * n_order + 1
    nodes = np.linspace(-1.0, 1.0, n_order + 1)
    x_shift = (n_nodes - 1) * (x - x_min) / (x_max - x_min)
    id_elem = np.floor(x_shift / n_order)
    id_elem = np.where(id_elem >= n_elements, n_elements - 1, id_elem)
    id_elem = np.where(id_elem < 0, 0, id_elem)
    nl = (id_elem * n_order).astype(np.int64)
    nr = nl + n_order
    xt = (x_shift - 0.5 * (nl + nr)) / (0.5 * (nr - nl))

    p1 = n_order + 1
    phi_l = np.zeros((n_samples, n_width, p1))
    dphi_l = np.zeros_like(phi_l)
    ddphi_l = np.zeros_like(phi_l)
    for j in range(p1):
        p = np.ones_like(xt)
        for m in range(p1):
            if m != j:
                p = p * (xt - nodes[m]) / (nodes[j] - nodes[m])
        phi_l[:, :, j] = p
    for j in range(p1):
        y = np.zeros_like(xt)
        for i in range(p1):
            if i != j:
                k = np.ones_like(xt) / (nodes[j] - nodes[i])
                for m in range(p1):
                    if m != i and m != j:
                        k = k * (xt - nodes[m]) / (nodes[j] - nodes[m])
                y = y + k
        dphi_l[:, :, j] = y
    for j in range(p1):
        y = np.zeros_like(xt)
        for i in range(p1):
            if i != j:
                ks = np.zeros_like(xt)
                for m in range(p1):
                    if m != i and m != j:
                        kp = np.ones_like(xt) / (nodes[j] - nodes[m])
                        for n in range(p1):
                            if n != i and n != j and n != m:
                                kp = kp * (xt - nodes[n]) / (nodes[j] - nodes[n])
                        ks = ks + kp
                y = y + 1.0 / (nodes[j] - nodes[i]) * ks
        ddphi_l[:, :, j] = y

    delta_x = 0.5 * n_order * (x_max - x_min) / (n_nodes - 1)
    phi = np.zeros((n_samples, n_width, n_nodes))
    dphi = np.zeros_like(phi)
    ddphi = np.zeros_like(phi)
    si = np.arange(n_samples)[:, None]
    ki = np.arange(n_width)[None, :]
    for node in range(p1):
        phi[si, ki, nl + node] = phi_l[:, :, node]
        dphi[si, ki, nl + node] = dphi_l[:, :, node] / delta_x
        ddphi[si, ki, nl + node] = ddphi_l[:, :, node] / delta_x ** 2
    return {'t_ik': np.einsum('kp,ikp->ik', w, phi),
            'dt_ik': np.einsum('kp,ikp->ik', w, dphi),
            'ddt_ik': np.einsum('kp,ikp->ik', w, ddphi),
            'phi_ikp': phi, 'dphi_ikp': dphi, 'ddphi_ikp': ddphi,
            'delta_x': delta_x}


if __name__ == "__main__":
    # Module hyper-parameters (small, consistent with the forward pass).
    n_width = 4
    n_order = 3
    n_elements = 4
    n_samples = 640          # exercises the sample grid (two 512-lane tiles)
    x_min, x_max = 0.0, 1.0
    n_nodes = n_elements * n_order + 1

    key = jax.random.PRNGKey(0)
    kx, kw = jax.random.split(key)
    # Input: one scalar per sample (the module repeats it across the width).
    x = jax.random.uniform(kx, (n_samples,), jnp.float32,
                           minval=x_min, maxval=x_max)
    # Parameter: module inits zeros; use deterministic random values so the
    # contraction outputs are nontrivial.
    weight = 0.1 * jax.random.normal(kw, (n_width, n_nodes), jnp.float32)

    out = lagrange_kann_forward(
        x, weight, n_width=n_width, n_order=n_order, n_elements=n_elements,
        n_samples=n_samples, x_min=x_min, x_max=x_max)
    jax.tree_util.tree_map(
        jax.block_until_ready,
        {k: v for k, v in out.items() if k != 'delta_x'})

    ref = _reference_forward(
        np.asarray(x), np.asarray(weight), n_width=n_width, n_order=n_order,
        n_elements=n_elements, n_samples=n_samples, x_min=x_min, x_max=x_max)

    for name in ('phi_ikp', 'dphi_ikp', 'ddphi_ikp', 't_ik', 'dt_ik', 'ddt_ik'):
        np.testing.assert_allclose(np.asarray(out[name]), ref[name],
                                   rtol=1e-3, atol=1e-2, err_msg=name)
    assert abs(out['delta_x'] - ref['delta_x']) < 1e-12

    print("KERNEL_OK")
</pallas_src>

<mosaic_0001>
module attributes {stable_mosaic.version = 11 : i64} {
  func.func @kernel(%arg0: i32, %arg1: memref<4x512xf32, #tpu.memory_space<vmem>>, %arg2: memref<4x13xf32, #tpu.memory_space<vmem>>, %arg3: memref<4x13x512xf32, #tpu.memory_space<vmem>>, %arg4: memref<4x13x512xf32, #tpu.memory_space<vmem>>, %arg5: memref<4x13x512xf32, #tpu.memory_space<vmem>>, %arg6: memref<4x512xf32, #tpu.memory_space<vmem>>, %arg7: memref<4x512xf32, #tpu.memory_space<vmem>>, %arg8: memref<4x512xf32, #tpu.memory_space<vmem>>) attributes {dimension_semantics = [#tpu.dimension_semantics<parallel>], iteration_bounds = array<i64: 2>, scalar_prefetch = 0 : i64, scratch_operands = 0 : i64, tpu.core_type = #tpu.core_type<tc>, window_params = [{transform_indices = @transform_0, window_bounds = array<i64: 4, 512>}, {pipeline_mode = #tpu.pipeline_mode<synchronous>, transform_indices = @transform_1, window_bounds = array<i64: 4, 13>}, {transform_indices = @transform_2, window_bounds = array<i64: 4, 13, 512>}, {transform_indices = @transform_3, window_bounds = array<i64: 4, 13, 512>}, {transform_indices = @transform_4, window_bounds = array<i64: 4, 13, 512>}, {transform_indices = @transform_5, window_bounds = array<i64: 4, 512>}, {transform_indices = @transform_6, window_bounds = array<i64: 4, 512>}, {transform_indices = @transform_7, window_bounds = array<i64: 4, 512>}]} {
    %c0 = arith.constant 0 : index
    %c0_0 = arith.constant 0 : index
    %0 = vector.load %arg1[%c0, %c0_0] : memref<4x512xf32, #tpu.memory_space<vmem>>, vector<4x512xf32>
    %cst = arith.constant 0.000000e+00 : f32
    %1 = vector.broadcast %cst : f32 to vector<4x512xf32>
    %2 = arith.subf %0, %1 : vector<4x512xf32>
    %cst_1 = arith.constant 1.200000e+01 : f32
    %3 = vector.broadcast %cst_1 : f32 to vector<4x512xf32>
    %4 = arith.mulf %2, %3 : vector<4x512xf32>
    %cst_2 = arith.constant 3.000000e+00 : f32
    %5 = vector.broadcast %cst_2 : f32 to vector<4x512xf32>
    %6 = arith.divf %4, %5 : vector<4x512xf32>
    %7 = math.floor %6 : vector<4x512xf32>
    %cst_3 = arith.constant 0.000000e+00 : f32
    %cst_4 = arith.constant 3.000000e+00 : f32
    %8 = vector.broadcast %cst_3 : f32 to vector<4x512xf32>
    %9 = arith.maximumf %8, %7 : vector<4x512xf32>
    %10 = vector.broadcast %cst_4 : f32 to vector<4x512xf32>
    %11 = arith.minimumf %10, %9 : vector<4x512xf32>
    %cst_5 = arith.constant 3.000000e+00 : f32
    %12 = vector.broadcast %cst_5 : f32 to vector<4x512xf32>
    %13 = arith.mulf %11, %12 : vector<4x512xf32>
    %14 = arith.fptosi %13 : vector<4x512xf32> to vector<4x512xi32>
    %15 = arith.subf %4, %13 : vector<4x512xf32>
    %cst_6 = arith.constant 1.500000e+00 : f32
    %16 = vector.broadcast %cst_6 : f32 to vector<4x512xf32>
    %17 = arith.subf %15, %16 : vector<4x512xf32>
    %cst_7 = arith.constant 0.666666686 : f32
    %18 = vector.broadcast %cst_7 : f32 to vector<4x512xf32>
    %19 = arith.mulf %17, %18 : vector<4x512xf32>
    %cst_8 = arith.constant -0.333333343 : f32
    %20 = vector.broadcast %cst_8 : f32 to vector<4x512xf32>
    %21 = arith.subf %19, %20 : vector<4x512xf32>
    %cst_9 = arith.constant -5.625000e-01 : f32
    %22 = vector.broadcast %cst_9 : f32 to vector<4x512xf32>
    %23 = arith.mulf %21, %22 : vector<4x512xf32>
    %cst_10 = arith.constant 0.333333343 : f32
    %24 = vector.broadcast %cst_10 : f32 to vector<4x512xf32>
    %25 = arith.subf %19, %24 : vector<4x512xf32>
    %26 = arith.mulf %23, %25 : vector<4x512xf32>
    %cst_11 = arith.constant 1.000000e+00 : f32
    %27 = vector.broadcast %cst_11 : f32 to vector<4x512xf32>
    %28 = arith.subf %19, %27 : vector<4x512xf32>
    %29 = arith.mulf %26, %28 : vector<4x512xf32>
    %cst_12 = arith.constant -1.000000e+00 : f32
    %30 = vector.broadcast %cst_12 : f32 to vector<4x512xf32>
    %31 = arith.subf %19, %30 : vector<4x512xf32>
    %cst_13 = arith.constant 1.687500e+00 : f32
    %32 = vector.broadcast %cst_13 : f32 to vector<4x512xf32>
    %33 = arith.mulf %31, %32 : vector<4x512xf32>
    %cst_14 = arith.constant 0.333333343 : f32
    %34 = vector.broadcast %cst_14 : f32 to vector<4x512xf32>
    %35 = arith.subf %19, %34 : vector<4x512xf32>
    %36 = arith.mulf %33, %35 : vector<4x512xf32>
    %cst_15 = arith.constant 1.000000e+00 : f32
    %37 = vector.broadcast %cst_15 : f32 to vector<4x512xf32>
    %38 = arith.subf %19, %37 : vector<4x512xf32>
    %39 = arith.mulf %36, %38 : vector<4x512xf32>
    %cst_16 = arith.constant -1.000000e+00 : f32
    %40 = vector.broadcast %cst_16 : f32 to vector<4x512xf32>
    %41 = arith.subf %19, %40 : vector<4x512xf32>
    %cst_17 = arith.constant -1.687500e+00 : f32
    %42 = vector.broadcast %cst_17 : f32 to vector<4x512xf32>
    %43 = arith.mulf %41, %42 : vector<4x512xf32>
    %cst_18 = arith.constant -0.333333343 : f32
    %44 = vector.broadcast %cst_18 : f32 to vector<4x512xf32>
    %45 = arith.subf %19, %44 : vector<4x512xf32>
    %46 = arith.mulf %43, %45 : vector<4x512xf32>
    %cst_19 = arith.constant 1.000000e+00 : f32
    %47 = vector.broadcast %cst_19 : f32 to vector<4x512xf32>
    %48 = arith.subf %19, %47 : vector<4x512xf32>
    %49 = arith.mulf %46, %48 : vector<4x512xf32>
    %cst_20 = arith.constant -1.000000e+00 : f32
    %50 = vector.broadcast %cst_20 : f32 to vector<4x512xf32>
    %51 = arith.subf %19, %50 : vector<4x512xf32>
    %cst_21 = arith.constant 5.625000e-01 : f32
    %52 = vector.broadcast %cst_21 : f32 to vector<4x512xf32>
    %53 = arith.mulf %51, %52 : vector<4x512xf32>
    %cst_22 = arith.constant -0.333333343 : f32
    %54 = vector.broadcast %cst_22 : f32 to vector<4x512xf32>
    %55 = arith.subf %19, %54 : vector<4x512xf32>
    %56 = arith.mulf %53, %55 : vector<4x512xf32>
    %cst_23 = arith.constant 0.333333343 : f32
    %57 = vector.broadcast %cst_23 : f32 to vector<4x512xf32>
    %58 = arith.subf %19, %57 : vector<4x512xf32>
    %59 = arith.mulf %56, %58 : vector<4x512xf32>
    %cst_24 = arith.constant 0.333333343 : f32
    %60 = vector.broadcast %cst_24 : f32 to vector<4x512xf32>
    %61 = arith.subf %19, %60 : vector<4x512xf32>
    %cst_25 = arith.constant -4.500000e+00 : f32
    %62 = vector.broadcast %cst_25 : f32 to vector<4x512xf32>
    %63 = arith.mulf %61, %62 : vector<4x512xf32>
    %cst_26 = arith.constant 1.000000e+00 : f32
    %64 = vector.broadcast %cst_26 : f32 to vector<4x512xf32>
    %65 = arith.subf %19, %64 : vector<4x512xf32>
    %66 = arith.mulf %63, %65 : vector<4x512xf32>
    %cst_27 = arith.constant -0.333333343 : f32
    %67 = vector.broadcast %cst_27 : f32 to vector<4x512xf32>
    %68 = arith.subf %19, %67 : vector<4x512xf32>
    %cst_28 = arith.constant -4.500000e+00 : f32
    %69 = vector.broadcast %cst_28 : f32 to vector<4x512xf32>
    %70 = arith.mulf %68, %69 : vector<4x512xf32>
    %cst_29 = arith.constant 1.000000e+00 : f32
    %71 = vector.broadcast %cst_29 : f32 to vector<4x512xf32>
    %72 = arith.subf %19, %71 : vector<4x512xf32>
    %73 = arith.mulf %70, %72 : vector<4x512xf32>
    %74 = arith.addf %66, %73 : vector<4x512xf32>
    %cst_30 = arith.constant -0.333333343 : f32
    %75 = vector.broadcast %cst_30 : f32 to vector<4x512xf32>
    %76 = arith.subf %19, %75 : vector<4x512xf32>
    %cst_31 = arith.constant -4.500000e+00 : f32
    %77 = vector.broadcast %cst_31 : f32 to vector<4x512xf32>
    %78 = arith.mulf %76, %77 : vector<4x512xf32>
    %cst_32 = arith.constant 0.333333343 : f32
    %79 = vector.broadcast %cst_32 : f32 to vector<4x512xf32>
    %80 = arith.subf %19, %79 : vector<4x512xf32>
    %81 = arith.mulf %78, %80 : vector<4x512xf32>
    %82 = arith.addf %74, %81 : vector<4x512xf32>
    %cst_33 = arith.constant 0.333333343 : f32
    %83 = vector.broadcast %cst_33 : f32 to vector<4x512xf32>
    %84 = arith.subf %19, %83 : vector<4x512xf32>
    %cst_34 = arith.constant 1.350000e+01 : f32
    %85 = vector.broadcast %cst_34 : f32 to vector<4x512xf32>
    %86 = arith.mulf %84, %85 : vector<4x512xf32>
    %cst_35 = arith.constant 1.000000e+00 : f32
    %87 = vector.broadcast %cst_35 : f32 to vector<4x512xf32>
    %88 = arith.subf %19, %87 : vector<4x512xf32>
    %89 = arith.mulf %86, %88 : vector<4x512xf32>
    %cst_36 = arith.constant -1.000000e+00 : f32
    %90 = vector.broadcast %cst_36 : f32 to vector<4x512xf32>
    %91 = arith.subf %19, %90 : vector<4x512xf32>
    %cst_37 = arith.constant 1.350000e+01 : f32
    %92 = vector.broadcast %cst_37 : f32 to vector<4x512xf32>
    %93 = arith.mulf %91, %92 : vector<4x512xf32>
    %cst_38 = arith.constant 1.000000e+00 : f32
    %94 = vector.broadcast %cst_38 : f32 to vector<4x512xf32>
    %95 = arith.subf %19, %94 : vector<4x512xf32>
    %96 = arith.mulf %93, %95 : vector<4x512xf32>
    %97 = arith.addf %89, %96 : vector<4x512xf32>
    %cst_39 = arith.constant -1.000000e+00 : f32
    %98 = vector.broadcast %cst_39 : f32 to vector<4x512xf32>
    %99 = arith.subf %19, %98 : vector<4x512xf32>
    %cst_40 = arith.constant 1.350000e+01 : f32
    %100 = vector.broadcast %cst_40 : f32 to vector<4x512xf32>
    %101 = arith.mulf %99, %100 : vector<4x512xf32>
    %cst_41 = arith.constant 0.333333343 : f32
    %102 = vector.broadcast %cst_41 : f32 to vector<4x512xf32>
    %103 = arith.subf %19, %102 : vector<4x512xf32>
    %104 = arith.mulf %101, %103 : vector<4x512xf32>
    %105 = arith.addf %97, %104 : vector<4x512xf32>
    %cst_42 = arith.constant -0.333333343 : f32
    %106 = vector.broadcast %cst_42 : f32 to vector<4x512xf32>
    %107 = arith.subf %19, %106 : vector<4x512xf32>
    %cst_43 = arith.constant -1.350000e+01 : f32
    %108 = vector.broadcast %cst_43 : f32 to vector<4x512xf32>
    %109 = arith.mulf %107, %108 : vector<4x512xf32>
    %cst_44 = arith.constant 1.000000e+00 : f32
    %110 = vector.broadcast %cst_44 : f32 to vector<4x512xf32>
    %111 = arith.subf %19, %110 : vector<4x512xf32>
    %112 = arith.mulf %109, %111 : vector<4x512xf32>
    %cst_45 = arith.constant -1.000000e+00 : f32
    %113 = vector.broadcast %cst_45 : f32 to vector<4x512xf32>
    %114 = arith.subf %19, %113 : vector<4x512xf32>
    %cst_46 = arith.constant -1.350000e+01 : f32
    %115 = vector.broadcast %cst_46 : f32 to vector<4x512xf32>
    %116 = arith.mulf %114, %115 : vector<4x512xf32>
    %cst_47 = arith.constant 1.000000e+00 : f32
    %117 = vector.broadcast %cst_47 : f32 to vector<4x512xf32>
    %118 = arith.subf %19, %117 : vector<4x512xf32>
    %119 = arith.mulf %116, %118 : vector<4x512xf32>
    %120 = arith.addf %112, %119 : vector<4x512xf32>
    %cst_48 = arith.constant -1.000000e+00 : f32
    %121 = vector.broadcast %cst_48 : f32 to vector<4x512xf32>
    %122 = arith.subf %19, %121 : vector<4x512xf32>
    %cst_49 = arith.constant -1.350000e+01 : f32
    %123 = vector.broadcast %cst_49 : f32 to vector<4x512xf32>
    %124 = arith.mulf %122, %123 : vector<4x512xf32>
    %cst_50 = arith.constant -0.333333343 : f32
    %125 = vector.broadcast %cst_50 : f32 to vector<4x512xf32>
    %126 = arith.subf %19, %125 : vector<4x512xf32>
    %127 = arith.mulf %124, %126 : vector<4x512xf32>
    %128 = arith.addf %120, %127 : vector<4x512xf32>
    %cst_51 = arith.constant -0.333333343 : f32
    %129 = vector.broadcast %cst_51 : f32 to vector<4x512xf32>
    %130 = arith.subf %19, %129 : vector<4x512xf32>
    %cst_52 = arith.constant 4.500000e+00 : f32
    %131 = vector.broadcast %cst_52 : f32 to vector<4x512xf32>
    %132 = arith.mulf %130, %131 : vector<4x512xf32>
    %cst_53 = arith.constant 0.333333343 : f32
    %133 = vector.broadcast %cst_53 : f32 to vector<4x512xf32>
    %134 = arith.subf %19, %133 : vector<4x512xf32>
    %135 = arith.mulf %132, %134 : vector<4x512xf32>
    %cst_54 = arith.constant -1.000000e+00 : f32
    %136 = vector.broadcast %cst_54 : f32 to vector<4x512xf32>
    %137 = arith.subf %19, %136 : vector<4x512xf32>
    %cst_55 = arith.constant 4.500000e+00 : f32
    %138 = vector.broadcast %cst_55 : f32 to vector<4x512xf32>
    %139 = arith.mulf %137, %138 : vector<4x512xf32>
    %cst_56 = arith.constant 0.333333343 : f32
    %140 = vector.broadcast %cst_56 : f32 to vector<4x512xf32>
    %141 = arith.subf %19, %140 : vector<4x512xf32>
    %142 = arith.mulf %139, %141 : vector<4x512xf32>
    %143 = arith.addf %135, %142 : vector<4x512xf32>
    %cst_57 = arith.constant -1.000000e+00 : f32
    %144 = vector.broadcast %cst_57 : f32 to vector<4x512xf32>
    %145 = arith.subf %19, %144 : vector<4x512xf32>
    %cst_58 = arith.constant 4.500000e+00 : f32
    %146 = vector.broadcast %cst_58 : f32 to vector<4x512xf32>
    %147 = arith.mulf %145, %146 : vector<4x512xf32>
    %cst_59 = arith.constant -0.333333343 : f32
    %148 = vector.broadcast %cst_59 : f32 to vector<4x512xf32>
    %149 = arith.subf %19, %148 : vector<4x512xf32>
    %150 = arith.mulf %147, %149 : vector<4x512xf32>
    %151 = arith.addf %143, %150 : vector<4x512xf32>
    %cst_60 = arith.constant 1.000000e+00 : f32
    %152 = vector.broadcast %cst_60 : f32 to vector<4x512xf32>
    %153 = arith.subf %19, %152 : vector<4x512xf32>
    %cst_61 = arith.constant -3.600000e+01 : f32
    %154 = vector.broadcast %cst_61 : f32 to vector<4x512xf32>
    %155 = arith.mulf %153, %154 : vector<4x512xf32>
    %cst_62 = arith.constant 0.333333343 : f32
    %156 = vector.broadcast %cst_62 : f32 to vector<4x512xf32>
    %157 = arith.subf %19, %156 : vector<4x512xf32>
    %cst_63 = arith.constant -3.600000e+01 : f32
    %158 = vector.broadcast %cst_63 : f32 to vector<4x512xf32>
    %159 = arith.mulf %157, %158 : vector<4x512xf32>
    %160 = arith.addf %155, %159 : vector<4x512xf32>
    %cst_64 = arith.constant 1.000000e+00 : f32
    %161 = vector.broadcast %cst_64 : f32 to vector<4x512xf32>
    %162 = arith.subf %19, %161 : vector<4x512xf32>
    %cst_65 = arith.constant -3.600000e+01 : f32
    %163 = vector.broadcast %cst_65 : f32 to vector<4x512xf32>
    %164 = arith.mulf %162, %163 : vector<4x512xf32>
    %165 = arith.addf %160, %164 : vector<4x512xf32>
    %cst_66 = arith.constant -0.333333343 : f32
    %166 = vector.broadcast %cst_66 : f32 to vector<4x512xf32>
    %167 = arith.subf %19, %166 : vector<4x512xf32>
    %cst_67 = arith.constant -3.600000e+01 : f32
    %168 = vector.broadcast %cst_67 : f32 to vector<4x512xf32>
    %169 = arith.mulf %167, %168 : vector<4x512xf32>
    %170 = arith.addf %165, %169 : vector<4x512xf32>
    %cst_68 = arith.constant 0.333333343 : f32
    %171 = vector.broadcast %cst_68 : f32 to vector<4x512xf32>
    %172 = arith.subf %19, %171 : vector<4x512xf32>
    %cst_69 = arith.constant -3.600000e+01 : f32
    %173 = vector.broadcast %cst_69 : f32 to vector<4x512xf32>
    %174 = arith.mulf %172, %173 : vector<4x512xf32>
    %175 = arith.addf %170, %174 : vector<4x512xf32>
    %cst_70 = arith.constant -0.333333343 : f32
    %176 = vector.broadcast %cst_70 : f32 to vector<4x512xf32>
    %177 = arith.subf %19, %176 : vector<4x512xf32>
    %cst_71 = arith.constant -3.600000e+01 : f32
    %178 = vector.broadcast %cst_71 : f32 to vector<4x512xf32>
    %179 = arith.mulf %177, %178 : vector<4x512xf32>
    %180 = arith.addf %175, %179 : vector<4x512xf32>
    %cst_72 = arith.constant 1.000000e+00 : f32
    %181 = vector.broadcast %cst_72 : f32 to vector<4x512xf32>
    %182 = arith.subf %19, %181 : vector<4x512xf32>
    %cst_73 = arith.constant 1.080000e+02 : f32
    %183 = vector.broadcast %cst_73 : f32 to vector<4x512xf32>
    %184 = arith.mulf %182, %183 : vector<4x512xf32>
    %cst_74 = arith.constant 0.333333343 : f32
    %185 = vector.broadcast %cst_74 : f32 to vector<4x512xf32>
    %186 = arith.subf %19, %185 : vector<4x512xf32>
    %cst_75 = arith.constant 1.080000e+02 : f32
    %187 = vector.broadcast %cst_75 : f32 to vector<4x512xf32>
    %188 = arith.mulf %186, %187 : vector<4x512xf32>
    %189 = arith.addf %184, %188 : vector<4x512xf32>
    %cst_76 = arith.constant 1.000000e+00 : f32
    %190 = vector.broadcast %cst_76 : f32 to vector<4x512xf32>
    %191 = arith.subf %19, %190 : vector<4x512xf32>
    %cst_77 = arith.constant 1.080000e+02 : f32
    %192 = vector.broadcast %cst_77 : f32 to vector<4x512xf32>
    %193 = arith.mulf %191, %192 : vector<4x512xf32>
    %194 = arith.addf %189, %193 : vector<4x512xf32>
    %cst_78 = arith.constant -1.000000e+00 : f32
    %195 = vector.broadcast %cst_78 : f32 to vector<4x512xf32>
    %196 = arith.subf %19, %195 : vector<4x512xf32>
    %cst_79 = arith.constant 1.080000e+02 : f32
    %197 = vector.broadcast %cst_79 : f32 to vector<4x512xf32>
    %198 = arith.mulf %196, %197 : vector<4x512xf32>
    %199 = arith.addf %194, %198 : vector<4x512xf32>
    %cst_80 = arith.constant 0.333333343 : f32
    %200 = vector.broadcast %cst_80 : f32 to vector<4x512xf32>
    %201 = arith.subf %19, %200 : vector<4x512xf32>
    %cst_81 = arith.constant 1.080000e+02 : f32
    %202 = vector.broadcast %cst_81 : f32 to vector<4x512xf32>
    %203 = arith.mulf %201, %202 : vector<4x512xf32>
    %204 = arith.addf %199, %203 : vector<4x512xf32>
    %cst_82 = arith.constant -1.000000e+00 : f32
    %205 = vector.broadcast %cst_82 : f32 to vector<4x512xf32>
    %206 = arith.subf %19, %205 : vector<4x512xf32>
    %cst_83 = arith.constant 1.080000e+02 : f32
    %207 = vector.broadcast %cst_83 : f32 to vector<4x512xf32>
    %208 = arith.mulf %206, %207 : vector<4x512xf32>
    %209 = arith.addf %204, %208 : vector<4x512xf32>
    %cst_84 = arith.constant 1.000000e+00 : f32
    %210 = vector.broadcast %cst_84 : f32 to vector<4x512xf32>
    %211 = arith.subf %19, %210 : vector<4x512xf32>
    %cst_85 = arith.constant -1.080000e+02 : f32
    %212 = vector.broadcast %cst_85 : f32 to vector<4x512xf32>
    %213 = arith.mulf %211, %212 : vector<4x512xf32>
    %cst_86 = arith.constant -0.333333343 : f32
    %214 = vector.broadcast %cst_86 : f32 to vector<4x512xf32>
    %215 = arith.subf %19, %214 : vector<4x512xf32>
    %cst_87 = arith.constant -1.080000e+02 : f32
    %216 = vector.broadcast %cst_87 : f32 to vector<4x512xf32>
    %217 = arith.mulf %215, %216 : vector<4x512xf32>
    %218 = arith.addf %213, %217 : vector<4x512xf32>
    %cst_88 = arith.constant 1.000000e+00 : f32
    %219 = vector.broadcast %cst_88 : f32 to vector<4x512xf32>
    %220 = arith.subf %19, %219 : vector<4x512xf32>
    %cst_89 = arith.constant -1.080000e+02 : f32
    %221 = vector.broadcast %cst_89 : f32 to vector<4x512xf32>
    %222 = arith.mulf %220, %221 : vector<4x512xf32>
    %223 = arith.addf %218, %222 : vector<4x512xf32>
    %cst_90 = arith.constant -1.000000e+00 : f32
    %224 = vector.broadcast %cst_90 : f32 to vector<4x512xf32>
    %225 = arith.subf %19, %224 : vector<4x512xf32>
    %cst_91 = arith.constant -1.080000e+02 : f32
    %226 = vector.broadcast %cst_91 : f32 to vector<4x512xf32>
    %227 = arith.mulf %225, %226 : vector<4x512xf32>
    %228 = arith.addf %223, %227 : vector<4x512xf32>
    %cst_92 = arith.constant -0.333333343 : f32
    %229 = vector.broadcast %cst_92 : f32 to vector<4x512xf32>
    %230 = arith.subf %19, %229 : vector<4x512xf32>
    %cst_93 = arith.constant -1.080000e+02 : f32
    %231 = vector.broadcast %cst_93 : f32 to vector<4x512xf32>
    %232 = arith.mulf %230, %231 : vector<4x512xf32>
    %233 = arith.addf %228, %232 : vector<4x512xf32>
    %cst_94 = arith.constant -1.000000e+00 : f32
    %234 = vector.broadcast %cst_94 : f32 to vector<4x512xf32>
    %235 = arith.subf %19, %234 : vector<4x512xf32>
    %cst_95 = arith.constant -1.080000e+02 : f32
    %236 = vector.broadcast %cst_95 : f32 to vector<4x512xf32>
    %237 = arith.mulf %235, %236 : vector<4x512xf32>
    %238 = arith.addf %233, %237 : vector<4x512xf32>
    %cst_96 = arith.constant 0.333333343 : f32
    %239 = vector.broadcast %cst_96 : f32 to vector<4x512xf32>
    %240 = arith.subf %19, %239 : vector<4x512xf32>
    %cst_97 = arith.constant 3.600000e+01 : f32
    %241 = vector.broadcast %cst_97 : f32 to vector<4x512xf32>
    %242 = arith.mulf %240, %241 : vector<4x512xf32>
    %cst_98 = arith.constant -0.333333343 : f32
    %243 = vector.broadcast %cst_98 : f32 to vector<4x512xf32>
    %244 = arith.subf %19, %243 : vector<4x512xf32>
    %cst_99 = arith.constant 3.600000e+01 : f32
    %245 = vector.broadcast %cst_99 : f32 to vector<4x512xf32>
    %246 = arith.mulf %244, %245 : vector<4x512xf32>
    %247 = arith.addf %242, %246 : vector<4x512xf32>
    %cst_100 = arith.constant 0.333333343 : f32
    %248 = vector.broadcast %cst_100 : f32 to vector<4x512xf32>
    %249 = arith.subf %19, %248 : vector<4x512xf32>
    %cst_101 = arith.constant 3.600000e+01 : f32
    %250 = vector.broadcast %cst_101 : f32 to vector<4x512xf32>
    %251 = arith.mulf %249, %250 : vector<4x512xf32>
    %252 = arith.addf %247, %251 : vector<4x512xf32>
    %cst_102 = arith.constant -1.000000e+00 : f32
    %253 = vector.broadcast %cst_102 : f32 to vector<4x512xf32>
    %254 = arith.subf %19, %253 : vector<4x512xf32>
    %cst_103 = arith.constant 3.600000e+01 : f32
    %255 = vector.broadcast %cst_103 : f32 to vector<4x512xf32>
    %256 = arith.mulf %254, %255 : vector<4x512xf32>
    %257 = arith.addf %252, %256 : vector<4x512xf32>
    %cst_104 = arith.constant -0.333333343 : f32
    %258 = vector.broadcast %cst_104 : f32 to vector<4x512xf32>
    %259 = arith.subf %19, %258 : vector<4x512xf32>
    %cst_105 = arith.constant 3.600000e+01 : f32
    %260 = vector.broadcast %cst_105 : f32 to vector<4x512xf32>
    %261 = arith.mulf %259, %260 : vector<4x512xf32>
    %262 = arith.addf %257, %261 : vector<4x512xf32>
    %cst_106 = arith.constant -1.000000e+00 : f32
    %263 = vector.broadcast %cst_106 : f32 to vector<4x512xf32>
    %264 = arith.subf %19, %263 : vector<4x512xf32>
    %cst_107 = arith.constant 3.600000e+01 : f32
    %265 = vector.broadcast %cst_107 : f32 to vector<4x512xf32>
    %266 = arith.mulf %264, %265 : vector<4x512xf32>
    %267 = arith.addf %262, %266 : vector<4x512xf32>
    %268 = tpu.iota {dimensions = array<i32: 1>} : vector<4x13x512xi32>
    %269 = vector.shape_cast %14 : vector<4x512xi32> to vector<4x1x512xi32>
    %270 = vector.broadcast %269 : vector<4x1x512xi32> to vector<4x13x512xi32>
    %271 = arith.subi %268, %270 : vector<4x13x512xi32>
    %cst_108 = arith.constant 0.000000e+00 : f32
    %272 = vector.broadcast %cst_108 : f32 to vector<4x13x512xf32>
    %cst_109 = arith.constant 0.000000e+00 : f32
    %273 = vector.broadcast %cst_109 : f32 to vector<4x13x512xf32>
    %cst_110 = arith.constant 0.000000e+00 : f32
    %274 = vector.broadcast %cst_110 : f32 to vector<4x13x512xf32>
    %c0_i32 = arith.constant 0 : i32
    %275 = vector.broadcast %c0_i32 : i32 to vector<4x13x512xi32>
    %276 = arith.cmpi eq, %271, %275 : vector<4x13x512xi32>
    %277 = vector.shape_cast %29 : vector<4x512xf32> to vector<4x1x512xf32>
    %278 = vector.shape_cast %277 : vector<4x1x512xf32> to vector<4x1x512xf32>
    %279 = vector.broadcast %278 : vector<4x1x512xf32> to vector<4x13x512xf32>
    %280 = arith.select %276, %279, %272 : vector<4x13x512xi1>, vector<4x13x512xf32>
    %281 = vector.shape_cast %82 : vector<4x512xf32> to vector<4x1x512xf32>
    %282 = vector.shape_cast %281 : vector<4x1x512xf32> to vector<4x1x512xf32>
    %283 = vector.broadcast %282 : vector<4x1x512xf32> to vector<4x13x512xf32>
    %284 = arith.select %276, %283, %273 : vector<4x13x512xi1>, vector<4x13x512xf32>
    %285 = vector.shape_cast %180 : vector<4x512xf32> to vector<4x1x512xf32>
    %286 = vector.shape_cast %285 : vector<4x1x512xf32> to vector<4x1x512xf32>
    %287 = vector.broadcast %286 : vector<4x1x512xf32> to vector<4x13x512xf32>
    %288 = arith.select %276, %287, %274 : vector<4x13x512xi1>, vector<4x13x512xf32>
    %c1_i32 = arith.constant 1 : i32
    %289 = vector.broadcast %c1_i32 : i32 to vector<4x13x512xi32>
    %290 = arith.cmpi eq, %271, %289 : vector<4x13x512xi32>
    %291 = vector.shape_cast %39 : vector<4x512xf32> to vector<4x1x512xf32>
    %292 = vector.shape_cast %291 : vector<4x1x512xf32> to vector<4x1x512xf32>
    %293 = vector.broadcast %292 : vector<4x1x512xf32> to vector<4x13x512xf32>
    %294 = arith.select %290, %293, %280 : vector<4x13x512xi1>, vector<4x13x512xf32>
    %295 = vector.shape_cast %105 : vector<4x512xf32> to vector<4x1x512xf32>
    %296 = vector.shape_cast %295 : vector<4x1x512xf32> to vector<4x1x512xf32>
    %297 = vector.broadcast %296 : vector<4x1x512xf32> to vector<4x13x512xf32>
    %298 = arith.select %290, %297, %284 : vector<4x13x512xi1>, vector<4x13x512xf32>
    %299 = vector.shape_cast %209 : vector<4x512xf32> to vector<4x1x512xf32>
    %300 = vector.shape_cast %299 : vector<4x1x512xf32> to vector<4x1x512xf32>
    %301 = vector.broadcast %300 : vector<4x1x512xf32> to vector<4x13x512xf32>
    %302 = arith.select %290, %301, %288 : vector<4x13x512xi1>, vector<4x13x512xf32>
    %c2_i32 = arith.constant 2 : i32
    %303 = vector.broadcast %c2_i32 : i32 to vector<4x13x512xi32>
    %304 = arith.cmpi eq, %271, %303 : vector<4x13x512xi32>
    %305 = vector.shape_cast %49 : vector<4x512xf32> to vector<4x1x512xf32>
    %306 = vector.shape_cast %305 : vector<4x1x512xf32> to vector<4x1x512xf32>
    %307 = vector.broadcast %306 : vector<4x1x512xf32> to vector<4x13x512xf32>
    %308 = arith.select %304, %307, %294 : vector<4x13x512xi1>, vector<4x13x512xf32>
    %309 = vector.shape_cast %128 : vector<4x512xf32> to vector<4x1x512xf32>
    %310 = vector.shape_cast %309 : vector<4x1x512xf32> to vector<4x1x512xf32>
    %311 = vector.broadcast %310 : vector<4x1x512xf32> to vector<4x13x512xf32>
    %312 = arith.select %304, %311, %298 : vector<4x13x512xi1>, vector<4x13x512xf32>
    %313 = vector.shape_cast %238 : vector<4x512xf32> to vector<4x1x512xf32>
    %314 = vector.shape_cast %313 : vector<4x1x512xf32> to vector<4x1x512xf32>
    %315 = vector.broadcast %314 : vector<4x1x512xf32> to vector<4x13x512xf32>
    %316 = arith.select %304, %315, %302 : vector<4x13x512xi1>, vector<4x13x512xf32>
    %c3_i32 = arith.constant 3 : i32
    %317 = vector.broadcast %c3_i32 : i32 to vector<4x13x512xi32>
    %318 = arith.cmpi eq, %271, %317 : vector<4x13x512xi32>
    %319 = vector.shape_cast %59 : vector<4x512xf32> to vector<4x1x512xf32>
    %320 = vector.shape_cast %319 : vector<4x1x512xf32> to vector<4x1x512xf32>
    %321 = vector.broadcast %320 : vector<4x1x512xf32> to vector<4x13x512xf32>
    %322 = arith.select %318, %321, %308 : vector<4x13x512xi1>, vector<4x13x512xf32>
    %323 = vector.shape_cast %151 : vector<4x512xf32> to vector<4x1x512xf32>
    %324 = vector.shape_cast %323 : vector<4x1x512xf32> to vector<4x1x512xf32>
    %325 = vector.broadcast %324 : vector<4x1x512xf32> to vector<4x13x512xf32>
    %326 = arith.select %318, %325, %312 : vector<4x13x512xi1>, vector<4x13x512xf32>
    %327 = vector.shape_cast %267 : vector<4x512xf32> to vector<4x1x512xf32>
    %328 = vector.shape_cast %327 : vector<4x1x512xf32> to vector<4x1x512xf32>
    %329 = vector.broadcast %328 : vector<4x1x512xf32> to vector<4x13x512xf32>
    %330 = arith.select %318, %329, %316 : vector<4x13x512xi1>, vector<4x13x512xf32>
    %c0_111 = arith.constant 0 : index
    %c0_112 = arith.constant 0 : index
    %c0_113 = arith.constant 0 : index
    %331 = vector.load %arg3[%c0_111, %c0_112, %c0_113] : memref<4x13x512xf32, #tpu.memory_space<vmem>>, vector<4x13x512xf32>
    tpu.vector_store %arg3[%c0_111, %c0_112, %c0_113], %322 {strides = array<i32>} : memref<4x13x512xf32, #tpu.memory_space<vmem>>, vector<4x13x512xf32>,
    %c0_114 = arith.constant 0 : index
    %c0_115 = arith.constant 0 : index
    %c0_116 = arith.constant 0 : index
    %332 = vector.load %arg4[%c0_114, %c0_115, %c0_116] : memref<4x13x512xf32, #tpu.memory_space<vmem>>, vector<4x13x512xf32>
    tpu.vector_store %arg4[%c0_114, %c0_115, %c0_116], %326 {strides = array<i32>} : memref<4x13x512xf32, #tpu.memory_space<vmem>>, vector<4x13x512xf32>,
    %c0_117 = arith.constant 0 : index
    %c0_118 = arith.constant 0 : index
    %c0_119 = arith.constant 0 : index
    %333 = vector.load %arg5[%c0_117, %c0_118, %c0_119] : memref<4x13x512xf32, #tpu.memory_space<vmem>>, vector<4x13x512xf32>
    tpu.vector_store %arg5[%c0_117, %c0_118, %c0_119], %330 {strides = array<i32>} : memref<4x13x512xf32, #tpu.memory_space<vmem>>, vector<4x13x512xf32>,
    %c0_120 = arith.constant 0 : index
    %c0_121 = arith.constant 0 : index
    %334 = vector.load %arg2[%c0_120, %c0_121] : memref<4x13xf32, #tpu.memory_space<vmem>>, vector<4x13xf32>
    %335 = vector.shape_cast %334 : vector<4x13xf32> to vector<4x13x1xf32>
    %336 = vector.broadcast %335 : vector<4x13x1xf32> to vector<4x13x512xf32>
    %337 = arith.mulf %322, %336 : vector<4x13x512xf32>
    %cst_122 = arith.constant dense<0.000000e+00> : vector<4x512xf32>
    %338 = vector.multi_reduction <add>, %337, %cst_122 [1] : vector<4x13x512xf32> to vector<4x512xf32>
    %c0_123 = arith.constant 0 : index
    %c0_124 = arith.constant 0 : index
    %339 = vector.load %arg6[%c0_123, %c0_124] : memref<4x512xf32, #tpu.memory_space<vmem>>, vector<4x512xf32>
    tpu.vector_store %arg6[%c0_123, %c0_124], %338 {strides = array<i32>} : memref<4x512xf32, #tpu.memory_space<vmem>>, vector<4x512xf32>,
    %340 = vector.broadcast %335 : vector<4x13x1xf32> to vector<4x13x512xf32>
    %341 = arith.mulf %326, %340 : vector<4x13x512xf32>
    %cst_125 = arith.constant dense<0.000000e+00> : vector<4x512xf32>
    %342 = vector.multi_reduction <add>, %341, %cst_125 [1] : vector<4x13x512xf32> to vector<4x512xf32>
    %c0_126 = arith.constant 0 : index
    %c0_127 = arith.constant 0 : index
    %343 = vector.load %arg7[%c0_126, %c0_127] : memref<4x512xf32, #tpu.memory_space<vmem>>, vector<4x512xf32>
    tpu.vector_store %arg7[%c0_126, %c0_127], %342 {strides = array<i32>} : memref<4x512xf32, #tpu.memory_space<vmem>>, vector<4x512xf32>,
    %344 = vector.broadcast %335 : vector<4x13x1xf32> to vector<4x13x512xf32>
    %345 = arith.mulf %330, %344 : vector<4x13x512xf32>
    %cst_128 = arith.constant dense<0.000000e+00> : vector<4x512xf32>
    %346 = vector.multi_reduction <add>, %345, %cst_128 [1] : vector<4x13x512xf32> to vector<4x512xf32>
    %c0_129 = arith.constant 0 : index
    %c0_130 = arith.constant 0 : index
    %347 = vector.load %arg8[%c0_129, %c0_130] : memref<4x512xf32, #tpu.memory_space<vmem>>, vector<4x512xf32>
    tpu.vector_store %arg8[%c0_129, %c0_130], %346 {strides = array<i32>} : memref<4x512xf32, #tpu.memory_space<vmem>>, vector<4x512xf32>,
    return
  }
  func.func @transform_0(%arg0: i32) -> (i32, i32) {
    %c0_i32 = arith.constant 0 : i32
    %c0_i32_0 = arith.constant 0 : i32
    return %c0_i32, %arg0 : i32, i32
  }
  func.func @transform_1(%arg0: i32) -> (i32, i32) {
    %c0_i32 = arith.constant 0 : i32
    %c0_i32_0 = arith.constant 0 : i32
    %c0_i32_1 = arith.constant 0 : i32
    return %c0_i32, %c0_i32_0 : i32, i32
  }
  func.func @transform_2(%arg0: i32) -> (i32, i32, i32) {
    %c0_i32 = arith.constant 0 : i32
    %c0_i32_0 = arith.constant 0 : i32
    %c0_i32_1 = arith.constant 0 : i32
    return %c0_i32, %c0_i32_0, %arg0 : i32, i32, i32
  }
  func.func @transform_3(%arg0: i32) -> (i32, i32, i32) {
    %c0_i32 = arith.constant 0 : i32
    %c0_i32_0 = arith.constant 0 : i32
    %c0_i32_1 = arith.constant 0 : i32
    return %c0_i32, %c0_i32_0, %arg0 : i32, i32, i32
  }
  func.func @transform_4(%arg0: i32) -> (i32, i32, i32) {
    %c0_i32 = arith.constant 0 : i32
    %c0_i32_0 = arith.constant 0 : i32
    %c0_i32_1 = arith.constant 0 : i32
    return %c0_i32, %c0_i32_0, %arg0 : i32, i32, i32
  }
  func.func @transform_5(%arg0: i32) -> (i32, i32) {
    %c0_i32 = arith.constant 0 : i32
    %c0_i32_0 = arith.constant 0 : i32
    return %c0_i32, %arg0 : i32, i32
  }
  func.func @transform_6(%arg0: i32) -> (i32, i32) {
    %c0_i32 = arith.constant 0 : i32
    %c0_i32_0 = arith.constant 0 : i32
    return %c0_i32, %arg0 : i32, i32
  }
  func.func @transform_7(%arg0: i32) -> (i32, i32) {
    %c0_i32 = arith.constant 0 : i32
    %c0_i32_0 = arith.constant 0 : i32
    return %c0_i32, %arg0 : i32, i32
  }
}

</mosaic_0001>

<llo_original>
// kernel: tpu_custom_call.1
$region0: #{tpu_custom_call.1}
  #allocation0 [shape = 'u32[]', space=smem, size = 0x4, offset = 0x4, fixed_abs, tag = 'smem constant byte address 0x4 - core index']
  #allocation1 [shape = 'u32[144,128]{1,0:T(1,128)}', space=vmem, size = 0x12000, scoped, tag = 'internal scratch']
  %s0 = inlined_call_operand.hbm [shape: f32[4,1024], index: 0, kind: input, shape index: {}]
  %s1 = inlined_call_operand.hbm [shape: f32[4,13], index: 1, kind: input, shape index: {}]
  %s2 = inlined_call_operand.vmem [shape: f32[4,13,1024], index: 2, kind: output, shape index: {0}]
  %s3 = inlined_call_operand.vmem [shape: f32[4,13,1024], index: 3, kind: output, shape index: {1}]
  %s4 = inlined_call_operand.vmem [shape: f32[4,13,1024], index: 4, kind: output, shape index: {2}]
  %s5 = inlined_call_operand.hbm [shape: f32[4,1024], index: 5, kind: output, shape index: {3}]
  %s6 = inlined_call_operand.hbm [shape: f32[4,1024], index: 6, kind: output, shape index: {4}]
  %s7 = inlined_call_operand.hbm [shape: f32[4,1024], index: 7, kind: output, shape index: {5}]
  %8 = xla_tuple %s2, %s3, %s4, %s5, %s6, %s7
  %s9 = sld [smem:[#allocation0]]
  $region146: #{tpu_custom_call.1} parent=0
    _
  %s11 = ssub.s32 1, %s9
  %s12 = scalar_select 0, %s11, %s9
  $region1: #{tpu_custom_call.1} parent=0
    #allocation2 [shape = 'u8[16384]{0}', space=vmem, size = 0x4000, scoped, tag = 'input window, operand 0']
    #allocation3 [shape = 's32[2]{0}', space=sflag, size = 0x8, scoped, tag = 'scoped memory for tpu_custom_call.1']
    #allocation4 [shape = 's32[2]{0}', space=sflag, size = 0x8, scoped, tag = 'scoped memory for tpu_custom_call.1']
    #allocation5 [shape = 'u8[2048]{0}', space=vmem, size = 0x800, scoped, tag = 'input window, operand 1, single buffered']
    #allocation6 [shape = 's32[1]{0}', space=sflag, size = 0x4, scoped, tag = 'scoped memory for tpu_custom_call.1']
    #allocation7 [shape = 'u8[262144]{0}', space=vmem, size = 0x40000, scoped, tag = 'output window, operand 0']
    #allocation8 [shape = 'u8[262144]{0}', space=vmem, size = 0x40000, scoped, tag = 'output window, operand 1']
    #allocation9 [shape = 'u8[262144]{0}', space=vmem, size = 0x40000, scoped, tag = 'output window, operand 2']
    #allocation10 [shape = 'u8[16384]{0}', space=vmem, size = 0x4000, scoped, tag = 'output window, operand 3']
    #allocation11 [shape = 'u8[16384]{0}', space=vmem, size = 0x4000, scoped, tag = 'output window, operand 4']
    #allocation12 [shape = 's32[2]{0}', space=sflag, size = 0x8, scoped, tag = 'scoped memory for tpu_custom_call.1']
    #allocation13 [shape = 'u8[16384]{0}', space=vmem, size = 0x4000, scoped, tag = 'output window, operand 5']
    %13 = vsyncpa [#allocation3], 0
    %s14 = scalar_lea.sflag [#allocation3], 1
    %15 = vsyncpa %s14, 0
    %16 = vsyncpa [#allocation6], 0
    %17 = vsyncpa [#allocation4], 0
    %s18 = scalar_lea.sflag [#allocation4], 1
    %19 = vsyncpa %s18, 0
    %20 = vsyncpa [#allocation12], 0
    %s21 = scalar_lea.sflag [#allocation12], 1
    %22 = vsyncpa %s21, 0
    loop: start=0, step=1, limit=4
    $region2: #{tpu_custom_call.1} parent=1 // loop_pre_header
      _
    $region3: #{tpu_custom_call.1} parent=1 // loop_header
      %s24 = sphi 0, %s28
      %p25 = scmp.ge.s32.totalorder %s24, 4
      %s34 = sphi 0, %s36
      %s37 = sphi 0, %s34
      %s38 = sphi 0, %s37
      %s54 = sphi 0, %s38
      %s58 = sphi 0, %s58
      %s60 = sphi 0, %s58
      %s61 = sphi 0, %s60
      %s75 = sphi 0, %s61
      %s81 = sphi 0, %s83
      %s84 = sphi 0, %s81
      %s85 = sphi 0, %s84
      %s101 = sphi 0, %s85
      %s107 = sphi 0, %s109
      %s110 = sphi 0, %s107
      %s111 = sphi 0, %s110
      %s127 = sphi 0, %s111
      %s133 = sphi 0, %s135
      %s136 = sphi 0, %s133
      %s137 = sphi 0, %s136
      %s153 = sphi 0, %s137
      %s159 = sphi 0, %s161
      %s162 = sphi 0, %s159
      %s163 = sphi 0, %s162
      %s179 = sphi 0, %s163
      %s185 = sphi 0, %s187
      %s188 = sphi 0, %s185
      %s189 = sphi 0, %s188
      %s205 = sphi 0, %s189
      %s211 = sphi 0, %s213
      %s214 = sphi 0, %s211
      %s215 = sphi 0, %s214
      %s231 = sphi 0, %s215
    $region4: #{tpu_custom_call.1} parent=1 // loop_header_branch
      %27 = sbr.rel (%p25) target = $region8
    $region5: #{tpu_custom_call.1} parent=1 // loop_body
      %s29 = ssub.s32 %s24, 1
      %s30 = ssub.s32 %s24, 2
      %s31 = sadd.s32 %s24, 1
      %s32 = ssub.s32 %s24, %s31
      %p33 = scmp.eq.s32.totalorder %s32, 0
      %s35 = sadd.s32 %s34, 1
      %s36 = scalar_select %p33, %s34, %s35
      %p39 = pneg %p33
      %p40 = scmp.eq.s32.totalorder %s24, 1
      %p41 = por %p39, %p40
      %p42 = scmp.ne.s32.totalorder %s34, %s37
      %p43 = scmp.eq.s32.totalorder %s24, 0
      %p44 = por %p42, %p43
      %p45 = scmp.ne.s32.totalorder %s34, %s37
      %p46 = scmp.eq.s32.totalorder %s29, 1
      %p47 = por %p45, %p46
      %p48 = scmp.ne.s32.totalorder %s37, %s38
      %p49 = scmp.eq.s32.totalorder %s29, 0
      %p50 = por %p48, %p49
      %p51 = scmp.ne.s32.totalorder %s37, %s38
      %p52 = scmp.eq.s32.totalorder %s30, 1
      %p53 = por %p51, %p52
      %p55 = scmp.ne.s32.totalorder %s38, %s54
      %p56 = scmp.eq.s32.totalorder %s30, 0
      %p57 = por %p55, %p56
      %s59 = sadd.s32 %s58, 1
      %p62 = scmp.eq.s32.totalorder %s24, 1
      %p63 = scmp.ne.s32.totalorder %s58, %s60
      %p64 = scmp.eq.s32.totalorder %s24, 0
      %p65 = por %p63, %p64
      %p66 = scmp.ne.s32.totalorder %s58, %s60
      %p67 = scmp.eq.s32.totalorder %s29, 1
      %p68 = por %p66, %p67
      %p69 = scmp.ne.s32.totalorder %s60, %s61
      %p70 = scmp.eq.s32.totalorder %s29, 0
      %p71 = por %p69, %p70
      %p72 = scmp.ne.s32.totalorder %s60, %s61
      %p73 = scmp.eq.s32.totalorder %s30, 1
      %p74 = por %p72, %p73
      %p76 = scmp.ne.s32.totalorder %s61, %s75
      %p77 = scmp.eq.s32.totalorder %s30, 0
      %p78 = por %p76, %p77
      %s79 = ssub.s32 %s24, %s31
      %p80 = scmp.eq.s32.totalorder %s79, 0
      %s82 = sadd.s32 %s81, 1
      %s83 = scalar_select %p80, %s81, %s82
      %p86 = pneg %p80
      %p87 = scmp.eq.s32.totalorder %s24, 1
      %p88 = por %p86, %p87
      %p89 = scmp.ne.s32.totalorder %s81, %s84
      %p90 = scmp.eq.s32.totalorder %s24, 0
      %p91 = por %p89, %p90
      %p92 = scmp.ne.s32.totalorder %s81, %s84
      %p93 = scmp.eq.s32.totalorder %s29, 1
      %p94 = por %p92, %p93
      %p95 = scmp.ne.s32.totalorder %s84, %s85
      %p96 = scmp.eq.s32.totalorder %s29, 0
      %p97 = por %p95, %p96
      %p98 = scmp.ne.s32.totalorder %s84, %s85
      %p99 = scmp.eq.s32.totalorder %s30, 1
      %p100 = por %p98, %p99
      %p102 = scmp.ne.s32.totalorder %s85, %s101
      %p103 = scmp.eq.s32.totalorder %s30, 0
      %p104 = por %p102, %p103
      %s105 = ssub.s32 %s24, %s31
      %p106 = scmp.eq.s32.totalorder %s105, 0
      %s108 = sadd.s32 %s107, 1
      %s109 = scalar_select %p106, %s107, %s108
      %p112 = pneg %p106
      %p113 = scmp.eq.s32.totalorder %s24, 1
      %p114 = por %p112, %p113
      %p115 = scmp.ne.s32.totalorder %s107, %s110
      %p116 = scmp.eq.s32.totalorder %s24, 0
      %p117 = por %p115, %p116
      %p118 = scmp.ne.s32.totalorder %s107, %s110
      %p119 = scmp.eq.s32.totalorder %s29, 1
      %p120 = por %p118, %p119
      %p121 = scmp.ne.s32.totalorder %s110, %s111
      %p122 = scmp.eq.s32.totalorder %s29, 0
      %p123 = por %p121, %p122
      %p124 = scmp.ne.s32.totalorder %s110, %s111
      %p125 = scmp.eq.s32.totalorder %s30, 1
      %p126 = por %p124, %p125
      %p128 = scmp.ne.s32.totalorder %s111, %s127
      %p129 = scmp.eq.s32.totalorder %s30, 0
      %p130 = por %p128, %p129
      %s131 = ssub.s32 %s24, %s31
      %p132 = scmp.eq.s32.totalorder %s131, 0
      %s134 = sadd.s32 %s133, 1
      %s135 = scalar_select %p132, %s133, %s134
      %p138 = pneg %p132
      %p139 = scmp.eq.s32.totalorder %s24, 1
      %p140 = por %p138, %p139
      %p141 = scmp.ne.s32.totalorder %s133, %s136
      %p142 = scmp.eq.s32.totalorder %s24, 0
      %p143 = por %p141, %p142
      %p144 = scmp.ne.s32.totalorder %s133, %s136
      %p145 = scmp.eq.s32.totalorder %s29, 1
      %p146 = por %p144, %p145
      %p147 = scmp.ne.s32.totalorder %s136, %s137
      %p148 = scmp.eq.s32.totalorder %s29, 0
      %p149 = por %p147, %p148
      %p150 = scmp.ne.s32.totalorder %s136, %s137
      %p151 = scmp.eq.s32.totalorder %s30, 1
      %p152 = por %p150, %p151
      %p154 = scmp.ne.s32.totalorder %s137, %s153
      %p155 = scmp.eq.s32.totalorder %s30, 0
      %p156 = por %p154, %p155
      %s157 = ssub.s32 %s24, %s31
      %p158 = scmp.eq.s32.totalorder %s157, 0
      %s160 = sadd.s32 %s159, 1
      %s161 = scalar_select %p158, %s159, %s160
      %p164 = pneg %p158
      %p165 = scmp.eq.s32.totalorder %s24, 1
      %p166 = por %p164, %p165
      %p167 = scmp.ne.s32.totalorder %s159, %s162
      %p168 = scmp.eq.s32.totalorder %s24, 0
      %p169 = por %p167, %p168
      %p170 = scmp.ne.s32.totalorder %s159, %s162
      %p171 = scmp.eq.s32.totalorder %s29, 1
      %p172 = por %p170, %p171
      %p173 = scmp.ne.s32.totalorder %s162, %s163
      %p174 = scmp.eq.s32.totalorder %s29, 0
      %p175 = por %p173, %p174
      %p176 = scmp.ne.s32.totalorder %s162, %s163
      %p177 = scmp.eq.s32.totalorder %s30, 1
      %p178 = por %p176, %p177
      %p180 = scmp.ne.s32.totalorder %s163, %s179
      %p181 = scmp.eq.s32.totalorder %s30, 0
      %p182 = por %p180, %p181
      %s183 = ssub.s32 %s24, %s31
      %p184 = scmp.eq.s32.totalorder %s183, 0
      %s186 = sadd.s32 %s185, 1
      %s187 = scalar_select %p184, %s185, %s186
      %p190 = pneg %p184
      %p191 = scmp.eq.s32.totalorder %s24, 1
      %p192 = por %p190, %p191
      %p193 = scmp.ne.s32.totalorder %s185, %s188
      %p194 = scmp.eq.s32.totalorder %s24, 0
      %p195 = por %p193, %p194
      %p196 = scmp.ne.s32.totalorder %s185, %s188
      %p197 = scmp.eq.s32.totalorder %s29, 1
      %p198 = por %p196, %p197
      %p199 = scmp.ne.s32.totalorder %s188, %s189
      %p200 = scmp.eq.s32.totalorder %s29, 0
      %p201 = por %p199, %p200
      %p202 = scmp.ne.s32.totalorder %s188, %s189
      %p203 = scmp.eq.s32.totalorder %s30, 1
      %p204 = por %p202, %p203
      %p206 = scmp.ne.s32.totalorder %s189, %s205
      %p207 = scmp.eq.s32.totalorder %s30, 0
      %p208 = por %p206, %p207
      %s209 = ssub.s32 %s24, %s31
      %p210 = scmp.eq.s32.totalorder %s209, 0
      %s212 = sadd.s32 %s211, 1
      %s213 = scalar_select %p210, %s211, %s212
      %p216 = pneg %p210
      %p217 = scmp.eq.s32.totalorder %s24, 1
      %p218 = por %p216, %p217
      %p219 = scmp.ne.s32.totalorder %s211, %s214
      %p220 = scmp.eq.s32.totalorder %s24, 0
      %p221 = por %p219, %p220
      %p222 = scmp.ne.s32.totalorder %s211, %s214
      %p223 = scmp.eq.s32.totalorder %s29, 1
      %p224 = por %p222, %p223
      %p225 = scmp.ne.s32.totalorder %s214, %s215
      %p226 = scmp.eq.s32.totalorder %s29, 0
      %p227 = por %p225, %p226
      %p228 = scmp.ne.s32.totalorder %s214, %s215
      %p229 = scmp.eq.s32.totalorder %s30, 1
      %p230 = por %p228, %p229
      %p232 = scmp.ne.s32.totalorder %s215, %s231
      %p233 = scmp.eq.s32.totalorder %s30, 0
      %p234 = por %p232, %p233
      %p235 = scmp.le.s32.totalorder 1, %s24
      %p236 = scmp.lt.s32.totalorder %s24, 3
      %p237 = pnand %p235, %p236
      %p238 = pneg %p237
      // Predicated region
      $region9: #{tpu_custom_call.1} parent=5 // pred_check
        _
      $region10: #{tpu_custom_call.1} parent=5 // pred_check_branch
        %240 = sbr.rel (%p237) target = $region12
      $region11: #{tpu_custom_call.1} parent=5 // pred_region
        %s241 = ssub.s32 %s24, 1
        // Predicated region
        $region13: #{tpu_custom_call.1} parent=11 // pred_check
          %p242 = pneg %p71
        $region14: #{tpu_custom_call.1} parent=11 // pred_check_branch
          %244 = sbr.rel (%p242) target = $region16
        $region15: #{tpu_custom_call.1} parent=11 // pred_region
          %s246 = ssub.s32 64, 64
          %247 = vsyncadd [#allocation6], %s246
          %s249 = sshll.u32 [#allocation5], 4
          %s250 = int_to_ptr.vmem [resolvable:$true] %s249
          %252 = dma.hbm_to_vmem [thread:$0]  %s1, 64, %s250, [#allocation6]
        $region16: #{tpu_custom_call.1} parent=11 // pred_fallthru
          _
      $region12: #{tpu_custom_call.1} parent=5 // pred_fallthru
        _
      %p253 = scmp.lt.s32.totalorder %s24, 2
      // Predicated region
      $region17: #{tpu_custom_call.1} parent=5 // pred_check
        %p254 = pneg %p253
      $region18: #{tpu_custom_call.1} parent=5 // pred_check_branch
        %256 = sbr.rel (%p254) target = $region20
      $region19: #{tpu_custom_call.1} parent=5 // pred_region
        // Predicated region
        $region21: #{tpu_custom_call.1} parent=19 // pred_check
          %p257 = pneg %p44
        $region22: #{tpu_custom_call.1} parent=19 // pred_check_branch
          %259 = sbr.rel (%p257) target = $region24
        $region23: #{tpu_custom_call.1} parent=19 // pred_region
          %s260 = sand.u32 %s34, 1
          %s261 = scalar_lea.sflag [#allocation3], %s260
          %s262 = sand.u32 %s34, 1
          %s263 = smul.addr %s262, 16
          %s264 = scalar_lea.vmem [#allocation2], %s263
          %s265 = smul.u32 4, %s24
          %s267 = ssub.s32 256, 256
          %268 = vsyncadd %s261, %s267
          %s269 = smul.addr %s265, 64
          %s270 = scalar_lea.hbm %s0, %s269
          %s272 = sshll.u32 %s264, 4
          %s273 = int_to_ptr.vmem [resolvable:$true] %s272
          %275 = dma.hbm_to_vmem [thread:$0]  %s270, 256, %s273, %s261
        $region24: #{tpu_custom_call.1} parent=19 // pred_fallthru
          _
      $region20: #{tpu_custom_call.1} parent=5 // pred_fallthru
        _
      %p276 = scmp.le.s32.totalorder 1, %s24
      %p277 = scmp.lt.s32.totalorder %s24, 3
      %p278 = pnand %p276, %p277
      %p279 = pneg %p278
      // Predicated region
      $region25: #{tpu_custom_call.1} parent=5 // pred_check
        _
      $region26: #{tpu_custom_call.1} parent=5 // pred_check_branch
        %281 = sbr.rel (%p278) target = $region28
      $region27: #{tpu_custom_call.1} parent=5 // pred_region
        %s282 = ssub.s32 %s24, 1
        %s283 = sand.u32 %s37, 1
        %s284 = scalar_lea.sflag [#allocation3], %s283
        %s285 = sand.u32 %s37, 1
        %s286 = smul.addr %s285, 16
        %s287 = scalar_lea.vmem [#allocation2], %s286
        // Predicated region
        $region29: #{tpu_custom_call.1} parent=27 // pred_check
          %p288 = pneg %p50
        $region30: #{tpu_custom_call.1} parent=27 // pred_check_branch
          %290 = sbr.rel (%p288) target = $region32
        $region31: #{tpu_custom_call.1} parent=27 // pred_region
          %291 = dma.done %s284, 256
        $region32: #{tpu_custom_call.1} parent=27 // pred_fallthru
          _
        // Predicated region
        $region33: #{tpu_custom_call.1} parent=27 // pred_check
          %p292 = pneg %p71
        $region34: #{tpu_custom_call.1} parent=27 // pred_check_branch
          %294 = sbr.rel (%p292) target = $region36
        $region35: #{tpu_custom_call.1} parent=27 // pred_region
          %295 = dma.done [#allocation6], 64
        $region36: #{tpu_custom_call.1} parent=27 // pred_fallthru
          _
        %s296 = sand.u32 %s37, 1
        %s297 = scalar_lea.sflag [#allocation3], %s296
        %s298 = sand.u32 %s37, 1
        %s299 = smul.addr %s298, 16
        %s300 = scalar_lea.vmem [#allocation2], %s299
        %p301 = pneg %p50
        %p302 = pneg %p47
        %p303 = pneg %p71
        %p304 = pneg %p68
        %p305 = pneg %p97
        %p306 = pneg %p94
        %s307 = sand.u32 %s84, 1
        %s308 = sand.u32 %s84, 1
        %s309 = smul.addr %s308, 256
        %s310 = scalar_lea.vmem [#allocation7], %s309
        %p311 = pneg %p123
        %p312 = pneg %p120
        %s313 = sand.u32 %s110, 1
        %s314 = sand.u32 %s110, 1
        %s315 = smul.addr %s314, 256
        %s316 = scalar_lea.vmem [#allocation8], %s315
        %p317 = pneg %p149
        %p318 = pneg %p146
        %s319 = sand.u32 %s136, 1
        %s320 = sand.u32 %s136, 1
        %s321 = smul.addr %s320, 256
        %s322 = scalar_lea.vmem [#allocation9], %s321
        %p323 = pneg %p175
        %p324 = pneg %p172
        %s325 = sand.u32 %s162, 1
        %s326 = scalar_lea.sflag [#allocation4], %s325
        %s327 = sand.u32 %s162, 1
        %s328 = smul.addr %s327, 16
        %s329 = scalar_lea.vmem [#allocation10], %s328
        %p330 = pneg %p201
        %p331 = pneg %p198
        %s332 = sand.u32 %s29, 1
        %s333 = scalar_lea.sflag [#allocation12], %s332
        %s334 = sand.u32 %s188, 1
        %s335 = smul.addr %s334, 16
        %s336 = scalar_lea.vmem [#allocation11], %s335
        %p337 = pneg %p227
        %p338 = pneg %p224
        %s339 = sand.u32 %s29, 1
        %s340 = scalar_lea.sflag [#allocation12], %s339
        %s341 = sand.u32 %s214, 1
        %s342 = smul.addr %s341, 16
        %s343 = scalar_lea.vmem [#allocation13], %s342
        %s344 = smul.u32 4, %s29
        %s345 = smul.u32 4, %s29
        %s346 = smul.u32 4, %s29
        %s347 = smul.u32 4, %s29
        %s348 = smul.u32 4, %s29
        %s349 = smul.u32 4, %s29
        %s350 = smul.u32 4, %s29
        %v351 = vld [vmem:[%s287] sm:$0xff]
        %v352 = vld [vmem:[%s287 + $0x8] sm:$0xff]
        %v353 = vmul.f32 %v351, 12.0
        %v354 = vmul.f32 %v352, 12.0
        %v355 = vrcp.pop 3.0
        %v356 = vmul.f32 %v353, %v355
        %v357 = vmul.f32 %v354, %v355
        %v358 = vfloor.f32 %v356
        %v359 = vfloor.f32 %v357
        %v360 = vmax.f32 %v358, 0.0
        %v361 = vmax.f32 %v359, 0.0
        %v362 = vmin.f32 %v360, 3.0
        %v363 = vmin.f32 %v361, 3.0
        %v364 = vmul.f32 %v362, 3.0
        %v365 = vmul.f32 %v363, 3.0
        %v366 = vcvt.f32.s32.to.zero.pseudo %v364
        %v367 = vcvt.f32.s32.to.zero.pseudo %v365
        %v368 = vsub.f32 %v353, %v364
        %v369 = vsub.f32 %v354, %v365
        %v370 = vsub.f32 %v368, 1.5
        %v371 = vsub.f32 %v369, 1.5
        %v372 = vmul.f32 %v370, 0.6666667
        %v373 = vmul.f32 %v371, 0.6666667
        %v374 = vsub.f32 %v372, -0.33333334
        %v375 = vsub.f32 %v373, -0.33333334
        %v376 = vmul.f32 %v374, -0.5625
        %v377 = vmul.f32 %v375, -0.5625
        %v378 = vsub.f32 %v372, 0.33333334
        %v379 = vsub.f32 %v373, 0.33333334
        %v380 = vmul.f32 %v376, %v378
        %v381 = vmul.f32 %v377, %v379
        %v382 = vsub.f32 %v372, 1.0
        %v383 = vsub.f32 %v373, 1.0
        %v384 = vmul.f32 %v380, %v382
        %v385 = vmul.f32 %v381, %v383
        %v386 = vsub.f32 %v372, -1.0
        %v387 = vsub.f32 %v373, -1.0
        %v388 = vmul.f32 %v386, 1.6875
        %v389 = vmul.f32 %v387, 1.6875
        %v390 = vmul.f32 %v388, %v378
        %v391 = vmul.f32 %v389, %v379
        %v392 = vmul.f32 %v390, %v382
        %v393 = vmul.f32 %v391, %v383
        %v394 = vmul.f32 %v386, -1.6875
        %v395 = vmul.f32 %v387, -1.6875
        %v396 = vmul.f32 %v394, %v374
        %v397 = vmul.f32 %v395, %v375
        %v398 = vmul.f32 %v396, %v382
        %v399 = vmul.f32 %v397, %v383
        %v400 = vmul.f32 %v386, 0.5625
        %v401 = vmul.f32 %v387, 0.5625
        %v402 = vmul.f32 %v400, %v374
        %v403 = vmul.f32 %v401, %v375
        %v404 = vmul.f32 %v402, %v378
        %v405 = vmul.f32 %v403, %v379
        %v406 = vmul.f32 %v378, -4.5
        %v407 = vmul.f32 %v379, -4.5
        %v408 = vmul.f32 %v406, %v382
        %v409 = vmul.f32 %v407, %v383
        %v410 = vmul.f32 %v374, -4.5
        %v411 = vmul.f32 %v375, -4.5
        %v412 = vmul.f32 %v410, %v382
        %v413 = vmul.f32 %v411, %v383
        %v414 = vadd.f32 %v408, %v412
        %v415 = vadd.f32 %v409, %v413
        %v416 = vmul.f32 %v410, %v378
        %v417 = vmul.f32 %v411, %v379
        %v418 = vadd.f32 %v414, %v416
        %v419 = vadd.f32 %v415, %v417
        %v420 = vmul.f32 %v378, 13.5
        %v421 = vmul.f32 %v379, 13.5
        %v422 = vmul.f32 %v420, %v382
        %v423 = vmul.f32 %v421, %v383
        %v424 = vmul.f32 %v386, 13.5
        %v425 = vmul.f32 %v387, 13.5
        %v426 = vmul.f32 %v424, %v382
        %v427 = vmul.f32 %v425, %v383
        %v428 = vadd.f32 %v422, %v426
        %v429 = vadd.f32 %v423, %v427
        %v430 = vmul.f32 %v424, %v378
        %v431 = vmul.f32 %v425, %v379
        %v432 = vadd.f32 %v428, %v430
        %v433 = vadd.f32 %v429, %v431
        %v434 = vmul.f32 %v374, -13.5
        %v435 = vmul.f32 %v375, -13.5
        %v436 = vmul.f32 %v434, %v382
        %v437 = vmul.f32 %v435, %v383
        %v438 = vmul.f32 %v386, -13.5
        %v439 = vmul.f32 %v387, -13.5
        %v440 = vmul.f32 %v438, %v382
        %v441 = vmul.f32 %v439, %v383
        %v442 = vadd.f32 %v436, %v440
        %v443 = vadd.f32 %v437, %v441
        %v444 = vmul.f32 %v438, %v374
        %v445 = vmul.f32 %v439, %v375
        %v446 = vadd.f32 %v442, %v444
        %v447 = vadd.f32 %v443, %v445
        %v448 = vmul.f32 %v374, 4.5
        %v449 = vmul.f32 %v375, 4.5
        %v450 = vmul.f32 %v448, %v378
        %v451 = vmul.f32 %v449, %v379
        %v452 = vmul.f32 %v386, 4.5
        %v453 = vmul.f32 %v387, 4.5
        %v454 = vmul.f32 %v452, %v378
        %v455 = vmul.f32 %v453, %v379
        %v456 = vadd.f32 %v450, %v454
        %v457 = vadd.f32 %v451, %v455
        %v458 = vmul.f32 %v452, %v374
        %v459 = vmul.f32 %v453, %v375
        %v460 = vadd.f32 %v456, %v458
        %v461 = vadd.f32 %v457, %v459
        %v462 = vmul.f32 %v382, -36.0
        %v463 = vmul.f32 %v383, -36.0
        %v464 = vmul.f32 %v378, -36.0
        %v465 = vmul.f32 %v379, -36.0
        %v466 = vadd.f32 %v462, %v464
        %v467 = vadd.f32 %v463, %v465
        %v468 = vadd.f32 %v466, %v462
        %v469 = vadd.f32 %v467, %v463
        %v470 = vmul.f32 %v374, -36.0
        %v471 = vmul.f32 %v375, -36.0
        %v472 = vadd.f32 %v468, %v470
        %v473 = vadd.f32 %v469, %v471
        %v474 = vadd.f32 %v472, %v464
        %v475 = vadd.f32 %v473, %v465
        %v476 = vadd.f32 %v474, %v470
        %v477 = vadd.f32 %v475, %v471
        %v478 = vmul.f32 %v382, 108.0
        %v479 = vmul.f32 %v383, 108.0
        %v480 = vmul.f32 %v378, 108.0
        %v481 = vmul.f32 %v379, 108.0
        %v482 = vadd.f32 %v478, %v480
        %v483 = vadd.f32 %v479, %v481
        %v484 = vadd.f32 %v482, %v478
        %v485 = vadd.f32 %v483, %v479
        %v486 = vmul.f32 %v386, 108.0
        %v487 = vmul.f32 %v387, 108.0
        %v488 = vadd.f32 %v484, %v486
        %v489 = vadd.f32 %v485, %v487
        %v490 = vadd.f32 %v488, %v480
        %v491 = vadd.f32 %v489, %v481
        %v492 = vadd.f32 %v490, %v486
        %v493 = vadd.f32 %v491, %v487
        %v494 = vmul.f32 %v382, -108.0
        %v495 = vmul.f32 %v383, -108.0
        %v496 = vmul.f32 %v374, -108.0
        %v497 = vmul.f32 %v375, -108.0
        %v498 = vadd.f32 %v494, %v496
        %v499 = vadd.f32 %v495, %v497
        %v500 = vadd.f32 %v498, %v494
        %v501 = vadd.f32 %v499, %v495
        %v502 = vmul.f32 %v386, -108.0
        %v503 = vmul.f32 %v387, -108.0
        %v504 = vadd.f32 %v500, %v502
        %v505 = vadd.f32 %v501, %v503
        %v506 = vadd.f32 %v504, %v496
        %v507 = vadd.f32 %v505, %v497
        %v508 = vadd.f32 %v506, %v502
        %v509 = vadd.f32 %v507, %v503
        %v510 = vmul.f32 %v378, 36.0
        %v511 = vmul.f32 %v379, 36.0
        %v512 = vmul.f32 %v374, 36.0
        %v513 = vmul.f32 %v375, 36.0
        %v514 = vadd.f32 %v510, %v512
        %v515 = vadd.f32 %v511, %v513
        %v516 = vadd.f32 %v514, %v510
        %v517 = vadd.f32 %v515, %v511
        %v518 = vmul.f32 %v386, 36.0
        %v519 = vmul.f32 %v387, 36.0
        %v520 = vadd.f32 %v516, %v518
        %v521 = vadd.f32 %v517, %v519
        %v522 = vadd.f32 %v520, %v512
        %v523 = vadd.f32 %v521, %v513
        %v524 = vadd.f32 %v522, %v518
        %v525 = vadd.f32 %v523, %v519
        %v526 = vlaneseq
        %v527 = vshrl.u32 %v526, 7
        %v528 = vadd.s32 %v527, 8
        %v530 = vunpack.c.l.s4 1966171168
        %v531 = vunpack.c.0.s8 %v530
        %v532 = vlaneseq
        %v533 = vshrl.u32 %v532, 7
        %v534 = vsub.s32 %v531, %v533
        %v535 = vrot.slane %v366, %v534
        %v537 = vunpack.c.l.s4 1966171168
        %v538 = vunpack.c.0.s8 %v537
        %v539 = vlaneseq
        %v540 = vshrl.u32 %v539, 7
        %v541 = vsub.s32 %v538, %v540
        %v542 = vrot.slane %v367, %v541
        %v543 = vcombine.low %v535, %v542
        %v544 = vcombine.high %v535, %v542
        %v546 = vunpack.c.l.s4 1966171168
        %v547 = vunpack.c.0.s8 %v546
        %v548 = vlaneseq
        %v549 = vshrl.u32 %v548, 7
        %v550 = vsub.s32 %v547, %v549
        %v551 = vrot.slane %v543, %v550
        %v553 = vunpack.c.l.s4 1966171168
        %v554 = vunpack.c.0.s8 %v553
        %v555 = vlaneseq
        %v556 = vshrl.u32 %v555, 7
        %v557 = vsub.s32 %v554, %v556
        %v558 = vrot.slane %v544, %v557
        %v559 = vcombine.high %v551, %v551
        %v560 = vcombine.high %v558, %v558
        %v561 = vlaneseq
        %v562 = vshrl.u32 %v561, 7
        %v563 = vsub.s32 0, %v562
        %v564 = vrot.slane %v551, %v563
        %v565 = vlaneseq
        %v566 = vshrl.u32 %v565, 7
        %v567 = vsub.s32 1, %v566
        %v568 = vrot.slane %v551, %v567
        %v569 = vlaneseq
        %v570 = vshrl.u32 %v569, 7
        %v571 = vsub.s32 2, %v570
        %v572 = vrot.slane %v551, %v571
        %v573 = vlaneseq
        %v574 = vshrl.u32 %v573, 7
        %v575 = vsub.s32 3, %v574
        %v576 = vrot.slane %v551, %v575
        %v577 = vlaneseq
        %v578 = vshrl.u32 %v577, 7
        %v579 = vsub.s32 0, %v578
        %v580 = vrot.slane %v558, %v579
        %v581 = vlaneseq
        %v582 = vshrl.u32 %v581, 7
        %v583 = vsub.s32 1, %v582
        %v584 = vrot.slane %v558, %v583
        %v585 = vlaneseq
        %v586 = vshrl.u32 %v585, 7
        %v587 = vsub.s32 2, %v586
        %v588 = vrot.slane %v558, %v587
        %v589 = vlaneseq
        %v590 = vshrl.u32 %v589, 7
        %v591 = vsub.s32 3, %v590
        %v592 = vrot.slane %v558, %v591
        %v593 = vlaneseq
        %v594 = vshrl.u32 %v593, 7
        %v595 = vsub.s32 0, %v594
        %v596 = vrot.slane %v559, %v595
        %v597 = vlaneseq
        %v598 = vshrl.u32 %v597, 7
        %v599 = vsub.s32 1, %v598
        %v600 = vrot.slane %v559, %v599
        %v601 = vlaneseq
        %v602 = vshrl.u32 %v601, 7
        %v603 = vsub.s32 2, %v602
        %v604 = vrot.slane %v559, %v603
        %v605 = vlaneseq
        %v606 = vshrl.u32 %v605, 7
        %v607 = vsub.s32 3, %v606
        %v608 = vrot.slane %v559, %v607
        %v609 = vlaneseq
        %v610 = vshrl.u32 %v609, 7
        %v611 = vsub.s32 0, %v610
        %v612 = vrot.slane %v560, %v611
        %v613 = vlaneseq
        %v614 = vshrl.u32 %v613, 7
        %v615 = vsub.s32 1, %v614
        %v616 = vrot.slane %v560, %v615
        %v617 = vlaneseq
        %v618 = vshrl.u32 %v617, 7
        %v619 = vsub.s32 2, %v618
        %v620 = vrot.slane %v560, %v619
        %v621 = vlaneseq
        %v622 = vshrl.u32 %v621, 7
        %v623 = vsub.s32 3, %v622
        %v624 = vrot.slane %v560, %v623
        %v625 = vsub.s32 %v527, %v564
        %v626 = vsub.s32 %v527, %v568
        %v627 = vsub.s32 %v527, %v572
        %v628 = vsub.s32 %v527, %v576
        %v629 = vsub.s32 %v528, %v564
        %v630 = vsub.s32 %v528, %v568
        %v631 = vsub.s32 %v528, %v572
        %v632 = vsub.s32 %v528, %v576
        %v633 = vsub.s32 %v527, %v580
        %v634 = vsub.s32 %v527, %v584
        %v635 = vsub.s32 %v527, %v588
        %v636 = vsub.s32 %v527, %v592
        %v637 = vsub.s32 %v528, %v580
        %v638 = vsub.s32 %v528, %v584
        %v639 = vsub.s32 %v528, %v588
        %v640 = vsub.s32 %v528, %v592
        %v641 = vsub.s32 %v527, %v596
        %v642 = vsub.s32 %v527, %v600
        %v643 = vsub.s32 %v527, %v604
        %v644 = vsub.s32 %v527, %v608
        %v645 = vsub.s32 %v528, %v596
        %v646 = vsub.s32 %v528, %v600
        %v647 = vsub.s32 %v528, %v604
        %v648 = vsub.s32 %v528, %v608
        %v649 = vsub.s32 %v527, %v612
        %v650 = vsub.s32 %v527, %v616
        %v651 = vsub.s32 %v527, %v620
        %v652 = vsub.s32 %v527, %v624
        %v653 = vsub.s32 %v528, %v612
        %v654 = vsub.s32 %v528, %v616
        %v655 = vsub.s32 %v528, %v620
        %v656 = vsub.s32 %v528, %v624
        %vm657 = vcmp.eq.s32.totalorder %v625, 0
        %vm658 = vcmp.eq.s32.totalorder %v626, 0
        %vm659 = vcmp.eq.s32.totalorder %v627, 0
        %vm660 = vcmp.eq.s32.totalorder %v628, 0
        %vm661 = vcmp.eq.s32.totalorder %v629, 0
        %vm662 = vcmp.eq.s32.totalorder %v630, 0
        %vm663 = vcmp.eq.s32.totalorder %v631, 0
        %vm664 = vcmp.eq.s32.totalorder %v632, 0
        %vm665 = vcmp.eq.s32.totalorder %v633, 0
        %vm666 = vcmp.eq.s32.totalorder %v634, 0
        %vm667 = vcmp.eq.s32.totalorder %v635, 0
        %vm668 = vcmp.eq.s32.totalorder %v636, 0
        %vm669 = vcmp.eq.s32.totalorder %v637, 0
        %vm670 = vcmp.eq.s32.totalorder %v638, 0
        %vm671 = vcmp.eq.s32.totalorder %v639, 0
        %vm672 = vcmp.eq.s32.totalorder %v640, 0
        %vm673 = vcmp.eq.s32.totalorder %v641, 0
        %vm674 = vcmp.eq.s32.totalorder %v642, 0
        %vm675 = vcmp.eq.s32.totalorder %v643, 0
        %vm676 = vcmp.eq.s32.totalorder %v644, 0
        %vm677 = vcmp.eq.s32.totalorder %v645, 0
        %vm678 = vcmp.eq.s32.totalorder %v646, 0
        %vm679 = vcmp.eq.s32.totalorder %v647, 0
        %vm680 = vcmp.eq.s32.totalorder %v648, 0
        %vm681 = vcmp.eq.s32.totalorder %v649, 0
        %vm682 = vcmp.eq.s32.totalorder %v650, 0
        %vm683 = vcmp.eq.s32.totalorder %v651, 0
        %vm684 = vcmp.eq.s32.totalorder %v652, 0
        %vm685 = vcmp.eq.s32.totalorder %v653, 0
        %vm686 = vcmp.eq.s32.totalorder %v654, 0
        %vm687 = vcmp.eq.s32.totalorder %v655, 0
        %vm688 = vcmp.eq.s32.totalorder %v656, 0
        %v692 = vunpack.c.l.s4 1966171168
        %v693 = vunpack.c.0.s8 %v692
        %v694 = vlaneseq
        %v695 = vshrl.u32 %v694, 7
        %v696 = vsub.s32 %v693, %v695
        %v697 = vrot.slane %v384, %v696
        %v699 = vunpack.c.l.s4 1966171168
        %v700 = vunpack.c.0.s8 %v699
        %v701 = vlaneseq
        %v702 = vshrl.u32 %v701, 7
        %v703 = vsub.s32 %v700, %v702
        %v704 = vrot.slane %v385, %v703
        %v705 = vcombine.low %v697, %v704
        %v706 = vcombine.high %v697, %v704
        %v708 = vunpack.c.l.s4 1966171168
        %v709 = vunpack.c.0.s8 %v708
        %v710 = vlaneseq
        %v711 = vshrl.u32 %v710, 7
        %v712 = vsub.s32 %v709, %v711
        %v713 = vrot.slane %v705, %v712
        %v715 = vunpack.c.l.s4 1966171168
        %v716 = vunpack.c.0.s8 %v715
        %v717 = vlaneseq
        %v718 = vshrl.u32 %v717, 7
        %v719 = vsub.s32 %v716, %v718
        %v720 = vrot.slane %v706, %v719
        %v721 = vcombine.high %v713, %v713
        %v722 = vcombine.high %v720, %v720
        %v723 = vlaneseq
        %v724 = vshrl.u32 %v723, 7
        %v725 = vsub.s32 0, %v724
        %v726 = vrot.slane %v713, %v725
        %v727 = vlaneseq
        %v728 = vshrl.u32 %v727, 7
        %v729 = vsub.s32 1, %v728
        %v730 = vrot.slane %v713, %v729
        %v731 = vlaneseq
        %v732 = vshrl.u32 %v731, 7
        %v733 = vsub.s32 2, %v732
        %v734 = vrot.slane %v713, %v733
        %v735 = vlaneseq
        %v736 = vshrl.u32 %v735, 7
        %v737 = vsub.s32 3, %v736
        %v738 = vrot.slane %v713, %v737
        %v739 = vlaneseq
        %v740 = vshrl.u32 %v739, 7
        %v741 = vsub.s32 0, %v740
        %v742 = vrot.slane %v720, %v741
        %v743 = vlaneseq
        %v744 = vshrl.u32 %v743, 7
        %v745 = vsub.s32 1, %v744
        %v746 = vrot.slane %v720, %v745
        %v747 = vlaneseq
        %v748 = vshrl.u32 %v747, 7
        %v749 = vsub.s32 2, %v748
        %v750 = vrot.slane %v720, %v749
        %v751 = vlaneseq
        %v752 = vshrl.u32 %v751, 7
        %v753 = vsub.s32 3, %v752
        %v754 = vrot.slane %v720, %v753
        %v755 = vlaneseq
        %v756 = vshrl.u32 %v755, 7
        %v757 = vsub.s32 0, %v756
        %v758 = vrot.slane %v721, %v757
        %v759 = vlaneseq
        %v760 = vshrl.u32 %v759, 7
        %v761 = vsub.s32 1, %v760
        %v762 = vrot.slane %v721, %v761
        %v763 = vlaneseq
        %v764 = vshrl.u32 %v763, 7
        %v765 = vsub.s32 2, %v764
        %v766 = vrot.slane %v721, %v765
        %v767 = vlaneseq
        %v768 = vshrl.u32 %v767, 7
        %v769 = vsub.s32 3, %v768
        %v770 = vrot.slane %v721, %v769
        %v771 = vlaneseq
        %v772 = vshrl.u32 %v771, 7
        %v773 = vsub.s32 0, %v772
        %v774 = vrot.slane %v722, %v773
        %v775 = vlaneseq
        %v776 = vshrl.u32 %v775, 7
        %v777 = vsub.s32 1, %v776
        %v778 = vrot.slane %v722, %v777
        %v779 = vlaneseq
        %v780 = vshrl.u32 %v779, 7
        %v781 = vsub.s32 2, %v780
        %v782 = vrot.slane %v722, %v781
        %v783 = vlaneseq
        %v784 = vshrl.u32 %v783, 7
        %v785 = vsub.s32 3, %v784
        %v786 = vrot.slane %v722, %v785
        %v803 = vsel %vm657, %v726, 0.0
        %v804 = vsel %vm658, %v730, 0.0
        %v805 = vsel %vm659, %v734, 0.0
        %v806 = vsel %vm660, %v738, 0.0
        %v807 = vsel %vm661, %v726, 0.0
        %v808 = vsel %vm662, %v730, 0.0
        %v809 = vsel %vm663, %v734, 0.0
        %v810 = vsel %vm664, %v738, 0.0
        %v811 = vsel %vm665, %v742, 0.0
        %v812 = vsel %vm666, %v746, 0.0
        %v813 = vsel %vm667, %v750, 0.0
        %v814 = vsel %vm668, %v754, 0.0
        %v815 = vsel %vm669, %v742, 0.0
        %v816 = vsel %vm670, %v746, 0.0
        %v817 = vsel %vm671, %v750, 0.0
        %v818 = vsel %vm672, %v754, 0.0
        %v819 = vsel %vm673, %v758, 0.0
        %v820 = vsel %vm674, %v762, 0.0
        %v821 = vsel %vm675, %v766, 0.0
        %v822 = vsel %vm676, %v770, 0.0
        %v823 = vsel %vm677, %v758, 0.0
        %v824 = vsel %vm678, %v762, 0.0
        %v825 = vsel %vm679, %v766, 0.0
        %v826 = vsel %vm680, %v770, 0.0
        %v827 = vsel %vm681, %v774, 0.0
        %v828 = vsel %vm682, %v778, 0.0
        %v829 = vsel %vm683, %v782, 0.0
        %v830 = vsel %vm684, %v786, 0.0
        %v831 = vsel %vm685, %v774, 0.0
        %v832 = vsel %vm686, %v778, 0.0
        %v833 = vsel %vm687, %v782, 0.0
        %v834 = vsel %vm688, %v786, 0.0
        %v838 = vunpack.c.l.s4 1966171168
        %v839 = vunpack.c.0.s8 %v838
        %v840 = vlaneseq
        %v841 = vshrl.u32 %v840, 7
        %v842 = vsub.s32 %v839, %v841
        %v843 = vrot.slane %v418, %v842
        %v845 = vunpack.c.l.s4 1966171168
        %v846 = vunpack.c.0.s8 %v845
        %v847 = vlaneseq
        %v848 = vshrl.u32 %v847, 7
        %v849 = vsub.s32 %v846, %v848
        %v850 = vrot.slane %v419, %v849
        %v851 = vcombine.low %v843, %v850
        %v852 = vcombine.high %v843, %v850
        %v854 = vunpack.c.l.s4 1966171168
        %v855 = vunpack.c.0.s8 %v854
        %v856 = vlaneseq
        %v857 = vshrl.u32 %v856, 7
        %v858 = vsub.s32 %v855, %v857
        %v859 = vrot.slane %v851, %v858
        %v861 = vunpack.c.l.s4 1966171168
        %v862 = vunpack.c.0.s8 %v861
        %v863 = vlaneseq
        %v864 = vshrl.u32 %v863, 7
        %v865 = vsub.s32 %v862, %v864
        %v866 = vrot.slane %v852, %v865
        %v867 = vcombine.high %v859, %v859
        %v868 = vcombine.high %v866, %v866
        %v869 = vlaneseq
        %v870 = vshrl.u32 %v869, 7
        %v871 = vsub.s32 0, %v870
        %v872 = vrot.slane %v859, %v871
        %v873 = vlaneseq
        %v874 = vshrl.u32 %v873, 7
        %v875 = vsub.s32 1, %v874
        %v876 = vrot.slane %v859, %v875
        %v877 = vlaneseq
        %v878 = vshrl.u32 %v877, 7
        %v879 = vsub.s32 2, %v878
        %v880 = vrot.slane %v859, %v879
        %v881 = vlaneseq
        %v882 = vshrl.u32 %v881, 7
        %v883 = vsub.s32 3, %v882
        %v884 = vrot.slane %v859, %v883
        %v885 = vlaneseq
        %v886 = vshrl.u32 %v885, 7
        %v887 = vsub.s32 0, %v886
        %v888 = vrot.slane %v866, %v887
        %v889 = vlaneseq
        %v890 = vshrl.u32 %v889, 7
        %v891 = vsub.s32 1, %v890
        %v892 = vrot.slane %v866, %v891
        %v893 = vlaneseq
        %v894 = vshrl.u32 %v893, 7
        %v895 = vsub.s32 2, %v894
        %v896 = vrot.slane %v866, %v895
        %v897 = vlaneseq
        %v898 = vshrl.u32 %v897, 7
        %v899 = vsub.s32 3, %v898
        %v900 = vrot.slane %v866, %v899
        %v901 = vlaneseq
        %v902 = vshrl.u32 %v901, 7
        %v903 = vsub.s32 0, %v902
        %v904 = vrot.slane %v867, %v903
        %v905 = vlaneseq
        %v906 = vshrl.u32 %v905, 7
        %v907 = vsub.s32 1, %v906
        %v908 = vrot.slane %v867, %v907
        %v909 = vlaneseq
        %v910 = vshrl.u32 %v909, 7
        %v911 = vsub.s32 2, %v910
        %v912 = vrot.slane %v867, %v911
        %v913 = vlaneseq
        %v914 = vshrl.u32 %v913, 7
        %v915 = vsub.s32 3, %v914
        %v916 = vrot.slane %v867, %v915
        %v917 = vlaneseq
        %v918 = vshrl.u32 %v917, 7
        %v919 = vsub.s32 0, %v918
        %v920 = vrot.slane %v868, %v919
        %v921 = vlaneseq
        %v922 = vshrl.u32 %v921, 7
        %v923 = vsub.s32 1, %v922
        %v924 = vrot.slane %v868, %v923
        %v925 = vlaneseq
        %v926 = vshrl.u32 %v925, 7
        %v927 = vsub.s32 2, %v926
        %v928 = vrot.slane %v868, %v927
        %v929 = vlaneseq
        %v930 = vshrl.u32 %v929, 7
        %v931 = vsub.s32 3, %v930
        %v932 = vrot.slane %v868, %v931
        %v949 = vsel %vm657, %v872, 0.0
        %v950 = vsel %vm658, %v876, 0.0
        %v951 = vsel %vm659, %v880, 0.0
        %v952 = vsel %vm660, %v884, 0.0
        %v953 = vsel %vm661, %v872, 0.0
        %v954 = vsel %vm662, %v876, 0.0
        %v955 = vsel %vm663, %v880, 0.0
        %v956 = vsel %vm664, %v884, 0.0
        %v957 = vsel %vm665, %v888, 0.0
        %v958 = vsel %vm666, %v892, 0.0
        %v959 = vsel %vm667, %v896, 0.0
        %v960 = vsel %vm668, %v900, 0.0
        %v961 = vsel %vm669, %v888, 0.0
        %v962 = vsel %vm670, %v892, 0.0
        %v963 = vsel %vm671, %v896, 0.0
        %v964 = vsel %vm672, %v900, 0.0
        %v965 = vsel %vm673, %v904, 0.0
        %v966 = vsel %vm674, %v908, 0.0
        %v967 = vsel %vm675, %v912, 0.0
        %v968 = vsel %vm676, %v916, 0.0
        %v969 = vsel %vm677, %v904, 0.0
        %v970 = vsel %vm678, %v908, 0.0
        %v971 = vsel %vm679, %v912, 0.0
        %v972 = vsel %vm680, %v916, 0.0
        %v973 = vsel %vm681, %v920, 0.0
        %v974 = vsel %vm682, %v924, 0.0
        %v975 = vsel %vm683, %v928, 0.0
        %v976 = vsel %vm684, %v932, 0.0
        %v977 = vsel %vm685, %v920, 0.0
        %v978 = vsel %vm686, %v924, 0.0
        %v979 = vsel %vm687, %v928, 0.0
        %v980 = vsel %vm688, %v932, 0.0
        %v984 = vunpack.c.l.s4 1966171168
        %v985 = vunpack.c.0.s8 %v984
        %v986 = vlaneseq
        %v987 = vshrl.u32 %v986, 7
        %v988 = vsub.s32 %v985, %v987
        %v989 = vrot.slane %v476, %v988
        %v991 = vunpack.c.l.s4 1966171168
        %v992 = vunpack.c.0.s8 %v991
        %v993 = vlaneseq
        %v994 = vshrl.u32 %v993, 7
        %v995 = vsub.s32 %v992, %v994
        %v996 = vrot.slane %v477, %v995
        %v997 = vcombine.low %v989, %v996
        %v998 = vcombine.high %v989, %v996
        %v1000 = vunpack.c.l.s4 1966171168
        %v1001 = vunpack.c.0.s8 %v1000
        %v1002 = vlaneseq
        %v1003 = vshrl.u32 %v1002, 7
        %v1004 = vsub.s32 %v1001, %v1003
        %v1005 = vrot.slane %v997, %v1004
        %v1007 = vunpack.c.l.s4 1966171168
        %v1008 = vunpack.c.0.s8 %v1007
        %v1009 = vlaneseq
        %v1010 = vshrl.u32 %v1009, 7
        %v1011 = vsub.s32 %v1008, %v1010
        %v1012 = vrot.slane %v998, %v1011
        %v1013 = vcombine.high %v1005, %v1005
        %v1014 = vcombine.high %v1012, %v1012
        %v1015 = vlaneseq
        %v1016 = vshrl.u32 %v1015, 7
        %v1017 = vsub.s32 0, %v1016
        %v1018 = vrot.slane %v1005, %v1017
        %v1019 = vlaneseq
        %v1020 = vshrl.u32 %v1019, 7
        %v1021 = vsub.s32 1, %v1020
        %v1022 = vrot.slane %v1005, %v1021
        %v1023 = vlaneseq
        %v1024 = vshrl.u32 %v1023, 7
        %v1025 = vsub.s32 2, %v1024
        %v1026 = vrot.slane %v1005, %v1025
        %v1027 = vlaneseq
        %v1028 = vshrl.u32 %v1027, 7
        %v1029 = vsub.s32 3, %v1028
        %v1030 = vrot.slane %v1005, %v1029
        %v1031 = vlaneseq
        %v1032 = vshrl.u32 %v1031, 7
        %v1033 = vsub.s32 0, %v1032
        %v1034 = vrot.slane %v1012, %v1033
        %v1035 = vlaneseq
        %v1036 = vshrl.u32 %v1035, 7
        %v1037 = vsub.s32 1, %v1036
        %v1038 = vrot.slane %v1012, %v1037
        %v1039 = vlaneseq
        %v1040 = vshrl.u32 %v1039, 7
        %v1041 = vsub.s32 2, %v1040
        %v1042 = vrot.slane %v1012, %v1041
        %v1043 = vlaneseq
        %v1044 = vshrl.u32 %v1043, 7
        %v1045 = vsub.s32 3, %v1044
        %v1046 = vrot.slane %v1012, %v1045
        %v1047 = vlaneseq
        %v1048 = vshrl.u32 %v1047, 7
        %v1049 = vsub.s32 0, %v1048
        %v1050 = vrot.slane %v1013, %v1049
        %v1051 = vlaneseq
        %v1052 = vshrl.u32 %v1051, 7
        %v1053 = vsub.s32 1, %v1052
        %v1054 = vrot.slane %v1013, %v1053
        %v1055 = vlaneseq
        %v1056 = vshrl.u32 %v1055, 7
        %v1057 = vsub.s32 2, %v1056
        %v1058 = vrot.slane %v1013, %v1057
        %v1059 = vlaneseq
        %v1060 = vshrl.u32 %v1059, 7
        %v1061 = vsub.s32 3, %v1060
        %v1062 = vrot.slane %v1013, %v1061
        %v1063 = vlaneseq
        %v1064 = vshrl.u32 %v1063, 7
        %v1065 = vsub.s32 0, %v1064
        %v1066 = vrot.slane %v1014, %v1065
        %v1067 = vlaneseq
        %v1068 = vshrl.u32 %v1067, 7
        %v1069 = vsub.s32 1, %v1068
        %v1070 = vrot.slane %v1014, %v1069
        %v1071 = vlaneseq
        %v1072 = vshrl.u32 %v1071, 7
        %v1073 = vsub.s32 2, %v1072
        %v1074 = vrot.slane %v1014, %v1073
        %v1075 = vlaneseq
        %v1076 = vshrl.u32 %v1075, 7
        %v1077 = vsub.s32 3, %v1076
        %v1078 = vrot.slane %v1014, %v1077
        %v1095 = vsel %vm657, %v1018, 0.0
        %v1096 = vsel %vm658, %v1022, 0.0
        %v1097 = vsel %vm659, %v1026, 0.0
        %v1098 = vsel %vm660, %v1030, 0.0
        %v1099 = vsel %vm661, %v1018, 0.0
        %v1100 = vsel %vm662, %v1022, 0.0
        %v1101 = vsel %vm663, %v1026, 0.0
        %v1102 = vsel %vm664, %v1030, 0.0
        %v1103 = vsel %vm665, %v1034, 0.0
        %v1104 = vsel %vm666, %v1038, 0.0
        %v1105 = vsel %vm667, %v1042, 0.0
        %v1106 = vsel %vm668, %v1046, 0.0
        %v1107 = vsel %vm669, %v1034, 0.0
        %v1108 = vsel %vm670, %v1038, 0.0
        %v1109 = vsel %vm671, %v1042, 0.0
        %v1110 = vsel %vm672, %v1046, 0.0
        %v1111 = vsel %vm673, %v1050, 0.0
        %v1112 = vsel %vm674, %v1054, 0.0
        %v1113 = vsel %vm675, %v1058, 0.0
        %v1114 = vsel %vm676, %v1062, 0.0
        %v1115 = vsel %vm677, %v1050, 0.0
        %v1116 = vsel %vm678, %v1054, 0.0
        %v1117 = vsel %vm679, %v1058, 0.0
        %v1118 = vsel %vm680, %v1062, 0.0
        %v1119 = vsel %vm681, %v1066, 0.0
        %v1120 = vsel %vm682, %v1070, 0.0
        %v1121 = vsel %vm683, %v1074, 0.0
        %v1122 = vsel %vm684, %v1078, 0.0
        %v1123 = vsel %vm685, %v1066, 0.0
        %v1124 = vsel %vm686, %v1070, 0.0
        %v1125 = vsel %vm687, %v1074, 0.0
        %v1126 = vsel %vm688, %v1078, 0.0
        %vm1127 = vcmp.eq.s32.totalorder %v625, 1
        %vm1128 = vcmp.eq.s32.totalorder %v626, 1
        %vm1129 = vcmp.eq.s32.totalorder %v627, 1
        %vm1130 = vcmp.eq.s32.totalorder %v628, 1
        %vm1131 = vcmp.eq.s32.totalorder %v629, 1
        %vm1132 = vcmp.eq.s32.totalorder %v630, 1
        %vm1133 = vcmp.eq.s32.totalorder %v631, 1
        %vm1134 = vcmp.eq.s32.totalorder %v632, 1
        %vm1135 = vcmp.eq.s32.totalorder %v633, 1
        %vm1136 = vcmp.eq.s32.totalorder %v634, 1
        %vm1137 = vcmp.eq.s32.totalorder %v635, 1
        %vm1138 = vcmp.eq.s32.totalorder %v636, 1
        %vm1139 = vcmp.eq.s32.totalorder %v637, 1
        %vm1140 = vcmp.eq.s32.totalorder %v638, 1
        %vm1141 = vcmp.eq.s32.totalorder %v639, 1
        %vm1142 = vcmp.eq.s32.totalorder %v640, 1
        %vm1143 = vcmp.eq.s32.totalorder %v641, 1
        %vm1144 = vcmp.eq.s32.totalorder %v642, 1
        %vm1145 = vcmp.eq.s32.totalorder %v643, 1
        %vm1146 = vcmp.eq.s32.totalorder %v644, 1
        %vm1147 = vcmp.eq.s32.totalorder %v645, 1
        %vm1148 = vcmp.eq.s32.totalorder %v646, 1
        %vm1149 = vcmp.eq.s32.totalorder %v647, 1
        %vm1150 = vcmp.eq.s32.totalorder %v648, 1
        %vm1151 = vcmp.eq.s32.totalorder %v649, 1
        %vm1152 = vcmp.eq.s32.totalorder %v650, 1
        %vm1153 = vcmp.eq.s32.totalorder %v651, 1
        %vm1154 = vcmp.eq.s32.totalorder %v652, 1
        %vm1155 = vcmp.eq.s32.totalorder %v653, 1
        %vm1156 = vcmp.eq.s32.totalorder %v654, 1
        %vm1157 = vcmp.eq.s32.totalorder %v655, 1
        %vm1158 = vcmp.eq.s32.totalorder %v656, 1
        %v1162 = vunpack.c.l.s4 1966171168
        %v1163 = vunpack.c.0.s8 %v1162
        %v1164 = vlaneseq
        %v1165 = vshrl.u32 %v1164, 7
        %v1166 = vsub.s32 %v1163, %v1165
        %v1167 = vrot.slane %v392, %v1166
        %v1169 = vunpack.c.l.s4 1966171168
        %v1170 = vunpack.c.0.s8 %v1169
        %v1171 = vlaneseq
        %v1172 = vshrl.u32 %v1171, 7
        %v1173 = vsub.s32 %v1170, %v1172
        %v1174 = vrot.slane %v393, %v1173
        %v1175 = vcombine.low %v1167, %v1174
        %v1176 = vcombine.high %v1167, %v1174
        %v1178 = vunpack.c.l.s4 1966171168
        %v1179 = vunpack.c.0.s8 %v1178
        %v1180 = vlaneseq
        %v1181 = vshrl.u32 %v1180, 7
        %v1182 = vsub.s32 %v1179, %v1181
        %v1183 = vrot.slane %v1175, %v1182
        %v1185 = vunpack.c.l.s4 1966171168
        %v1186 = vunpack.c.0.s8 %v1185
        %v1187 = vlaneseq
        %v1188 = vshrl.u32 %v1187, 7
        %v1189 = vsub.s32 %v1186, %v1188
        %v1190 = vrot.slane %v1176, %v1189
        %v1191 = vcombine.high %v1183, %v1183
        %v1192 = vcombine.high %v1190, %v1190
        %v1193 = vlaneseq
        %v1194 = vshrl.u32 %v1193, 7
        %v1195 = vsub.s32 0, %v1194
        %v1196 = vrot.slane %v1183, %v1195
        %v1197 = vlaneseq
        %v1198 = vshrl.u32 %v1197, 7
        %v1199 = vsub.s32 1, %v1198
        %v1200 = vrot.slane %v1183, %v1199
        %v1201 = vlaneseq
        %v1202 = vshrl.u32 %v1201, 7
        %v1203 = vsub.s32 2, %v1202
        %v1204 = vrot.slane %v1183, %v1203
        %v1205 = vlaneseq
        %v1206 = vshrl.u32 %v1205, 7
        %v1207 = vsub.s32 3, %v1206
        %v1208 = vrot.slane %v1183, %v1207
        %v1209 = vlaneseq
        %v1210 = vshrl.u32 %v1209, 7
        %v1211 = vsub.s32 0, %v1210
        %v1212 = vrot.slane %v1190, %v1211
        %v1213 = vlaneseq
        %v1214 = vshrl.u32 %v1213, 7
        %v1215 = vsub.s32 1, %v1214
        %v1216 = vrot.slane %v1190, %v1215
        %v1217 = vlaneseq
        %v1218 = vshrl.u32 %v1217, 7
        %v1219 = vsub.s32 2, %v1218
        %v1220 = vrot.slane %v1190, %v1219
        %v1221 = vlaneseq
        %v1222 = vshrl.u32 %v1221, 7
        %v1223 = vsub.s32 3, %v1222
        %v1224 = vrot.slane %v1190, %v1223
        %v1225 = vlaneseq
        %v1226 = vshrl.u32 %v1225, 7
        %v1227 = vsub.s32 0, %v1226
        %v1228 = vrot.slane %v1191, %v1227
        %v1229 = vlaneseq
        %v1230 = vshrl.u32 %v1229, 7
        %v1231 = vsub.s32 1, %v1230
        %v1232 = vrot.slane %v1191, %v1231
        %v1233 = vlaneseq
        %v1234 = vshrl.u32 %v1233, 7
        %v1235 = vsub.s32 2, %v1234
        %v1236 = vrot.slane %v1191, %v1235
        %v1237 = vlaneseq
        %v1238 = vshrl.u32 %v1237, 7
        %v1239 = vsub.s32 3, %v1238
        %v1240 = vrot.slane %v1191, %v1239
        %v1241 = vlaneseq
        %v1242 = vshrl.u32 %v1241, 7
        %v1243 = vsub.s32 0, %v1242
        %v1244 = vrot.slane %v1192, %v1243
        %v1245 = vlaneseq
        %v1246 = vshrl.u32 %v1245, 7
        %v1247 = vsub.s32 1, %v1246
        %v1248 = vrot.slane %v1192, %v1247
        %v1249 = vlaneseq
        %v1250 = vshrl.u32 %v1249, 7
        %v1251 = vsub.s32 2, %v1250
        %v1252 = vrot.slane %v1192, %v1251
        %v1253 = vlaneseq
        %v1254 = vshrl.u32 %v1253, 7
        %v1255 = vsub.s32 3, %v1254
        %v1256 = vrot.slane %v1192, %v1255
        %v1273 = vsel %vm1127, %v1196, %v803
        %v1274 = vsel %vm1128, %v1200, %v804
        %v1275 = vsel %vm1129, %v1204, %v805
        %v1276 = vsel %vm1130, %v1208, %v806
        %v1277 = vsel %vm1131, %v1196, %v807
        %v1278 = vsel %vm1132, %v1200, %v808
        %v1279 = vsel %vm1133, %v1204, %v809
        %v1280 = vsel %vm1134, %v1208, %v810
        %v1281 = vsel %vm1135, %v1212, %v811
        %v1282 = vsel %vm1136, %v1216, %v812
        %v1283 = vsel %vm1137, %v1220, %v813
        %v1284 = vsel %vm1138, %v1224, %v814
        %v1285 = vsel %vm1139, %v1212, %v815
        %v1286 = vsel %vm1140, %v1216, %v816
        %v1287 = vsel %vm1141, %v1220, %v817
        %v1288 = vsel %vm1142, %v1224, %v818
        %v1289 = vsel %vm1143, %v1228, %v819
        %v1290 = vsel %vm1144, %v1232, %v820
        %v1291 = vsel %vm1145, %v1236, %v821
        %v1292 = vsel %vm1146, %v1240, %v822
        %v1293 = vsel %vm1147, %v1228, %v823
        %v1294 = vsel %vm1148, %v1232, %v824
        %v1295 = vsel %vm1149, %v1236, %v825
        %v1296 = vsel %vm1150, %v1240, %v826
        %v1297 = vsel %vm1151, %v1244, %v827
        %v1298 = vsel %vm1152, %v1248, %v828
        %v1299 = vsel %vm1153, %v1252, %v829
        %v1300 = vsel %vm1154, %v1256, %v830
        %v1301 = vsel %vm1155, %v1244, %v831
        %v1302 = vsel %vm1156, %v1248, %v832
        %v1303 = vsel %vm1157, %v1252, %v833
        %v1304 = vsel %vm1158, %v1256, %v834
        %v1308 = vunpack.c.l.s4 1966171168
        %v1309 = vunpack.c.0.s8 %v1308
        %v1310 = vlaneseq
        %v1311 = vshrl.u32 %v1310, 7
        %v1312 = vsub.s32 %v1309, %v1311
        %v1313 = vrot.slane %v432, %v1312
        %v1315 = vunpack.c.l.s4 1966171168
        %v1316 = vunpack.c.0.s8 %v1315
        %v1317 = vlaneseq
        %v1318 = vshrl.u32 %v1317, 7
        %v1319 = vsub.s32 %v1316, %v1318
        %v1320 = vrot.slane %v433, %v1319
        %v1321 = vcombine.low %v1313, %v1320
        %v1322 = vcombine.high %v1313, %v1320
        %v1324 = vunpack.c.l.s4 1966171168
        %v1325 = vunpack.c.0.s8 %v1324
        %v1326 = vlaneseq
        %v1327 = vshrl.u32 %v1326, 7
        %v1328 = vsub.s32 %v1325, %v1327
        %v1329 = vrot.slane %v1321, %v1328
        %v1331 = vunpack.c.l.s4 1966171168
        %v1332 = vunpack.c.0.s8 %v1331
        %v1333 = vlaneseq
        %v1334 = vshrl.u32 %v1333, 7
        %v1335 = vsub.s32 %v1332, %v1334
        %v1336 = vrot.slane %v1322, %v1335
        %v1337 = vcombine.high %v1329, %v1329
        %v1338 = vcombine.high %v1336, %v1336
        %v1339 = vlaneseq
        %v1340 = vshrl.u32 %v1339, 7
        %v1341 = vsub.s32 0, %v1340
        %v1342 = vrot.slane %v1329, %v1341
        %v1343 = vlaneseq
        %v1344 = vshrl.u32 %v1343, 7
        %v1345 = vsub.s32 1, %v1344
        %v1346 = vrot.slane %v1329, %v1345
        %v1347 = vlaneseq
        %v1348 = vshrl.u32 %v1347, 7
        %v1349 = vsub.s32 2, %v1348
        %v1350 = vrot.slane %v1329, %v1349
        %v1351 = vlaneseq
        %v1352 = vshrl.u32 %v1351, 7
        %v1353 = vsub.s32 3, %v1352
        %v1354 = vrot.slane %v1329, %v1353
        %v1355 = vlaneseq
        %v1356 = vshrl.u32 %v1355, 7
        %v1357 = vsub.s32 0, %v1356
        %v1358 = vrot.slane %v1336, %v1357
        %v1359 = vlaneseq
        %v1360 = vshrl.u32 %v1359, 7
        %v1361 = vsub.s32 1, %v1360
        %v1362 = vrot.slane %v1336, %v1361
        %v1363 = vlaneseq
        %v1364 = vshrl.u32 %v1363, 7
        %v1365 = vsub.s32 2, %v1364
        %v1366 = vrot.slane %v1336, %v1365
        %v1367 = vlaneseq
        %v1368 = vshrl.u32 %v1367, 7
        %v1369 = vsub.s32 3, %v1368
        %v1370 = vrot.slane %v1336, %v1369
        %v1371 = vlaneseq
        %v1372 = vshrl.u32 %v1371, 7
        %v1373 = vsub.s32 0, %v1372
        %v1374 = vrot.slane %v1337, %v1373
        %v1375 = vlaneseq
        %v1376 = vshrl.u32 %v1375, 7
        %v1377 = vsub.s32 1, %v1376
        %v1378 = vrot.slane %v1337, %v1377
        %v1379 = vlaneseq
        %v1380 = vshrl.u32 %v1379, 7
        %v1381 = vsub.s32 2, %v1380
        %v1382 = vrot.slane %v1337, %v1381
        %v1383 = vlaneseq
        %v1384 = vshrl.u32 %v1383, 7
        %v1385 = vsub.s32 3, %v1384
        %v1386 = vrot.slane %v1337, %v1385
        %v1387 = vlaneseq
        %v1388 = vshrl.u32 %v1387, 7
        %v1389 = vsub.s32 0, %v1388
        %v1390 = vrot.slane %v1338, %v1389
        %v1391 = vlaneseq
        %v1392 = vshrl.u32 %v1391, 7
        %v1393 = vsub.s32 1, %v1392
        %v1394 = vrot.slane %v1338, %v1393
        %v1395 = vlaneseq
        %v1396 = vshrl.u32 %v1395, 7
        %v1397 = vsub.s32 2, %v1396
        %v1398 = vrot.slane %v1338, %v1397
        %v1399 = vlaneseq
        %v1400 = vshrl.u32 %v1399, 7
        %v1401 = vsub.s32 3, %v1400
        %v1402 = vrot.slane %v1338, %v1401
        %v1419 = vsel %vm1127, %v1342, %v949
        %v1420 = vsel %vm1128, %v1346, %v950
        %v1421 = vsel %vm1129, %v1350, %v951
        %v1422 = vsel %vm1130, %v1354, %v952
        %v1423 = vsel %vm1131, %v1342, %v953
        %v1424 = vsel %vm1132, %v1346, %v954
        %v1425 = vsel %vm1133, %v1350, %v955
        %v1426 = vsel %vm1134, %v1354, %v956
        %v1427 = vsel %vm1135, %v1358, %v957
        %v1428 = vsel %vm1136, %v1362, %v958
        %v1429 = vsel %vm1137, %v1366, %v959
        %v1430 = vsel %vm1138, %v1370, %v960
        %v1431 = vsel %vm1139, %v1358, %v961
        %v1432 = vsel %vm1140, %v1362, %v962
        %v1433 = vsel %vm1141, %v1366, %v963
        %v1434 = vsel %vm1142, %v1370, %v964
        %v1435 = vsel %vm1143, %v1374, %v965
        %v1436 = vsel %vm1144, %v1378, %v966
        %v1437 = vsel %vm1145, %v1382, %v967
        %v1438 = vsel %vm1146, %v1386, %v968
        %v1439 = vsel %vm1147, %v1374, %v969
        %v1440 = vsel %vm1148, %v1378, %v970
        %v1441 = vsel %vm1149, %v1382, %v971
        %v1442 = vsel %vm1150, %v1386, %v972
        %v1443 = vsel %vm1151, %v1390, %v973
        %v1444 = vsel %vm1152, %v1394, %v974
        %v1445 = vsel %vm1153, %v1398, %v975
        %v1446 = vsel %vm1154, %v1402, %v976
        %v1447 = vsel %vm1155, %v1390, %v977
        %v1448 = vsel %vm1156, %v1394, %v978
        %v1449 = vsel %vm1157, %v1398, %v979
        %v1450 = vsel %vm1158, %v1402, %v980
        %v1454 = vunpack.c.l.s4 1966171168
        %v1455 = vunpack.c.0.s8 %v1454
        %v1456 = vlaneseq
        %v1457 = vshrl.u32 %v1456, 7
        %v1458 = vsub.s32 %v1455, %v1457
        %v1459 = vrot.slane %v492, %v1458
        %v1461 = vunpack.c.l.s4 1966171168
        %v1462 = vunpack.c.0.s8 %v1461
        %v1463 = vlaneseq
        %v1464 = vshrl.u32 %v1463, 7
        %v1465 = vsub.s32 %v1462, %v1464
        %v1466 = vrot.slane %v493, %v1465
        %v1467 = vcombine.low %v1459, %v1466
        %v1468 = vcombine.high %v1459, %v1466
        %v1470 = vunpack.c.l.s4 1966171168
        %v1471 = vunpack.c.0.s8 %v1470
        %v1472 = vlaneseq
        %v1473 = vshrl.u32 %v1472, 7
        %v1474 = vsub.s32 %v1471, %v1473
        %v1475 = vrot.slane %v1467, %v1474
        %v1477 = vunpack.c.l.s4 1966171168
        %v1478 = vunpack.c.0.s8 %v1477
        %v1479 = vlaneseq
        %v1480 = vshrl.u32 %v1479, 7
        %v1481 = vsub.s32 %v1478, %v1480
        %v1482 = vrot.slane %v1468, %v1481
        %v1483 = vcombine.high %v1475, %v1475
        %v1484 = vcombine.high %v1482, %v1482
        %v1485 = vlaneseq
        %v1486 = vshrl.u32 %v1485, 7
        %v1487 = vsub.s32 0, %v1486
        %v1488 = vrot.slane %v1475, %v1487
        %v1489 = vlaneseq
        %v1490 = vshrl.u32 %v1489, 7
        %v1491 = vsub.s32 1, %v1490
        %v1492 = vrot.slane %v1475, %v1491
        %v1493 = vlaneseq
        %v1494 = vshrl.u32 %v1493, 7
        %v1495 = vsub.s32 2, %v1494
        %v1496 = vrot.slane %v1475, %v1495
        %v1497 = vlaneseq
        %v1498 = vshrl.u32 %v1497, 7
        %v1499 = vsub.s32 3, %v1498
        %v1500 = vrot.slane %v1475, %v1499
        %v1501 = vlaneseq
        %v1502 = vshrl.u32 %v1501, 7
        %v1503 = vsub.s32 0, %v1502
        %v1504 = vrot.slane %v1482, %v1503
        %v1505 = vlaneseq
        %v1506 = vshrl.u32 %v1505, 7
        %v1507 = vsub.s32 1, %v1506
        %v1508 = vrot.slane %v1482, %v1507
        %v1509 = vlaneseq
        %v1510 = vshrl.u32 %v1509, 7
        %v1511 = vsub.s32 2, %v1510
        %v1512 = vrot.slane %v1482, %v1511
        %v1513 = vlaneseq
        %v1514 = vshrl.u32 %v1513, 7
        %v1515 = vsub.s32 3, %v1514
        %v1516 = vrot.slane %v1482, %v1515
        %v1517 = vlaneseq
        %v1518 = vshrl.u32 %v1517, 7
        %v1519 = vsub.s32 0, %v1518
        %v1520 = vrot.slane %v1483, %v1519
        %v1521 = vlaneseq
        %v1522 = vshrl.u32 %v1521, 7
        %v1523 = vsub.s32 1, %v1522
        %v1524 = vrot.slane %v1483, %v1523
        %v1525 = vlaneseq
        %v1526 = vshrl.u32 %v1525, 7
        %v1527 = vsub.s32 2, %v1526
        %v1528 = vrot.slane %v1483, %v1527
        %v1529 = vlaneseq
        %v1530 = vshrl.u32 %v1529, 7
        %v1531 = vsub.s32 3, %v1530
        %v1532 = vrot.slane %v1483, %v1531
        %v1533 = vlaneseq
        %v1534 = vshrl.u32 %v1533, 7
        %v1535 = vsub.s32 0, %v1534
        %v1536 = vrot.slane %v1484, %v1535
        %v1537 = vlaneseq
        %v1538 = vshrl.u32 %v1537, 7
        %v1539 = vsub.s32 1, %v1538
        %v1540 = vrot.slane %v1484, %v1539
        %v1541 = vlaneseq
        %v1542 = vshrl.u32 %v1541, 7
        %v1543 = vsub.s32 2, %v1542
        %v1544 = vrot.slane %v1484, %v1543
        %v1545 = vlaneseq
        %v1546 = vshrl.u32 %v1545, 7
        %v1547 = vsub.s32 3, %v1546
        %v1548 = vrot.slane %v1484, %v1547
        %v1565 = vsel %vm1127, %v1488, %v1095
        %v1566 = vsel %vm1128, %v1492, %v1096
        %v1567 = vsel %vm1129, %v1496, %v1097
        %v1568 = vsel %vm1130, %v1500, %v1098
        %v1569 = vsel %vm1131, %v1488, %v1099
        %v1570 = vsel %vm1132, %v1492, %v1100
        %v1571 = vsel %vm1133, %v1496, %v1101
        %v1572 = vsel %vm1134, %v1500, %v1102
        %v1573 = vsel %vm1135, %v1504, %v1103
        %v1574 = vsel %vm1136, %v1508, %v1104
        %v1575 = vsel %vm1137, %v1512, %v1105
        %v1576 = vsel %vm1138, %v1516, %v1106
        %v1577 = vsel %vm1139, %v1504, %v1107
        %v1578 = vsel %vm1140, %v1508, %v1108
        %v1579 = vsel %vm1141, %v1512, %v1109
        %v1580 = vsel %vm1142, %v1516, %v1110
        %v1581 = vsel %vm1143, %v1520, %v1111
        %v1582 = vsel %vm1144, %v1524, %v1112
        %v1583 = vsel %vm1145, %v1528, %v1113
        %v1584 = vsel %vm1146, %v1532, %v1114
        %v1585 = vsel %vm1147, %v1520, %v1115
        %v1586 = vsel %vm1148, %v1524, %v1116
        %v1587 = vsel %vm1149, %v1528, %v1117
        %v1588 = vsel %vm1150, %v1532, %v1118
        %v1589 = vsel %vm1151, %v1536, %v1119
        %v1590 = vsel %vm1152, %v1540, %v1120
        %v1591 = vsel %vm1153, %v1544, %v1121
        %v1592 = vsel %vm1154, %v1548, %v1122
        %v1593 = vsel %vm1155, %v1536, %v1123
        %v1594 = vsel %vm1156, %v1540, %v1124
        %v1595 = vsel %vm1157, %v1544, %v1125
        %v1596 = vsel %vm1158, %v1548, %v1126
        %vm1597 = vcmp.eq.s32.totalorder %v625, 2
        %vm1598 = vcmp.eq.s32.totalorder %v626, 2
        %vm1599 = vcmp.eq.s32.totalorder %v627, 2
        %vm1600 = vcmp.eq.s32.totalorder %v628, 2
        %vm1601 = vcmp.eq.s32.totalorder %v629, 2
        %vm1602 = vcmp.eq.s32.totalorder %v630, 2
        %vm1603 = vcmp.eq.s32.totalorder %v631, 2
        %vm1604 = vcmp.eq.s32.totalorder %v632, 2
        %vm1605 = vcmp.eq.s32.totalorder %v633, 2
        %vm1606 = vcmp.eq.s32.totalorder %v634, 2
        %vm1607 = vcmp.eq.s32.totalorder %v635, 2
        %vm1608 = vcmp.eq.s32.totalorder %v636, 2
        %vm1609 = vcmp.eq.s32.totalorder %v637, 2
        %vm1610 = vcmp.eq.s32.totalorder %v638, 2
        %vm1611 = vcmp.eq.s32.totalorder %v639, 2
        %vm1612 = vcmp.eq.s32.totalorder %v640, 2
        %vm1613 = vcmp.eq.s32.totalorder %v641, 2
        %vm1614 = vcmp.eq.s32.totalorder %v642, 2
        %vm1615 = vcmp.eq.s32.totalorder %v643, 2
        %vm1616 = vcmp.eq.s32.totalorder %v644, 2
        %vm1617 = vcmp.eq.s32.totalorder %v645, 2
        %vm1618 = vcmp.eq.s32.totalorder %v646, 2
        %vm1619 = vcmp.eq.s32.totalorder %v647, 2
        %vm1620 = vcmp.eq.s32.totalorder %v648, 2
        %vm1621 = vcmp.eq.s32.totalorder %v649, 2
        %vm1622 = vcmp.eq.s32.totalorder %v650, 2
        %vm1623 = vcmp.eq.s32.totalorder %v651, 2
        %vm1624 = vcmp.eq.s32.totalorder %v652, 2
        %vm1625 = vcmp.eq.s32.totalorder %v653, 2
        %vm1626 = vcmp.eq.s32.totalorder %v654, 2
        %vm1627 = vcmp.eq.s32.totalorder %v655, 2
        %vm1628 = vcmp.eq.s32.totalorder %v656, 2
        %v1632 = vunpack.c.l.s4 1966171168
        %v1633 = vunpack.c.0.s8 %v1632
        %v1634 = vlaneseq
        %v1635 = vshrl.u32 %v1634, 7
        %v1636 = vsub.s32 %v1633, %v1635
        %v1637 = vrot.slane %v398, %v1636
        %v1639 = vunpack.c.l.s4 1966171168
        %v1640 = vunpack.c.0.s8 %v1639
        %v1641 = vlaneseq
        %v1642 = vshrl.u32 %v1641, 7
        %v1643 = vsub.s32 %v1640, %v1642
        %v1644 = vrot.slane %v399, %v1643
        %v1645 = vcombine.low %v1637, %v1644
        %v1646 = vcombine.high %v1637, %v1644
        %v1648 = vunpack.c.l.s4 1966171168
        %v1649 = vunpack.c.0.s8 %v1648
        %v1650 = vlaneseq
        %v1651 = vshrl.u32 %v1650, 7
        %v1652 = vsub.s32 %v1649, %v1651
        %v1653 = vrot.slane %v1645, %v1652
        %v1655 = vunpack.c.l.s4 1966171168
        %v1656 = vunpack.c.0.s8 %v1655
        %v1657 = vlaneseq
        %v1658 = vshrl.u32 %v1657, 7
        %v1659 = vsub.s32 %v1656, %v1658
        %v1660 = vrot.slane %v1646, %v1659
        %v1661 = vcombine.high %v1653, %v1653
        %v1662 = vcombine.high %v1660, %v1660
        %v1663 = vlaneseq
        %v1664 = vshrl.u32 %v1663, 7
        %v1665 = vsub.s32 0, %v1664
        %v1666 = vrot.slane %v1653, %v1665
        %v1667 = vlaneseq
        %v1668 = vshrl.u32 %v1667, 7
        %v1669 = vsub.s32 1, %v1668
        %v1670 = vrot.slane %v1653, %v1669
        %v1671 = vlaneseq
        %v1672 = vshrl.u32 %v1671, 7
        %v1673 = vsub.s32 2, %v1672
        %v1674 = vrot.slane %v1653, %v1673
        %v1675 = vlaneseq
        %v1676 = vshrl.u32 %v1675, 7
        %v1677 = vsub.s32 3, %v1676
        %v1678 = vrot.slane %v1653, %v1677
        %v1679 = vlaneseq
        %v1680 = vshrl.u32 %v1679, 7
        %v1681 = vsub.s32 0, %v1680
        %v1682 = vrot.slane %v1660, %v1681
        %v1683 = vlaneseq
        %v1684 = vshrl.u32 %v1683, 7
        %v1685 = vsub.s32 1, %v1684
        %v1686 = vrot.slane %v1660, %v1685
        %v1687 = vlaneseq
        %v1688 = vshrl.u32 %v1687, 7
        %v1689 = vsub.s32 2, %v1688
        %v1690 = vrot.slane %v1660, %v1689
        %v1691 = vlaneseq
        %v1692 = vshrl.u32 %v1691, 7
        %v1693 = vsub.s32 3, %v1692
        %v1694 = vrot.slane %v1660, %v1693
        %v1695 = vlaneseq
        %v1696 = vshrl.u32 %v1695, 7
        %v1697 = vsub.s32 0, %v1696
        %v1698 = vrot.slane %v1661, %v1697
        %v1699 = vlaneseq
        %v1700 = vshrl.u32 %v1699, 7
        %v1701 = vsub.s32 1, %v1700
        %v1702 = vrot.slane %v1661, %v1701
        %v1703 = vlaneseq
        %v1704 = vshrl.u32 %v1703, 7
        %v1705 = vsub.s32 2, %v1704
        %v1706 = vrot.slane %v1661, %v1705
        %v1707 = vlaneseq
        %v1708 = vshrl.u32 %v1707, 7
        %v1709 = vsub.s32 3, %v1708
        %v1710 = vrot.slane %v1661, %v1709
        %v1711 = vlaneseq
        %v1712 = vshrl.u32 %v1711, 7
        %v1713 = vsub.s32 0, %v1712
        %v1714 = vrot.slane %v1662, %v1713
        %v1715 = vlaneseq
        %v1716 = vshrl.u32 %v1715, 7
        %v1717 = vsub.s32 1, %v1716
        %v1718 = vrot.slane %v1662, %v1717
        %v1719 = vlaneseq
        %v1720 = vshrl.u32 %v1719, 7
        %v1721 = vsub.s32 2, %v1720
        %v1722 = vrot.slane %v1662, %v1721
        %v1723 = vlaneseq
        %v1724 = vshrl.u32 %v1723, 7
        %v1725 = vsub.s32 3, %v1724
        %v1726 = vrot.slane %v1662, %v1725
        %v1743 = vsel %vm1597, %v1666, %v1273
        %v1744 = vsel %vm1598, %v1670, %v1274
        %v1745 = vsel %vm1599, %v1674, %v1275
        %v1746 = vsel %vm1600, %v1678, %v1276
        %v1747 = vsel %vm1601, %v1666, %v1277
        %v1748 = vsel %vm1602, %v1670, %v1278
        %v1749 = vsel %vm1603, %v1674, %v1279
        %v1750 = vsel %vm1604, %v1678, %v1280
        %v1751 = vsel %vm1605, %v1682, %v1281
        %v1752 = vsel %vm1606, %v1686, %v1282
        %v1753 = vsel %vm1607, %v1690, %v1283
        %v1754 = vsel %vm1608, %v1694, %v1284
        %v1755 = vsel %vm1609, %v1682, %v1285
        %v1756 = vsel %vm1610, %v1686, %v1286
        %v1757 = vsel %vm1611, %v1690, %v1287
        %v1758 = vsel %vm1612, %v1694, %v1288
        %v1759 = vsel %vm1613, %v1698, %v1289
        %v1760 = vsel %vm1614, %v1702, %v1290
        %v1761 = vsel %vm1615, %v1706, %v1291
        %v1762 = vsel %vm1616, %v1710, %v1292
        %v1763 = vsel %vm1617, %v1698, %v1293
        %v1764 = vsel %vm1618, %v1702, %v1294
        %v1765 = vsel %vm1619, %v1706, %v1295
        %v1766 = vsel %vm1620, %v1710, %v1296
        %v1767 = vsel %vm1621, %v1714, %v1297
        %v1768 = vsel %vm1622, %v1718, %v1298
        %v1769 = vsel %vm1623, %v1722, %v1299
        %v1770 = vsel %vm1624, %v1726, %v1300
        %v1771 = vsel %vm1625, %v1714, %v1301
        %v1772 = vsel %vm1626, %v1718, %v1302
        %v1773 = vsel %vm1627, %v1722, %v1303
        %v1774 = vsel %vm1628, %v1726, %v1304
        %v1778 = vunpack.c.l.s4 1966171168
        %v1779 = vunpack.c.0.s8 %v1778
        %v1780 = vlaneseq
        %v1781 = vshrl.u32 %v1780, 7
        %v1782 = vsub.s32 %v1779, %v1781
        %v1783 = vrot.slane %v446, %v1782
        %v1785 = vunpack.c.l.s4 1966171168
        %v1786 = vunpack.c.0.s8 %v1785
        %v1787 = vlaneseq
        %v1788 = vshrl.u32 %v1787, 7
        %v1789 = vsub.s32 %v1786, %v1788
        %v1790 = vrot.slane %v447, %v1789
        %v1791 = vcombine.low %v1783, %v1790
        %v1792 = vcombine.high %v1783, %v1790
        %v1794 = vunpack.c.l.s4 1966171168
        %v1795 = vunpack.c.0.s8 %v1794
        %v1796 = vlaneseq
        %v1797 = vshrl.u32 %v1796, 7
        %v1798 = vsub.s32 %v1795, %v1797
        %v1799 = vrot.slane %v1791, %v1798
        %v1801 = vunpack.c.l.s4 1966171168
        %v1802 = vunpack.c.0.s8 %v1801
        %v1803 = vlaneseq
        %v1804 = vshrl.u32 %v1803, 7
        %v1805 = vsub.s32 %v1802, %v1804
        %v1806 = vrot.slane %v1792, %v1805
        %v1807 = vcombine.high %v1799, %v1799
        %v1808 = vcombine.high %v1806, %v1806
        %v1809 = vlaneseq
        %v1810 = vshrl.u32 %v1809, 7
        %v1811 = vsub.s32 0, %v1810
        %v1812 = vrot.slane %v1799, %v1811
        %v1813 = vlaneseq
        %v1814 = vshrl.u32 %v1813, 7
        %v1815 = vsub.s32 1, %v1814
        %v1816 = vrot.slane %v1799, %v1815
        %v1817 = vlaneseq
        %v1818 = vshrl.u32 %v1817, 7
        %v1819 = vsub.s32 2, %v1818
        %v1820 = vrot.slane %v1799, %v1819
        %v1821 = vlaneseq
        %v1822 = vshrl.u32 %v1821, 7
        %v1823 = vsub.s32 3, %v1822
        %v1824 = vrot.slane %v1799, %v1823
        %v1825 = vlaneseq
        %v1826 = vshrl.u32 %v1825, 7
        %v1827 = vsub.s32 0, %v1826
        %v1828 = vrot.slane %v1806, %v1827
        %v1829 = vlaneseq
        %v1830 = vshrl.u32 %v1829, 7
        %v1831 = vsub.s32 1, %v1830
        %v1832 = vrot.slane %v1806, %v1831
        %v1833 = vlaneseq
        %v1834 = vshrl.u32 %v1833, 7
        %v1835 = vsub.s32 2, %v1834
        %v1836 = vrot.slane %v1806, %v1835
        %v1837 = vlaneseq
        %v1838 = vshrl.u32 %v1837, 7
        %v1839 = vsub.s32 3, %v1838
        %v1840 = vrot.slane %v1806, %v1839
        %v1841 = vlaneseq
        %v1842 = vshrl.u32 %v1841, 7
        %v1843 = vsub.s32 0, %v1842
        %v1844 = vrot.slane %v1807, %v1843
        %v1845 = vlaneseq
        %v1846 = vshrl.u32 %v1845, 7
        %v1847 = vsub.s32 1, %v1846
        %v1848 = vrot.slane %v1807, %v1847
        %v1849 = vlaneseq
        %v1850 = vshrl.u32 %v1849, 7
        %v1851 = vsub.s32 2, %v1850
        %v1852 = vrot.slane %v1807, %v1851
        %v1853 = vlaneseq
        %v1854 = vshrl.u32 %v1853, 7
        %v1855 = vsub.s32 3, %v1854
        %v1856 = vrot.slane %v1807, %v1855
        %v1857 = vlaneseq
        %v1858 = vshrl.u32 %v1857, 7
        %v1859 = vsub.s32 0, %v1858
        %v1860 = vrot.slane %v1808, %v1859
        %v1861 = vlaneseq
        %v1862 = vshrl.u32 %v1861, 7
        %v1863 = vsub.s32 1, %v1862
        %v1864 = vrot.slane %v1808, %v1863
        %v1865 = vlaneseq
        %v1866 = vshrl.u32 %v1865, 7
        %v1867 = vsub.s32 2, %v1866
        %v1868 = vrot.slane %v1808, %v1867
        %v1869 = vlaneseq
        %v1870 = vshrl.u32 %v1869, 7
        %v1871 = vsub.s32 3, %v1870
        %v1872 = vrot.slane %v1808, %v1871
        %v1889 = vsel %vm1597, %v1812, %v1419
        %v1890 = vsel %vm1598, %v1816, %v1420
        %v1891 = vsel %vm1599, %v1820, %v1421
        %v1892 = vsel %vm1600, %v1824, %v1422
        %v1893 = vsel %vm1601, %v1812, %v1423
        %v1894 = vsel %vm1602, %v1816, %v1424
        %v1895 = vsel %vm1603, %v1820, %v1425
        %v1896 = vsel %vm1604, %v1824, %v1426
        %v1897 = vsel %vm1605, %v1828, %v1427
        %v1898 = vsel %vm1606, %v1832, %v1428
        %v1899 = vsel %vm1607, %v1836, %v1429
        %v1900 = vsel %vm1608, %v1840, %v1430
        %v1901 = vsel %vm1609, %v1828, %v1431
        %v1902 = vsel %vm1610, %v1832, %v1432
        %v1903 = vsel %vm1611, %v1836, %v1433
        %v1904 = vsel %vm1612, %v1840, %v1434
        %v1905 = vsel %vm1613, %v1844, %v1435
        %v1906 = vsel %vm1614, %v1848, %v1436
        %v1907 = vsel %vm1615, %v1852, %v1437
        %v1908 = vsel %vm1616, %v1856, %v1438
        %v1909 = vsel %vm1617, %v1844, %v1439
        %v1910 = vsel %vm1618, %v1848, %v1440
        %v1911 = vsel %vm1619, %v1852, %v1441
        %v1912 = vsel %vm1620, %v1856, %v1442
        %v1913 = vsel %vm1621, %v1860, %v1443
        %v1914 = vsel %vm1622, %v1864, %v1444
        %v1915 = vsel %vm1623, %v1868, %v1445
        %v1916 = vsel %vm1624, %v1872, %v1446
        %v1917 = vsel %vm1625, %v1860, %v1447
        %v1918 = vsel %vm1626, %v1864, %v1448
        %v1919 = vsel %vm1627, %v1868, %v1449
        %v1920 = vsel %vm1628, %v1872, %v1450
        %v1924 = vunpack.c.l.s4 1966171168
        %v1925 = vunpack.c.0.s8 %v1924
        %v1926 = vlaneseq
        %v1927 = vshrl.u32 %v1926, 7
        %v1928 = vsub.s32 %v1925, %v1927
        %v1929 = vrot.slane %v508, %v1928
        %v1931 = vunpack.c.l.s4 1966171168
        %v1932 = vunpack.c.0.s8 %v1931
        %v1933 = vlaneseq
        %v1934 = vshrl.u32 %v1933, 7
        %v1935 = vsub.s32 %v1932, %v1934
        %v1936 = vrot.slane %v509, %v1935
        %v1937 = vcombine.low %v1929, %v1936
        %v1938 = vcombine.high %v1929, %v1936
        %v1940 = vunpack.c.l.s4 1966171168
        %v1941 = vunpack.c.0.s8 %v1940
        %v1942 = vlaneseq
        %v1943 = vshrl.u32 %v1942, 7
        %v1944 = vsub.s32 %v1941, %v1943
        %v1945 = vrot.slane %v1937, %v1944
        %v1947 = vunpack.c.l.s4 1966171168
        %v1948 = vunpack.c.0.s8 %v1947
        %v1949 = vlaneseq
        %v1950 = vshrl.u32 %v1949, 7
        %v1951 = vsub.s32 %v1948, %v1950
        %v1952 = vrot.slane %v1938, %v1951
        %v1953 = vcombine.high %v1945, %v1945
        %v1954 = vcombine.high %v1952, %v1952
        %v1955 = vlaneseq
        %v1956 = vshrl.u32 %v1955, 7
        %v1957 = vsub.s32 0, %v1956
        %v1958 = vrot.slane %v1945, %v1957
        %v1959 = vlaneseq
        %v1960 = vshrl.u32 %v1959, 7
        %v1961 = vsub.s32 1, %v1960
        %v1962 = vrot.slane %v1945, %v1961
        %v1963 = vlaneseq
        %v1964 = vshrl.u32 %v1963, 7
        %v1965 = vsub.s32 2, %v1964
        %v1966 = vrot.slane %v1945, %v1965
        %v1967 = vlaneseq
        %v1968 = vshrl.u32 %v1967, 7
        %v1969 = vsub.s32 3, %v1968
        %v1970 = vrot.slane %v1945, %v1969
        %v1971 = vlaneseq
        %v1972 = vshrl.u32 %v1971, 7
        %v1973 = vsub.s32 0, %v1972
        %v1974 = vrot.slane %v1952, %v1973
        %v1975 = vlaneseq
        %v1976 = vshrl.u32 %v1975, 7
        %v1977 = vsub.s32 1, %v1976
        %v1978 = vrot.slane %v1952, %v1977
        %v1979 = vlaneseq
        %v1980 = vshrl.u32 %v1979, 7
        %v1981 = vsub.s32 2, %v1980
        %v1982 = vrot.slane %v1952, %v1981
        %v1983 = vlaneseq
        %v1984 = vshrl.u32 %v1983, 7
        %v1985 = vsub.s32 3, %v1984
        %v1986 = vrot.slane %v1952, %v1985
        %v1987 = vlaneseq
        %v1988 = vshrl.u32 %v1987, 7
        %v1989 = vsub.s32 0, %v1988
        %v1990 = vrot.slane %v1953, %v1989
        %v1991 = vlaneseq
        %v1992 = vshrl.u32 %v1991, 7
        %v1993 = vsub.s32 1, %v1992
        %v1994 = vrot.slane %v1953, %v1993
        %v1995 = vlaneseq
        %v1996 = vshrl.u32 %v1995, 7
        %v1997 = vsub.s32 2, %v1996
        %v1998 = vrot.slane %v1953, %v1997
        %v1999 = vlaneseq
        %v2000 = vshrl.u32 %v1999, 7
        %v2001 = vsub.s32 3, %v2000
        %v2002 = vrot.slane %v1953, %v2001
        %v2003 = vlaneseq
        %v2004 = vshrl.u32 %v2003, 7
        %v2005 = vsub.s32 0, %v2004
        %v2006 = vrot.slane %v1954, %v2005
        %v2007 = vlaneseq
        %v2008 = vshrl.u32 %v2007, 7
        %v2009 = vsub.s32 1, %v2008
        %v2010 = vrot.slane %v1954, %v2009
        %v2011 = vlaneseq
        %v2012 = vshrl.u32 %v2011, 7
        %v2013 = vsub.s32 2, %v2012
        %v2014 = vrot.slane %v1954, %v2013
        %v2015 = vlaneseq
        %v2016 = vshrl.u32 %v2015, 7
        %v2017 = vsub.s32 3, %v2016
        %v2018 = vrot.slane %v1954, %v2017
        %v2035 = vsel %vm1597, %v1958, %v1565
        %v2036 = vsel %vm1598, %v1962, %v1566
        %v2037 = vsel %vm1599, %v1966, %v1567
        %v2038 = vsel %vm1600, %v1970, %v1568
        %v2039 = vsel %vm1601, %v1958, %v1569
        %v2040 = vsel %vm1602, %v1962, %v1570
        %v2041 = vsel %vm1603, %v1966, %v1571
        %v2042 = vsel %vm1604, %v1970, %v1572
        %v2043 = vsel %vm1605, %v1974, %v1573
        %v2044 = vsel %vm1606, %v1978, %v1574
        %v2045 = vsel %vm1607, %v1982, %v1575
        %v2046 = vsel %vm1608, %v1986, %v1576
        %v2047 = vsel %vm1609, %v1974, %v1577
        %v2048 = vsel %vm1610, %v1978, %v1578
        %v2049 = vsel %vm1611, %v1982, %v1579
        %v2050 = vsel %vm1612, %v1986, %v1580
        %v2051 = vsel %vm1613, %v1990, %v1581
        %v2052 = vsel %vm1614, %v1994, %v1582
        %v2053 = vsel %vm1615, %v1998, %v1583
        %v2054 = vsel %vm1616, %v2002, %v1584
        %v2055 = vsel %vm1617, %v1990, %v1585
        %v2056 = vsel %vm1618, %v1994, %v1586
        %v2057 = vsel %vm1619, %v1998, %v1587
        %v2058 = vsel %vm1620, %v2002, %v1588
        %v2059 = vsel %vm1621, %v2006, %v1589
        %v2060 = vsel %vm1622, %v2010, %v1590
        %v2061 = vsel %vm1623, %v2014, %v1591
        %v2062 = vsel %vm1624, %v2018, %v1592
        %v2063 = vsel %vm1625, %v2006, %v1593
        %v2064 = vsel %vm1626, %v2010, %v1594
        %v2065 = vsel %vm1627, %v2014, %v1595
        %v2066 = vsel %vm1628, %v2018, %v1596
        %vm2067 = vcmp.eq.s32.totalorder %v625, 3
        %vm2068 = vcmp.eq.s32.totalorder %v626, 3
        %vm2069 = vcmp.eq.s32.totalorder %v627, 3
        %vm2070 = vcmp.eq.s32.totalorder %v628, 3
        %vm2071 = vcmp.eq.s32.totalorder %v629, 3
        %vm2072 = vcmp.eq.s32.totalorder %v630, 3
        %vm2073 = vcmp.eq.s32.totalorder %v631, 3
        %vm2074 = vcmp.eq.s32.totalorder %v632, 3
        %vm2075 = vcmp.eq.s32.totalorder %v633, 3
        %vm2076 = vcmp.eq.s32.totalorder %v634, 3
        %vm2077 = vcmp.eq.s32.totalorder %v635, 3
        %vm2078 = vcmp.eq.s32.totalorder %v636, 3
        %vm2079 = vcmp.eq.s32.totalorder %v637, 3
        %vm2080 = vcmp.eq.s32.totalorder %v638, 3
        %vm2081 = vcmp.eq.s32.totalorder %v639, 3
        %vm2082 = vcmp.eq.s32.totalorder %v640, 3
        %vm2083 = vcmp.eq.s32.totalorder %v641, 3
        %vm2084 = vcmp.eq.s32.totalorder %v642, 3
        %vm2085 = vcmp.eq.s32.totalorder %v643, 3
        %vm2086 = vcmp.eq.s32.totalorder %v644, 3
        %vm2087 = vcmp.eq.s32.totalorder %v645, 3
        %vm2088 = vcmp.eq.s32.totalorder %v646, 3
        %vm2089 = vcmp.eq.s32.totalorder %v647, 3
        %vm2090 = vcmp.eq.s32.totalorder %v648, 3
        %vm2091 = vcmp.eq.s32.totalorder %v649, 3
        %vm2092 = vcmp.eq.s32.totalorder %v650, 3
        %vm2093 = vcmp.eq.s32.totalorder %v651, 3
        %vm2094 = vcmp.eq.s32.totalorder %v652, 3
        %vm2095 = vcmp.eq.s32.totalorder %v653, 3
        %vm2096 = vcmp.eq.s32.totalorder %v654, 3
        %vm2097 = vcmp.eq.s32.totalorder %v655, 3
        %vm2098 = vcmp.eq.s32.totalorder %v656, 3
        %v2102 = vunpack.c.l.s4 1966171168
        %v2103 = vunpack.c.0.s8 %v2102
        %v2104 = vlaneseq
        %v2105 = vshrl.u32 %v2104, 7
        %v2106 = vsub.s32 %v2103, %v2105
        %v2107 = vrot.slane %v404, %v2106
        %v2109 = vunpack.c.l.s4 1966171168
        %v2110 = vunpack.c.0.s8 %v2109
        %v2111 = vlaneseq
        %v2112 = vshrl.u32 %v2111, 7
        %v2113 = vsub.s32 %v2110, %v2112
        %v2114 = vrot.slane %v405, %v2113
        %v2115 = vcombine.low %v2107, %v2114
        %v2116 = vcombine.high %v2107, %v2114
        %v2118 = vunpack.c.l.s4 1966171168
        %v2119 = vunpack.c.0.s8 %v2118
        %v2120 = vlaneseq
        %v2121 = vshrl.u32 %v2120, 7
        %v2122 = vsub.s32 %v2119, %v2121
        %v2123 = vrot.slane %v2115, %v2122
        %v2125 = vunpack.c.l.s4 1966171168
        %v2126 = vunpack.c.0.s8 %v2125
        %v2127 = vlaneseq
        %v2128 = vshrl.u32 %v2127, 7
        %v2129 = vsub.s32 %v2126, %v2128
        %v2130 = vrot.slane %v2116, %v2129
        %v2131 = vcombine.high %v2123, %v2123
        %v2132 = vcombine.high %v2130, %v2130
        %v2133 = vlaneseq
        %v2134 = vshrl.u32 %v2133, 7
        %v2135 = vsub.s32 0, %v2134
        %v2136 = vrot.slane %v2123, %v2135
        %v2137 = vlaneseq
        %v2138 = vshrl.u32 %v2137, 7
        %v2139 = vsub.s32 1, %v2138
        %v2140 = vrot.slane %v2123, %v2139
        %v2141 = vlaneseq
        %v2142 = vshrl.u32 %v2141, 7
        %v2143 = vsub.s32 2, %v2142
        %v2144 = vrot.slane %v2123, %v2143
        %v2145 = vlaneseq
        %v2146 = vshrl.u32 %v2145, 7
        %v2147 = vsub.s32 3, %v2146
        %v2148 = vrot.slane %v2123, %v2147
        %v2149 = vlaneseq
        %v2150 = vshrl.u32 %v2149, 7
        %v2151 = vsub.s32 0, %v2150
        %v2152 = vrot.slane %v2130, %v2151
        %v2153 = vlaneseq
        %v2154 = vshrl.u32 %v2153, 7
        %v2155 = vsub.s32 1, %v2154
        %v2156 = vrot.slane %v2130, %v2155
        %v2157 = vlaneseq
        %v2158 = vshrl.u32 %v2157, 7
        %v2159 = vsub.s32 2, %v2158
        %v2160 = vrot.slane %v2130, %v2159
        %v2161 = vlaneseq
        %v2162 = vshrl.u32 %v2161, 7
        %v2163 = vsub.s32 3, %v2162
        %v2164 = vrot.slane %v2130, %v2163
        %v2165 = vlaneseq
        %v2166 = vshrl.u32 %v2165, 7
        %v2167 = vsub.s32 0, %v2166
        %v2168 = vrot.slane %v2131, %v2167
        %v2169 = vlaneseq
        %v2170 = vshrl.u32 %v2169, 7
        %v2171 = vsub.s32 1, %v2170
        %v2172 = vrot.slane %v2131, %v2171
        %v2173 = vlaneseq
        %v2174 = vshrl.u32 %v2173, 7
        %v2175 = vsub.s32 2, %v2174
        %v2176 = vrot.slane %v2131, %v2175
        %v2177 = vlaneseq
        %v2178 = vshrl.u32 %v2177, 7
        %v2179 = vsub.s32 3, %v2178
        %v2180 = vrot.slane %v2131, %v2179
        %v2181 = vlaneseq
        %v2182 = vshrl.u32 %v2181, 7
        %v2183 = vsub.s32 0, %v2182
        %v2184 = vrot.slane %v2132, %v2183
        %v2185 = vlaneseq
        %v2186 = vshrl.u32 %v2185, 7
        %v2187 = vsub.s32 1, %v2186
        %v2188 = vrot.slane %v2132, %v2187
        %v2189 = vlaneseq
        %v2190 = vshrl.u32 %v2189, 7
        %v2191 = vsub.s32 2, %v2190
        %v2192 = vrot.slane %v2132, %v2191
        %v2193 = vlaneseq
        %v2194 = vshrl.u32 %v2193, 7
        %v2195 = vsub.s32 3, %v2194
        %v2196 = vrot.slane %v2132, %v2195
        %v2213 = vsel %vm2067, %v2136, %v1743
        %v2214 = vsel %vm2068, %v2140, %v1744
        %v2215 = vsel %vm2069, %v2144, %v1745
        %v2216 = vsel %vm2070, %v2148, %v1746
        %v2217 = vsel %vm2071, %v2136, %v1747
        %v2218 = vsel %vm2072, %v2140, %v1748
        %v2219 = vsel %vm2073, %v2144, %v1749
        %v2220 = vsel %vm2074, %v2148, %v1750
        %v2221 = vsel %vm2075, %v2152, %v1751
        %v2222 = vsel %vm2076, %v2156, %v1752
        %v2223 = vsel %vm2077, %v2160, %v1753
        %v2224 = vsel %vm2078, %v2164, %v1754
        %v2225 = vsel %vm2079, %v2152, %v1755
        %v2226 = vsel %vm2080, %v2156, %v1756
        %v2227 = vsel %vm2081, %v2160, %v1757
        %v2228 = vsel %vm2082, %v2164, %v1758
        %v2229 = vsel %vm2083, %v2168, %v1759
        %v2230 = vsel %vm2084, %v2172, %v1760
        %v2231 = vsel %vm2085, %v2176, %v1761
        %v2232 = vsel %vm2086, %v2180, %v1762
        %v2233 = vsel %vm2087, %v2168, %v1763
        %v2234 = vsel %vm2088, %v2172, %v1764
        %v2235 = vsel %vm2089, %v2176, %v1765
        %v2236 = vsel %vm2090, %v2180, %v1766
        %v2237 = vsel %vm2091, %v2184, %v1767
        %v2238 = vsel %vm2092, %v2188, %v1768
        %v2239 = vsel %vm2093, %v2192, %v1769
        %v2240 = vsel %vm2094, %v2196, %v1770
        %v2241 = vsel %vm2095, %v2184, %v1771
        %v2242 = vsel %vm2096, %v2188, %v1772
        %v2243 = vsel %vm2097, %v2192, %v1773
        %v2244 = vsel %vm2098, %v2196, %v1774
        %v2248 = vunpack.c.l.s4 1966171168
        %v2249 = vunpack.c.0.s8 %v2248
        %v2250 = vlaneseq
        %v2251 = vshrl.u32 %v2250, 7
        %v2252 = vsub.s32 %v2249, %v2251
        %v2253 = vrot.slane %v460, %v2252
        %v2255 = vunpack.c.l.s4 1966171168
        %v2256 = vunpack.c.0.s8 %v2255
        %v2257 = vlaneseq
        %v2258 = vshrl.u32 %v2257, 7
        %v2259 = vsub.s32 %v2256, %v2258
        %v2260 = vrot.slane %v461, %v2259
        %v2261 = vcombine.low %v2253, %v2260
        %v2262 = vcombine.high %v2253, %v2260
        %v2264 = vunpack.c.l.s4 1966171168
        %v2265 = vunpack.c.0.s8 %v2264
        %v2266 = vlaneseq
        %v2267 = vshrl.u32 %v2266, 7
        %v2268 = vsub.s32 %v2265, %v2267
        %v2269 = vrot.slane %v2261, %v2268
        %v2271 = vunpack.c.l.s4 1966171168
        %v2272 = vunpack.c.0.s8 %v2271
        %v2273 = vlaneseq
        %v2274 = vshrl.u32 %v2273, 7
        %v2275 = vsub.s32 %v2272, %v2274
        %v2276 = vrot.slane %v2262, %v2275
        %v2277 = vcombine.high %v2269, %v2269
        %v2278 = vcombine.high %v2276, %v2276
        %v2279 = vlaneseq
        %v2280 = vshrl.u32 %v2279, 7
        %v2281 = vsub.s32 0, %v2280
        %v2282 = vrot.slane %v2269, %v2281
        %v2283 = vlaneseq
        %v2284 = vshrl.u32 %v2283, 7
        %v2285 = vsub.s32 1, %v2284
        %v2286 = vrot.slane %v2269, %v2285
        %v2287 = vlaneseq
        %v2288 = vshrl.u32 %v2287, 7
        %v2289 = vsub.s32 2, %v2288
        %v2290 = vrot.slane %v2269, %v2289
        %v2291 = vlaneseq
        %v2292 = vshrl.u32 %v2291, 7
        %v2293 = vsub.s32 3, %v2292
        %v2294 = vrot.slane %v2269, %v2293
        %v2295 = vlaneseq
        %v2296 = vshrl.u32 %v2295, 7
        %v2297 = vsub.s32 0, %v2296
        %v2298 = vrot.slane %v2276, %v2297
        %v2299 = vlaneseq
        %v2300 = vshrl.u32 %v2299, 7
        %v2301 = vsub.s32 1, %v2300
        %v2302 = vrot.slane %v2276, %v2301
        %v2303 = vlaneseq
        %v2304 = vshrl.u32 %v2303, 7
        %v2305 = vsub.s32 2, %v2304
        %v2306 = vrot.slane %v2276, %v2305
        %v2307 = vlaneseq
        %v2308 = vshrl.u32 %v2307, 7
        %v2309 = vsub.s32 3, %v2308
        %v2310 = vrot.slane %v2276, %v2309
        %v2311 = vlaneseq
        %v2312 = vshrl.u32 %v2311, 7
        %v2313 = vsub.s32 0, %v2312
        %v2314 = vrot.slane %v2277, %v2313
        %v2315 = vlaneseq
        %v2316 = vshrl.u32 %v2315, 7
        %v2317 = vsub.s32 1, %v2316
        %v2318 = vrot.slane %v2277, %v2317
        %v2319 = vlaneseq
        %v2320 = vshrl.u32 %v2319, 7
        %v2321 = vsub.s32 2, %v2320
        %v2322 = vrot.slane %v2277, %v2321
        %v2323 = vlaneseq
        %v2324 = vshrl.u32 %v2323, 7
        %v2325 = vsub.s32 3, %v2324
        %v2326 = vrot.slane %v2277, %v2325
        %v2327 = vlaneseq
        %v2328 = vshrl.u32 %v2327, 7
        %v2329 = vsub.s32 0, %v2328
        %v2330 = vrot.slane %v2278, %v2329
        %v2331 = vlaneseq
        %v2332 = vshrl.u32 %v2331, 7
        %v2333 = vsub.s32 1, %v2332
        %v2334 = vrot.slane %v2278, %v2333
        %v2335 = vlaneseq
        %v2336 = vshrl.u32 %v2335, 7
        %v2337 = vsub.s32 2, %v2336
        %v2338 = vrot.slane %v2278, %v2337
        %v2339 = vlaneseq
        %v2340 = vshrl.u32 %v2339, 7
        %v2341 = vsub.s32 3, %v2340
        %v2342 = vrot.slane %v2278, %v2341
        %v2359 = vsel %vm2067, %v2282, %v1889
        %v2360 = vsel %vm2068, %v2286, %v1890
        %v2361 = vsel %vm2069, %v2290, %v1891
        %v2362 = vsel %vm2070, %v2294, %v1892
        %v2363 = vsel %vm2071, %v2282, %v1893
        %v2364 = vsel %vm2072, %v2286, %v1894
        %v2365 = vsel %vm2073, %v2290, %v1895
        %v2366 = vsel %vm2074, %v2294, %v1896
        %v2367 = vsel %vm2075, %v2298, %v1897
        %v2368 = vsel %vm2076, %v2302, %v1898
        %v2369 = vsel %vm2077, %v2306, %v1899
        %v2370 = vsel %vm2078, %v2310, %v1900
        %v2371 = vsel %vm2079, %v2298, %v1901
        %v2372 = vsel %vm2080, %v2302, %v1902
        %v2373 = vsel %vm2081, %v2306, %v1903
        %v2374 = vsel %vm2082, %v2310, %v1904
        %v2375 = vsel %vm2083, %v2314, %v1905
        %v2376 = vsel %vm2084, %v2318, %v1906
        %v2377 = vsel %vm2085, %v2322, %v1907
        %v2378 = vsel %vm2086, %v2326, %v1908
        %v2379 = vsel %vm2087, %v2314, %v1909
        %v2380 = vsel %vm2088, %v2318, %v1910
        %v2381 = vsel %vm2089, %v2322, %v1911
        %v2382 = vsel %vm2090, %v2326, %v1912
        %v2383 = vsel %vm2091, %v2330, %v1913
        %v2384 = vsel %vm2092, %v2334, %v1914
        %v2385 = vsel %vm2093, %v2338, %v1915
        %v2386 = vsel %vm2094, %v2342, %v1916
        %v2387 = vsel %vm2095, %v2330, %v1917
        %v2388 = vsel %vm2096, %v2334, %v1918
        %v2389 = vsel %vm2097, %v2338, %v1919
        %v2390 = vsel %vm2098, %v2342, %v1920
        %v2394 = vunpack.c.l.s4 1966171168
        %v2395 = vunpack.c.0.s8 %v2394
        %v2396 = vlaneseq
        %v2397 = vshrl.u32 %v2396, 7
        %v2398 = vsub.s32 %v2395, %v2397
        %v2399 = vrot.slane %v524, %v2398
        %v2401 = vunpack.c.l.s4 1966171168
        %v2402 = vunpack.c.0.s8 %v2401
        %v2403 = vlaneseq
        %v2404 = vshrl.u32 %v2403, 7
        %v2405 = vsub.s32 %v2402, %v2404
        %v2406 = vrot.slane %v525, %v2405
        %v2407 = vcombine.low %v2399, %v2406
        %v2408 = vcombine.high %v2399, %v2406
        %v2410 = vunpack.c.l.s4 1966171168
        %v2411 = vunpack.c.0.s8 %v2410
        %v2412 = vlaneseq
        %v2413 = vshrl.u32 %v2412, 7
        %v2414 = vsub.s32 %v2411, %v2413
        %v2415 = vrot.slane %v2407, %v2414
        %v2417 = vunpack.c.l.s4 1966171168
        %v2418 = vunpack.c.0.s8 %v2417
        %v2419 = vlaneseq
        %v2420 = vshrl.u32 %v2419, 7
        %v2421 = vsub.s32 %v2418, %v2420
        %v2422 = vrot.slane %v2408, %v2421
        %v2423 = vcombine.high %v2415, %v2415
        %v2424 = vcombine.high %v2422, %v2422
        %v2425 = vlaneseq
        %v2426 = vshrl.u32 %v2425, 7
        %v2427 = vsub.s32 0, %v2426
        %v2428 = vrot.slane %v2415, %v2427
        %v2429 = vlaneseq
        %v2430 = vshrl.u32 %v2429, 7
        %v2431 = vsub.s32 1, %v2430
        %v2432 = vrot.slane %v2415, %v2431
        %v2433 = vlaneseq
        %v2434 = vshrl.u32 %v2433, 7
        %v2435 = vsub.s32 2, %v2434
        %v2436 = vrot.slane %v2415, %v2435
        %v2437 = vlaneseq
        %v2438 = vshrl.u32 %v2437, 7
        %v2439 = vsub.s32 3, %v2438
        %v2440 = vrot.slane %v2415, %v2439
        %v2441 = vlaneseq
        %v2442 = vshrl.u32 %v2441, 7
        %v2443 = vsub.s32 0, %v2442
        %v2444 = vrot.slane %v2422, %v2443
        %v2445 = vlaneseq
        %v2446 = vshrl.u32 %v2445, 7
        %v2447 = vsub.s32 1, %v2446
        %v2448 = vrot.slane %v2422, %v2447
        %v2449 = vlaneseq
        %v2450 = vshrl.u32 %v2449, 7
        %v2451 = vsub.s32 2, %v2450
        %v2452 = vrot.slane %v2422, %v2451
        %v2453 = vlaneseq
        %v2454 = vshrl.u32 %v2453, 7
        %v2455 = vsub.s32 3, %v2454
        %v2456 = vrot.slane %v2422, %v2455
        %v2457 = vlaneseq
        %v2458 = vshrl.u32 %v2457, 7
        %v2459 = vsub.s32 0, %v2458
        %v2460 = vrot.slane %v2423, %v2459
        %v2461 = vlaneseq
        %v2462 = vshrl.u32 %v2461, 7
        %v2463 = vsub.s32 1, %v2462
        %v2464 = vrot.slane %v2423, %v2463
        %v2465 = vlaneseq
        %v2466 = vshrl.u32 %v2465, 7
        %v2467 = vsub.s32 2, %v2466
        %v2468 = vrot.slane %v2423, %v2467
        %v2469 = vlaneseq
        %v2470 = vshrl.u32 %v2469, 7
        %v2471 = vsub.s32 3, %v2470
        %v2472 = vrot.slane %v2423, %v2471
        %v2473 = vlaneseq
        %v2474 = vshrl.u32 %v2473, 7
        %v2475 = vsub.s32 0, %v2474
        %v2476 = vrot.slane %v2424, %v2475
        %v2477 = vlaneseq
        %v2478 = vshrl.u32 %v2477, 7
        %v2479 = vsub.s32 1, %v2478
        %v2480 = vrot.slane %v2424, %v2479
        %v2481 = vlaneseq
        %v2482 = vshrl.u32 %v2481, 7
        %v2483 = vsub.s32 2, %v2482
        %v2484 = vrot.slane %v2424, %v2483
        %v2485 = vlaneseq
        %v2486 = vshrl.u32 %v2485, 7
        %v2487 = vsub.s32 3, %v2486
        %v2488 = vrot.slane %v2424, %v2487
        %v2505 = vsel %vm2067, %v2428, %v2035
        %v2506 = vsel %vm2068, %v2432, %v2036
        %v2507 = vsel %vm2069, %v2436, %v2037
        %v2508 = vsel %vm2070, %v2440, %v2038
        %v2509 = vsel %vm2071, %v2428, %v2039
        %v2510 = vsel %vm2072, %v2432, %v2040
        %v2511 = vsel %vm2073, %v2436, %v2041
        %v2512 = vsel %vm2074, %v2440, %v2042
        %v2513 = vsel %vm2075, %v2444, %v2043
        %v2514 = vsel %vm2076, %v2448, %v2044
        %v2515 = vsel %vm2077, %v2452, %v2045
        %v2516 = vsel %vm2078, %v2456, %v2046
        %v2517 = vsel %vm2079, %v2444, %v2047
        %v2518 = vsel %vm2080, %v2448, %v2048
        %v2519 = vsel %vm2081, %v2452, %v2049
        %v2520 = vsel %vm2082, %v2456, %v2050
        %v2521 = vsel %vm2083, %v2460, %v2051
        %v2522 = vsel %vm2084, %v2464, %v2052
        %v2523 = vsel %vm2085, %v2468, %v2053
        %v2524 = vsel %vm2086, %v2472, %v2054
        %v2525 = vsel %vm2087, %v2460, %v2055
        %v2526 = vsel %vm2088, %v2464, %v2056
        %v2527 = vsel %vm2089, %v2468, %v2057
        %v2528 = vsel %vm2090, %v2472, %v2058
        %v2529 = vsel %vm2091, %v2476, %v2059
        %v2530 = vsel %vm2092, %v2480, %v2060
        %v2531 = vsel %vm2093, %v2484, %v2061
        %v2532 = vsel %vm2094, %v2488, %v2062
        %v2533 = vsel %vm2095, %v2476, %v2063
        %v2534 = vsel %vm2096, %v2480, %v2064
        %v2535 = vsel %vm2097, %v2484, %v2065
        %v2536 = vsel %vm2098, %v2488, %v2066
        %2537 = vst [vmem:[%s310] sm:$0xff] %v2213
        %2538 = vst [vmem:[%s310 + $0x8] sm:$0xff] %v2214
        %2539 = vst [vmem:[%s310 + $0x10] sm:$0xff] %v2215
        %2540 = vst [vmem:[%s310 + $0x18] sm:$0xff] %v2216
        %2541 = vst [vmem:[%s310 + $0x20] sm:$0x1f] %v2217
        %2542 = vst [vmem:[%s310 + $0x28] sm:$0x1f] %v2218
        %2543 = vst [vmem:[%s310 + $0x30] sm:$0x1f] %v2219
        %2544 = vst [vmem:[%s310 + $0x38] sm:$0x1f] %v2220
        %2545 = vst [vmem:[%s310 + $0x40] sm:$0xff] %v2221
        %2546 = vst [vmem:[%s310 + $0x48] sm:$0xff] %v2222
        %2547 = vst [vmem:[%s310 + $0x50] sm:$0xff] %v2223
        %2548 = vst [vmem:[%s310 + $0x58] sm:$0xff] %v2224
        %2549 = vst [vmem:[%s310 + $0x60] sm:$0x1f] %v2225
        %2550 = vst [vmem:[%s310 + $0x68] sm:$0x1f] %v2226
        %2551 = vst [vmem:[%s310 + $0x70] sm:$0x1f] %v2227
        %2552 = vst [vmem:[%s310 + $0x78] sm:$0x1f] %v2228
        %2553 = vst [vmem:[%s310 + $0x80] sm:$0xff] %v2229
        %2554 = vst [vmem:[%s310 + $0x88] sm:$0xff] %v2230
        %2555 = vst [vmem:[%s310 + $0x90] sm:$0xff] %v2231
        %2556 = vst [vmem:[%s310 + $0x98] sm:$0xff] %v2232
        %2557 = vst [vmem:[%s310 + $0xa0] sm:$0x1f] %v2233
        %2558 = vst [vmem:[%s310 + $0xa8] sm:$0x1f] %v2234
        %2559 = vst [vmem:[%s310 + $0xb0] sm:$0x1f] %v2235
        %2560 = vst [vmem:[%s310 + $0xb8] sm:$0x1f] %v2236
        %2561 = vst [vmem:[%s310 + $0xc0] sm:$0xff] %v2237
        %2562 = vst [vmem:[%s310 + $0xc8] sm:$0xff] %v2238
        %2563 = vst [vmem:[%s310 + $0xd0] sm:$0xff] %v2239
        %2564 = vst [vmem:[%s310 + $0xd8] sm:$0xff] %v2240
        %2565 = vst [vmem:[%s310 + $0xe0] sm:$0x1f] %v2241
        %2566 = vst [vmem:[%s310 + $0xe8] sm:$0x1f] %v2242
        %2567 = vst [vmem:[%s310 + $0xf0] sm:$0x1f] %v2243
        %2568 = vst [vmem:[%s310 + $0xf8] sm:$0x1f] %v2244
        %2569 = vst [vmem:[%s316] sm:$0xff] %v2359
        %2570 = vst [vmem:[%s316 + $0x8] sm:$0xff] %v2360
        %2571 = vst [vmem:[%s316 + $0x10] sm:$0xff] %v2361
        %2572 = vst [vmem:[%s316 + $0x18] sm:$0xff] %v2362
        %2573 = vst [vmem:[%s316 + $0x20] sm:$0x1f] %v2363
        %2574 = vst [vmem:[%s316 + $0x28] sm:$0x1f] %v2364
        %2575 = vst [vmem:[%s316 + $0x30] sm:$0x1f] %v2365
        %2576 = vst [vmem:[%s316 + $0x38] sm:$0x1f] %v2366
        %2577 = vst [vmem:[%s316 + $0x40] sm:$0xff] %v2367
        %2578 = vst [vmem:[%s316 + $0x48] sm:$0xff] %v2368
        %2579 = vst [vmem:[%s316 + $0x50] sm:$0xff] %v2369
        %2580 = vst [vmem:[%s316 + $0x58] sm:$0xff] %v2370
        %2581 = vst [vmem:[%s316 + $0x60] sm:$0x1f] %v2371
        %2582 = vst [vmem:[%s316 + $0x68] sm:$0x1f] %v2372
        %2583 = vst [vmem:[%s316 + $0x70] sm:$0x1f] %v2373
        %2584 = vst [vmem:[%s316 + $0x78] sm:$0x1f] %v2374
        %2585 = vst [vmem:[%s316 + $0x80] sm:$0xff] %v2375
        %2586 = vst [vmem:[%s316 + $0x88] sm:$0xff] %v2376
        %2587 = vst [vmem:[%s316 + $0x90] sm:$0xff] %v2377
        %2588 = vst [vmem:[%s316 + $0x98] sm:$0xff] %v2378
        %2589 = vst [vmem:[%s316 + $0xa0] sm:$0x1f] %v2379
        %2590 = vst [vmem:[%s316 + $0xa8] sm:$0x1f] %v2380
        %2591 = vst [vmem:[%s316 + $0xb0] sm:$0x1f] %v2381
        %2592 = vst [vmem:[%s316 + $0xb8] sm:$0x1f] %v2382
        %2593 = vst [vmem:[%s316 + $0xc0] sm:$0xff] %v2383
        %2594 = vst [vmem:[%s316 + $0xc8] sm:$0xff] %v2384
        %2595 = vst [vmem:[%s316 + $0xd0] sm:$0xff] %v2385
        %2596 = vst [vmem:[%s316 + $0xd8] sm:$0xff] %v2386
        %2597 = vst [vmem:[%s316 + $0xe0] sm:$0x1f] %v2387
        %2598 = vst [vmem:[%s316 + $0xe8] sm:$0x1f] %v2388
        %2599 = vst [vmem:[%s316 + $0xf0] sm:$0x1f] %v2389
        %2600 = vst [vmem:[%s316 + $0xf8] sm:$0x1f] %v2390
        %2601 = vst [vmem:[%s322] sm:$0xff] %v2505
        %2602 = vst [vmem:[%s322 + $0x8] sm:$0xff] %v2506
        %2603 = vst [vmem:[%s322 + $0x10] sm:$0xff] %v2507
        %2604 = vst [vmem:[%s322 + $0x18] sm:$0xff] %v2508
        %2605 = vst [vmem:[%s322 + $0x20] sm:$0x1f] %v2509
        %2606 = vst [vmem:[%s322 + $0x28] sm:$0x1f] %v2510
        %2607 = vst [vmem:[%s322 + $0x30] sm:$0x1f] %v2511
        %2608 = vst [vmem:[%s322 + $0x38] sm:$0x1f] %v2512
        %2609 = vst [vmem:[%s322 + $0x40] sm:$0xff] %v2513
        %2610 = vst [vmem:[%s322 + $0x48] sm:$0xff] %v2514
        %2611 = vst [vmem:[%s322 + $0x50] sm:$0xff] %v2515
        %2612 = vst [vmem:[%s322 + $0x58] sm:$0xff] %v2516
        %2613 = vst [vmem:[%s322 + $0x60] sm:$0x1f] %v2517
        %2614 = vst [vmem:[%s322 + $0x68] sm:$0x1f] %v2518
        %2615 = vst [vmem:[%s322 + $0x70] sm:$0x1f] %v2519
        %2616 = vst [vmem:[%s322 + $0x78] sm:$0x1f] %v2520
        %2617 = vst [vmem:[%s322 + $0x80] sm:$0xff] %v2521
        %2618 = vst [vmem:[%s322 + $0x88] sm:$0xff] %v2522
        %2619 = vst [vmem:[%s322 + $0x90] sm:$0xff] %v2523
        %2620 = vst [vmem:[%s322 + $0x98] sm:$0xff] %v2524
        %2621 = vst [vmem:[%s322 + $0xa0] sm:$0x1f] %v2525
        %2622 = vst [vmem:[%s322 + $0xa8] sm:$0x1f] %v2526
        %2623 = vst [vmem:[%s322 + $0xb0] sm:$0x1f] %v2527
        %2624 = vst [vmem:[%s322 + $0xb8] sm:$0x1f] %v2528
        %2625 = vst [vmem:[%s322 + $0xc0] sm:$0xff] %v2529
        %2626 = vst [vmem:[%s322 + $0xc8] sm:$0xff] %v2530
        %2627 = vst [vmem:[%s322 + $0xd0] sm:$0xff] %v2531
        %2628 = vst [vmem:[%s322 + $0xd8] sm:$0xff] %v2532
        %2629 = vst [vmem:[%s322 + $0xe0] sm:$0x1f] %v2533
        %2630 = vst [vmem:[%s322 + $0xe8] sm:$0x1f] %v2534
        %2631 = vst [vmem:[%s322 + $0xf0] sm:$0x1f] %v2535
        %2632 = vst [vmem:[%s322 + $0xf8] sm:$0x1f] %v2536
        %v2633 = vld [vmem:[#allocation5] sm:$0xf]
        %v2634 = vlaneseq
        %v2635 = vshrl.u32 %v2634, 7
        %v2636 = vsub.s32 0, %v2635
        %v2637 = vrot.slane %v2633, %v2636
        %2639 = vbcast.lane.b32.xlu0 %v2637, 256
        %v2640 = vpop.permute.xlu0 %2639
        %s2642 = sor.u32 256, 8
        %2643 = vbcast.lane.b32.xlu0 %v2637, %s2642
        %v2644 = vpop.permute.xlu0 %2643
        %v2645 = vlaneseq
        %v2646 = vshrl.u32 %v2645, 7
        %v2647 = vsub.s32 1, %v2646
        %v2648 = vrot.slane %v2633, %v2647
        %2650 = vbcast.lane.b32.xlu0 %v2648, 256
        %v2651 = vpop.permute.xlu0 %2650
        %s2653 = sor.u32 256, 8
        %2654 = vbcast.lane.b32.xlu0 %v2648, %s2653
        %v2655 = vpop.permute.xlu0 %2654
        %v2656 = vlaneseq
        %v2657 = vshrl.u32 %v2656, 7
        %v2658 = vsub.s32 2, %v2657
        %v2659 = vrot.slane %v2633, %v2658
        %2661 = vbcast.lane.b32.xlu0 %v2659, 256
        %v2662 = vpop.permute.xlu0 %2661
        %s2664 = sor.u32 256, 8
        %2665 = vbcast.lane.b32.xlu0 %v2659, %s2664
        %v2666 = vpop.permute.xlu0 %2665
        %v2667 = vlaneseq
        %v2668 = vshrl.u32 %v2667, 7
        %v2669 = vsub.s32 3, %v2668
        %v2670 = vrot.slane %v2633, %v2669
        %2672 = vbcast.lane.b32.xlu0 %v2670, 256
        %v2673 = vpop.permute.xlu0 %2672
        %s2675 = sor.u32 256, 8
        %2676 = vbcast.lane.b32.xlu0 %v2670, %s2675
        %v2677 = vpop.permute.xlu0 %2676
        %v2678 = vmul.f32 %v2213, %v2640
        %v2679 = vmul.f32 %v2214, %v2640
        %v2680 = vmul.f32 %v2215, %v2640
        %v2681 = vmul.f32 %v2216, %v2640
        %v2682 = vmul.f32 %v2217, %v2644
        %v2683 = vmul.f32 %v2218, %v2644
        %v2684 = vmul.f32 %v2219, %v2644
        %v2685 = vmul.f32 %v2220, %v2644
        %v2686 = vmul.f32 %v2221, %v2651
        %v2687 = vmul.f32 %v2222, %v2651
        %v2688 = vmul.f32 %v2223, %v2651
        %v2689 = vmul.f32 %v2224, %v2651
        %v2690 = vmul.f32 %v2225, %v2655
        %v2691 = vmul.f32 %v2226, %v2655
        %v2692 = vmul.f32 %v2227, %v2655
        %v2693 = vmul.f32 %v2228, %v2655
        %v2694 = vmul.f32 %v2229, %v2662
        %v2695 = vmul.f32 %v2230, %v2662
        %v2696 = vmul.f32 %v2231, %v2662
        %v2697 = vmul.f32 %v2232, %v2662
        %v2698 = vmul.f32 %v2233, %v2666
        %v2699 = vmul.f32 %v2234, %v2666
        %v2700 = vmul.f32 %v2235, %v2666
        %v2701 = vmul.f32 %v2236, %v2666
        %v2702 = vmul.f32 %v2237, %v2673
        %v2703 = vmul.f32 %v2238, %v2673
        %v2704 = vmul.f32 %v2239, %v2673
        %v2705 = vmul.f32 %v2240, %v2673
        %v2706 = vmul.f32 %v2241, %v2677
        %v2707 = vmul.f32 %v2242, %v2677
        %v2708 = vmul.f32 %v2243, %v2677
        %v2709 = vmul.f32 %v2244, %v2677
        %vm2710 = vcmask 1044480
        %v2711 = vsel %vm2710, %v2682, 0.0
        %v2712 = vadd.f32 %v2678, %v2711
        %v2713 = vrot.slane %v2712, 4
        %v2714 = vadd.f32 %v2712, %v2713
        %v2715 = vrot.slane %v2714, 2
        %v2716 = vadd.f32 %v2714, %v2715
        %v2717 = vrot.slane %v2716, 1
        %v2718 = vadd.f32 %v2716, %v2717
        %v2719 = vsel %vm2710, %v2683, 0.0
        %v2720 = vadd.f32 %v2679, %v2719
        %v2721 = vrot.slane %v2720, 4
        %v2722 = vadd.f32 %v2720, %v2721
        %v2723 = vrot.slane %v2722, 2
        %v2724 = vadd.f32 %v2722, %v2723
        %v2725 = vrot.slane %v2724, 1
        %v2726 = vadd.f32 %v2724, %v2725
        %v2727 = vsel %vm2710, %v2684, 0.0
        %v2728 = vadd.f32 %v2680, %v2727
        %v2729 = vrot.slane %v2728, 4
        %v2730 = vadd.f32 %v2728, %v2729
        %v2731 = vrot.slane %v2730, 2
        %v2732 = vadd.f32 %v2730, %v2731
        %v2733 = vrot.slane %v2732, 1
        %v2734 = vadd.f32 %v2732, %v2733
        %v2735 = vsel %vm2710, %v2685, 0.0
        %v2736 = vadd.f32 %v2681, %v2735
        %v2737 = vrot.slane %v2736, 4
        %v2738 = vadd.f32 %v2736, %v2737
        %v2739 = vrot.slane %v2738, 2
        %v2740 = vadd.f32 %v2738, %v2739
        %v2741 = vrot.slane %v2740, 1
        %v2742 = vadd.f32 %v2740, %v2741
        %v2743 = vsel %vm2710, %v2690, 0.0
        %v2744 = vadd.f32 %v2686, %v2743
        %v2745 = vrot.slane %v2744, 4
        %v2746 = vadd.f32 %v2744, %v2745
        %v2747 = vrot.slane %v2746, 2
        %v2748 = vadd.f32 %v2746, %v2747
        %v2749 = vrot.slane %v2748, 1
        %v2750 = vadd.f32 %v2748, %v2749
        %v2751 = vsel %vm2710, %v2691, 0.0
        %v2752 = vadd.f32 %v2687, %v2751
        %v2753 = vrot.slane %v2752, 4
        %v2754 = vadd.f32 %v2752, %v2753
        %v2755 = vrot.slane %v2754, 2
        %v2756 = vadd.f32 %v2754, %v2755
        %v2757 = vrot.slane %v2756, 1
        %v2758 = vadd.f32 %v2756, %v2757
        %v2759 = vsel %vm2710, %v2692, 0.0
        %v2760 = vadd.f32 %v2688, %v2759
        %v2761 = vrot.slane %v2760, 4
        %v2762 = vadd.f32 %v2760, %v2761
        %v2763 = vrot.slane %v2762, 2
        %v2764 = vadd.f32 %v2762, %v2763
        %v2765 = vrot.slane %v2764, 1
        %v2766 = vadd.f32 %v2764, %v2765
        %v2767 = vsel %vm2710, %v2693, 0.0
        %v2768 = vadd.f32 %v2689, %v2767
        %v2769 = vrot.slane %v2768, 4
        %v2770 = vadd.f32 %v2768, %v2769
        %v2771 = vrot.slane %v2770, 2
        %v2772 = vadd.f32 %v2770, %v2771
        %v2773 = vrot.slane %v2772, 1
        %v2774 = vadd.f32 %v2772, %v2773
        %v2775 = vsel %vm2710, %v2698, 0.0
        %v2776 = vadd.f32 %v2694, %v2775
        %v2777 = vrot.slane %v2776, 4
        %v2778 = vadd.f32 %v2776, %v2777
        %v2779 = vrot.slane %v2778, 2
        %v2780 = vadd.f32 %v2778, %v2779
        %v2781 = vrot.slane %v2780, 1
        %v2782 = vadd.f32 %v2780, %v2781
        %v2783 = vsel %vm2710, %v2699, 0.0
        %v2784 = vadd.f32 %v2695, %v2783
        %v2785 = vrot.slane %v2784, 4
        %v2786 = vadd.f32 %v2784, %v2785
        %v2787 = vrot.slane %v2786, 2
        %v2788 = vadd.f32 %v2786, %v2787
        %v2789 = vrot.slane %v2788, 1
        %v2790 = vadd.f32 %v2788, %v2789
        %v2791 = vsel %vm2710, %v2700, 0.0
        %v2792 = vadd.f32 %v2696, %v2791
        %v2793 = vrot.slane %v2792, 4
        %v2794 = vadd.f32 %v2792, %v2793
        %v2795 = vrot.slane %v2794, 2
        %v2796 = vadd.f32 %v2794, %v2795
        %v2797 = vrot.slane %v2796, 1
        %v2798 = vadd.f32 %v2796, %v2797
        %v2799 = vsel %vm2710, %v2701, 0.0
        %v2800 = vadd.f32 %v2697, %v2799
        %v2801 = vrot.slane %v2800, 4
        %v2802 = vadd.f32 %v2800, %v2801
        %v2803 = vrot.slane %v2802, 2
        %v2804 = vadd.f32 %v2802, %v2803
        %v2805 = vrot.slane %v2804, 1
        %v2806 = vadd.f32 %v2804, %v2805
        %v2807 = vsel %vm2710, %v2706, 0.0
        %v2808 = vadd.f32 %v2702, %v2807
        %v2809 = vrot.slane %v2808, 4
        %v2810 = vadd.f32 %v2808, %v2809
        %v2811 = vrot.slane %v2810, 2
        %v2812 = vadd.f32 %v2810, %v2811
        %v2813 = vrot.slane %v2812, 1
        %v2814 = vadd.f32 %v2812, %v2813
        %v2815 = vsel %vm2710, %v2707, 0.0
        %v2816 = vadd.f32 %v2703, %v2815
        %v2817 = vrot.slane %v2816, 4
        %v2818 = vadd.f32 %v2816, %v2817
        %v2819 = vrot.slane %v2818, 2
        %v2820 = vadd.f32 %v2818, %v2819
        %v2821 = vrot.slane %v2820, 1
        %v2822 = vadd.f32 %v2820, %v2821
        %v2823 = vsel %vm2710, %v2708, 0.0
        %v2824 = vadd.f32 %v2704, %v2823
        %v2825 = vrot.slane %v2824, 4
        %v2826 = vadd.f32 %v2824, %v2825
        %v2827 = vrot.slane %v2826, 2
        %v2828 = vadd.f32 %v2826, %v2827
        %v2829 = vrot.slane %v2828, 1
        %v2830 = vadd.f32 %v2828, %v2829
        %v2831 = vsel %vm2710, %v2709, 0.0
        %v2832 = vadd.f32 %v2705, %v2831
        %v2833 = vrot.slane %v2832, 4
        %v2834 = vadd.f32 %v2832, %v2833
        %v2835 = vrot.slane %v2834, 2
        %v2836 = vadd.f32 %v2834, %v2835
        %v2837 = vrot.slane %v2836, 1
        %v2838 = vadd.f32 %v2836, %v2837
        %v2855 = vcombine.low %v2718, %v2726
        %v2856 = vcombine.low %v2734, %v2742
        %v2857 = vcombine.low %v2750, %v2758
        %v2858 = vcombine.low %v2766, %v2774
        %v2859 = vcombine.low %v2782, %v2790
        %v2860 = vcombine.low %v2798, %v2806
        %v2861 = vcombine.low %v2814, %v2822
        %v2862 = vcombine.low %v2830, %v2838
        %v2863 = vrot.slane %v2857, 7
        %vm2864 = vcmask 1041409
        %v2865 = vsel %vm2864, %v2863, %v2855
        %vm2866 = vcmask 1045509
        %v2867 = vsel %vm2866, %v2863, %v2865
        %v2868 = vrot.slane %v2859, 6
        %vm2869 = vcmask 1042434
        %v2870 = vsel %vm2869, %v2868, %v2867
        %vm2871 = vcmask 1046534
        %v2872 = vsel %vm2871, %v2868, %v2870
        %v2873 = vrot.slane %v2861, 5
        %vm2874 = vcmask 1043459
        %v2875 = vsel %vm2874, %v2873, %v2872
        %vm2876 = vcmask 1047559
        %v2877 = vsel %vm2876, %v2873, %v2875
        %v2878 = vrot.slane %v2858, 7
        %v2879 = vsel %vm2864, %v2878, %v2856
        %v2880 = vsel %vm2866, %v2878, %v2879
        %v2881 = vrot.slane %v2860, 6
        %v2882 = vsel %vm2869, %v2881, %v2880
        %v2883 = vsel %vm2871, %v2881, %v2882
        %v2884 = vrot.slane %v2862, 5
        %v2885 = vsel %vm2874, %v2884, %v2883
        %v2886 = vsel %vm2876, %v2884, %v2885
        %2889 = vst [vmem:[%s329] sm:$0xff] %v2877
        %2890 = vst [vmem:[%s329 + $0x8] sm:$0xff] %v2886
        %v2891 = vmul.f32 %v2359, %v2640
        %v2892 = vmul.f32 %v2360, %v2640
        %v2893 = vmul.f32 %v2361, %v2640
        %v2894 = vmul.f32 %v2362, %v2640
        %v2895 = vmul.f32 %v2363, %v2644
        %v2896 = vmul.f32 %v2364, %v2644
        %v2897 = vmul.f32 %v2365, %v2644
        %v2898 = vmul.f32 %v2366, %v2644
        %v2899 = vmul.f32 %v2367, %v2651
        %v2900 = vmul.f32 %v2368, %v2651
        %v2901 = vmul.f32 %v2369, %v2651
        %v2902 = vmul.f32 %v2370, %v2651
        %v2903 = vmul.f32 %v2371, %v2655
        %v2904 = vmul.f32 %v2372, %v2655
        %v2905 = vmul.f32 %v2373, %v2655
        %v2906 = vmul.f32 %v2374, %v2655
        %v2907 = vmul.f32 %v2375, %v2662
        %v2908 = vmul.f32 %v2376, %v2662
        %v2909 = vmul.f32 %v2377, %v2662
        %v2910 = vmul.f32 %v2378, %v2662
        %v2911 = vmul.f32 %v2379, %v2666
        %v2912 = vmul.f32 %v2380, %v2666
        %v2913 = vmul.f32 %v2381, %v2666
        %v2914 = vmul.f32 %v2382, %v2666
        %v2915 = vmul.f32 %v2383, %v2673
        %v2916 = vmul.f32 %v2384, %v2673
        %v2917 = vmul.f32 %v2385, %v2673
        %v2918 = vmul.f32 %v2386, %v2673
        %v2919 = vmul.f32 %v2387, %v2677
        %v2920 = vmul.f32 %v2388, %v2677
        %v2921 = vmul.f32 %v2389, %v2677
        %v2922 = vmul.f32 %v2390, %v2677
        %v2923 = vsel %vm2710, %v2895, 0.0
        %v2924 = vadd.f32 %v2891, %v2923
        %v2925 = vrot.slane %v2924, 4
        %v2926 = vadd.f32 %v2924, %v2925
        %v2927 = vrot.slane %v2926, 2
        %v2928 = vadd.f32 %v2926, %v2927
        %v2929 = vrot.slane %v2928, 1
        %v2930 = vadd.f32 %v2928, %v2929
        %v2931 = vsel %vm2710, %v2896, 0.0
        %v2932 = vadd.f32 %v2892, %v2931
        %v2933 = vrot.slane %v2932, 4
        %v2934 = vadd.f32 %v2932, %v2933
        %v2935 = vrot.slane %v2934, 2
        %v2936 = vadd.f32 %v2934, %v2935
        %v2937 = vrot.slane %v2936, 1
        %v2938 = vadd.f32 %v2936, %v2937
        %v2939 = vsel %vm2710, %v2897, 0.0
        %v2940 = vadd.f32 %v2893, %v2939
        %v2941 = vrot.slane %v2940, 4
        %v2942 = vadd.f32 %v2940, %v2941
        %v2943 = vrot.slane %v2942, 2
        %v2944 = vadd.f32 %v2942, %v2943
        %v2945 = vrot.slane %v2944, 1
        %v2946 = vadd.f32 %v2944, %v2945
        %v2947 = vsel %vm2710, %v2898, 0.0
        %v2948 = vadd.f32 %v2894, %v2947
        %v2949 = vrot.slane %v2948, 4
        %v2950 = vadd.f32 %v2948, %v2949
        %v2951 = vrot.slane %v2950, 2
        %v2952 = vadd.f32 %v2950, %v2951
        %v2953 = vrot.slane %v2952, 1
        %v2954 = vadd.f32 %v2952, %v2953
        %v2955 = vsel %vm2710, %v2903, 0.0
        %v2956 = vadd.f32 %v2899, %v2955
        %v2957 = vrot.slane %v2956, 4
        %v2958 = vadd.f32 %v2956, %v2957
        %v2959 = vrot.slane %v2958, 2
        %v2960 = vadd.f32 %v2958, %v2959
        %v2961 = vrot.slane %v2960, 1
        %v2962 = vadd.f32 %v2960, %v2961
        %v2963 = vsel %vm2710, %v2904, 0.0
        %v2964 = vadd.f32 %v2900, %v2963
        %v2965 = vrot.slane %v2964, 4
        %v2966 = vadd.f32 %v2964, %v2965
        %v2967 = vrot.slane %v2966, 2
        %v2968 = vadd.f32 %v2966, %v2967
        %v2969 = vrot.slane %v2968, 1
        %v2970 = vadd.f32 %v2968, %v2969
        %v2971 = vsel %vm2710, %v2905, 0.0
        %v2972 = vadd.f32 %v2901, %v2971
        %v2973 = vrot.slane %v2972, 4
        %v2974 = vadd.f32 %v2972, %v2973
        %v2975 = vrot.slane %v2974, 2
        %v2976 = vadd.f32 %v2974, %v2975
        %v2977 = vrot.slane %v2976, 1
        %v2978 = vadd.f32 %v2976, %v2977
        %v2979 = vsel %vm2710, %v2906, 0.0
        %v2980 = vadd.f32 %v2902, %v2979
        %v2981 = vrot.slane %v2980, 4
        %v2982 = vadd.f32 %v2980, %v2981
        %v2983 = vrot.slane %v2982, 2
        %v2984 = vadd.f32 %v2982, %v2983
        %v2985 = vrot.slane %v2984, 1
        %v2986 = vadd.f32 %v2984, %v2985
        %v2987 = vsel %vm2710, %v2911, 0.0
        %v2988 = vadd.f32 %v2907, %v2987
        %v2989 = vrot.slane %v2988, 4
        %v2990 = vadd.f32 %v2988, %v2989
        %v2991 = vrot.slane %v2990, 2
        %v2992 = vadd.f32 %v2990, %v2991
        %v2993 = vrot.slane %v2992, 1
        %v2994 = vadd.f32 %v2992, %v2993
        %v2995 = vsel %vm2710, %v2912, 0.0
        %v2996 = vadd.f32 %v2908, %v2995
        %v2997 = vrot.slane %v2996, 4
        %v2998 = vadd.f32 %v2996, %v2997
        %v2999 = vrot.slane %v2998, 2
        %v3000 = vadd.f32 %v2998, %v2999
        %v3001 = vrot.slane %v3000, 1
        %v3002 = vadd.f32 %v3000, %v3001
        %v3003 = vsel %vm2710, %v2913, 0.0
        %v3004 = vadd.f32 %v2909, %v3003
        %v3005 = vrot.slane %v3004, 4
        %v3006 = vadd.f32 %v3004, %v3005
        %v3007 = vrot.slane %v3006, 2
        %v3008 = vadd.f32 %v3006, %v3007
        %v3009 = vrot.slane %v3008, 1
        %v3010 = vadd.f32 %v3008, %v3009
        %v3011 = vsel %vm2710, %v2914, 0.0
        %v3012 = vadd.f32 %v2910, %v3011
        %v3013 = vrot.slane %v3012, 4
        %v3014 = vadd.f32 %v3012, %v3013
        %v3015 = vrot.slane %v3014, 2
        %v3016 = vadd.f32 %v3014, %v3015
        %v3017 = vrot.slane %v3016, 1
        %v3018 = vadd.f32 %v3016, %v3017
        %v3019 = vsel %vm2710, %v2919, 0.0
        %v3020 = vadd.f32 %v2915, %v3019
        %v3021 = vrot.slane %v3020, 4
        %v3022 = vadd.f32 %v3020, %v3021
        %v3023 = vrot.slane %v3022, 2
        %v3024 = vadd.f32 %v3022, %v3023
        %v3025 = vrot.slane %v3024, 1
        %v3026 = vadd.f32 %v3024, %v3025
        %v3027 = vsel %vm2710, %v2920, 0.0
        %v3028 = vadd.f32 %v2916, %v3027
        %v3029 = vrot.slane %v3028, 4
        %v3030 = vadd.f32 %v3028, %v3029
        %v3031 = vrot.slane %v3030, 2
        %v3032 = vadd.f32 %v3030, %v3031
        %v3033 = vrot.slane %v3032, 1
        %v3034 = vadd.f32 %v3032, %v3033
        %v3035 = vsel %vm2710, %v2921, 0.0
        %v3036 = vadd.f32 %v2917, %v3035
        %v3037 = vrot.slane %v3036, 4
        %v3038 = vadd.f32 %v3036, %v3037
        %v3039 = vrot.slane %v3038, 2
        %v3040 = vadd.f32 %v3038, %v3039
        %v3041 = vrot.slane %v3040, 1
        %v3042 = vadd.f32 %v3040, %v3041
        %v3043 = vsel %vm2710, %v2922, 0.0
        %v3044 = vadd.f32 %v2918, %v3043
        %v3045 = vrot.slane %v3044, 4
        %v3046 = vadd.f32 %v3044, %v3045
        %v3047 = vrot.slane %v3046, 2
        %v3048 = vadd.f32 %v3046, %v3047
        %v3049 = vrot.slane %v3048, 1
        %v3050 = vadd.f32 %v3048, %v3049
        %v3067 = vcombine.low %v2930, %v2938
        %v3068 = vcombine.low %v2946, %v2954
        %v3069 = vcombine.low %v2962, %v2970
        %v3070 = vcombine.low %v2978, %v2986
        %v3071 = vcombine.low %v2994, %v3002
        %v3072 = vcombine.low %v3010, %v3018
        %v3073 = vcombine.low %v3026, %v3034
        %v3074 = vcombine.low %v3042, %v3050
        %v3075 = vrot.slane %v3069, 7
        %v3076 = vsel %vm2864, %v3075, %v3067
        %v3077 = vsel %vm2866, %v3075, %v3076
        %v3078 = vrot.slane %v3071, 6
        %v3079 = vsel %vm2869, %v3078, %v3077
        %v3080 = vsel %vm2871, %v3078, %v3079
        %v3081 = vrot.slane %v3073, 5
        %v3082 = vsel %vm2874, %v3081, %v3080
        %v3083 = vsel %vm2876, %v3081, %v3082
        %v3084 = vrot.slane %v3070, 7
        %v3085 = vsel %vm2864, %v3084, %v3068
        %v3086 = vsel %vm2866, %v3084, %v3085
        %v3087 = vrot.slane %v3072, 6
        %v3088 = vsel %vm2869, %v3087, %v3086
        %v3089 = vsel %vm2871, %v3087, %v3088
        %v3090 = vrot.slane %v3074, 5
        %v3091 = vsel %vm2874, %v3090, %v3089
        %v3092 = vsel %vm2876, %v3090, %v3091
        %3095 = vst [vmem:[%s336] sm:$0xff] %v3083
        %3096 = vst [vmem:[%s336 + $0x8] sm:$0xff] %v3092
        %v3097 = vmul.f32 %v2505, %v2640
        %v3098 = vmul.f32 %v2506, %v2640
        %v3099 = vmul.f32 %v2507, %v2640
        %v3100 = vmul.f32 %v2508, %v2640
        %v3101 = vmul.f32 %v2509, %v2644
        %v3102 = vmul.f32 %v2510, %v2644
        %v3103 = vmul.f32 %v2511, %v2644
        %v3104 = vmul.f32 %v2512, %v2644
        %v3105 = vmul.f32 %v2513, %v2651
        %v3106 = vmul.f32 %v2514, %v2651
        %v3107 = vmul.f32 %v2515, %v2651
        %v3108 = vmul.f32 %v2516, %v2651
        %v3109 = vmul.f32 %v2517, %v2655
        %v3110 = vmul.f32 %v2518, %v2655
        %v3111 = vmul.f32 %v2519, %v2655
        %v3112 = vmul.f32 %v2520, %v2655
        %v3113 = vmul.f32 %v2521, %v2662
        %v3114 = vmul.f32 %v2522, %v2662
        %v3115 = vmul.f32 %v2523, %v2662
        %v3116 = vmul.f32 %v2524, %v2662
        %v3117 = vmul.f32 %v2525, %v2666
        %v3118 = vmul.f32 %v2526, %v2666
        %v3119 = vmul.f32 %v2527, %v2666
        %v3120 = vmul.f32 %v2528, %v2666
        %v3121 = vmul.f32 %v2529, %v2673
        %v3122 = vmul.f32 %v2530, %v2673
        %v3123 = vmul.f32 %v2531, %v2673
        %v3124 = vmul.f32 %v2532, %v2673
        %v3125 = vmul.f32 %v2533, %v2677
        %v3126 = vmul.f32 %v2534, %v2677
        %v3127 = vmul.f32 %v2535, %v2677
        %v3128 = vmul.f32 %v2536, %v2677
        %v3129 = vsel %vm2710, %v3101, 0.0
        %v3130 = vadd.f32 %v3097, %v3129
        %v3131 = vrot.slane %v3130, 4
        %v3132 = vadd.f32 %v3130, %v3131
        %v3133 = vrot.slane %v3132, 2
        %v3134 = vadd.f32 %v3132, %v3133
        %v3135 = vrot.slane %v3134, 1
        %v3136 = vadd.f32 %v3134, %v3135
        %v3137 = vsel %vm2710, %v3102, 0.0
        %v3138 = vadd.f32 %v3098, %v3137
        %v3139 = vrot.slane %v3138, 4
        %v3140 = vadd.f32 %v3138, %v3139
        %v3141 = vrot.slane %v3140, 2
        %v3142 = vadd.f32 %v3140, %v3141
        %v3143 = vrot.slane %v3142, 1
        %v3144 = vadd.f32 %v3142, %v3143
        %v3145 = vsel %vm2710, %v3103, 0.0
        %v3146 = vadd.f32 %v3099, %v3145
        %v3147 = vrot.slane %v3146, 4
        %v3148 = vadd.f32 %v3146, %v3147
        %v3149 = vrot.slane %v3148, 2
        %v3150 = vadd.f32 %v3148, %v3149
        %v3151 = vrot.slane %v3150, 1
        %v3152 = vadd.f32 %v3150, %v3151
        %v3153 = vsel %vm2710, %v3104, 0.0
        %v3154 = vadd.f32 %v3100, %v3153
        %v3155 = vrot.slane %v3154, 4
        %v3156 = vadd.f32 %v3154, %v3155
        %v3157 = vrot.slane %v3156, 2
        %v3158 = vadd.f32 %v3156, %v3157
        %v3159 = vrot.slane %v3158, 1
        %v3160 = vadd.f32 %v3158, %v3159
        %v3161 = vsel %vm2710, %v3109, 0.0
        %v3162 = vadd.f32 %v3105, %v3161
        %v3163 = vrot.slane %v3162, 4
        %v3164 = vadd.f32 %v3162, %v3163
        %v3165 = vrot.slane %v3164, 2
        %v3166 = vadd.f32 %v3164, %v3165
        %v3167 = vrot.slane %v3166, 1
        %v3168 = vadd.f32 %v3166, %v3167
        %v3169 = vsel %vm2710, %v3110, 0.0
        %v3170 = vadd.f32 %v3106, %v3169
        %v3171 = vrot.slane %v3170, 4
        %v3172 = vadd.f32 %v3170, %v3171
        %v3173 = vrot.slane %v3172, 2
        %v3174 = vadd.f32 %v3172, %v3173
        %v3175 = vrot.slane %v3174, 1
        %v3176 = vadd.f32 %v3174, %v3175
        %v3177 = vsel %vm2710, %v3111, 0.0
        %v3178 = vadd.f32 %v3107, %v3177
        %v3179 = vrot.slane %v3178, 4
        %v3180 = vadd.f32 %v3178, %v3179
        %v3181 = vrot.slane %v3180, 2
        %v3182 = vadd.f32 %v3180, %v3181
        %v3183 = vrot.slane %v3182, 1
        %v3184 = vadd.f32 %v3182, %v3183
        %v3185 = vsel %vm2710, %v3112, 0.0
        %v3186 = vadd.f32 %v3108, %v3185
        %v3187 = vrot.slane %v3186, 4
        %v3188 = vadd.f32 %v3186, %v3187
        %v3189 = vrot.slane %v3188, 2
        %v3190 = vadd.f32 %v3188, %v3189
        %v3191 = vrot.slane %v3190, 1
        %v3192 = vadd.f32 %v3190, %v3191
        %v3193 = vsel %vm2710, %v3117, 0.0
        %v3194 = vadd.f32 %v3113, %v3193
        %v3195 = vrot.slane %v3194, 4
        %v3196 = vadd.f32 %v3194, %v3195
        %v3197 = vrot.slane %v3196, 2
        %v3198 = vadd.f32 %v3196, %v3197
        %v3199 = vrot.slane %v3198, 1
        %v3200 = vadd.f32 %v3198, %v3199
        %v3201 = vsel %vm2710, %v3118, 0.0
        %v3202 = vadd.f32 %v3114, %v3201
        %v3203 = vrot.slane %v3202, 4
        %v3204 = vadd.f32 %v3202, %v3203
        %v3205 = vrot.slane %v3204, 2
        %v3206 = vadd.f32 %v3204, %v3205
        %v3207 = vrot.slane %v3206, 1
        %v3208 = vadd.f32 %v3206, %v3207
        %v3209 = vsel %vm2710, %v3119, 0.0
        %v3210 = vadd.f32 %v3115, %v3209
        %v3211 = vrot.slane %v3210, 4
        %v3212 = vadd.f32 %v3210, %v3211
        %v3213 = vrot.slane %v3212, 2
        %v3214 = vadd.f32 %v3212, %v3213
        %v3215 = vrot.slane %v3214, 1
        %v3216 = vadd.f32 %v3214, %v3215
        %v3217 = vsel %vm2710, %v3120, 0.0
        %v3218 = vadd.f32 %v3116, %v3217
        %v3219 = vrot.slane %v3218, 4
        %v3220 = vadd.f32 %v3218, %v3219
        %v3221 = vrot.slane %v3220, 2
        %v3222 = vadd.f32 %v3220, %v3221
        %v3223 = vrot.slane %v3222, 1
        %v3224 = vadd.f32 %v3222, %v3223
        %v3225 = vsel %vm2710, %v3125, 0.0
        %v3226 = vadd.f32 %v3121, %v3225
        %v3227 = vrot.slane %v3226, 4
        %v3228 = vadd.f32 %v3226, %v3227
        %v3229 = vrot.slane %v3228, 2
        %v3230 = vadd.f32 %v3228, %v3229
        %v3231 = vrot.slane %v3230, 1
        %v3232 = vadd.f32 %v3230, %v3231
        %v3233 = vsel %vm2710, %v3126, 0.0
        %v3234 = vadd.f32 %v3122, %v3233
        %v3235 = vrot.slane %v3234, 4
        %v3236 = vadd.f32 %v3234, %v3235
        %v3237 = vrot.slane %v3236, 2
        %v3238 = vadd.f32 %v3236, %v3237
        %v3239 = vrot.slane %v3238, 1
        %v3240 = vadd.f32 %v3238, %v3239
        %v3241 = vsel %vm2710, %v3127, 0.0
        %v3242 = vadd.f32 %v3123, %v3241
        %v3243 = vrot.slane %v3242, 4
        %v3244 = vadd.f32 %v3242, %v3243
        %v3245 = vrot.slane %v3244, 2
        %v3246 = vadd.f32 %v3244, %v3245
        %v3247 = vrot.slane %v3246, 1
        %v3248 = vadd.f32 %v3246, %v3247
        %v3249 = vsel %vm2710, %v3128, 0.0
        %v3250 = vadd.f32 %v3124, %v3249
        %v3251 = vrot.slane %v3250, 4
        %v3252 = vadd.f32 %v3250, %v3251
        %v3253 = vrot.slane %v3252, 2
        %v3254 = vadd.f32 %v3252, %v3253
        %v3255 = vrot.slane %v3254, 1
        %v3256 = vadd.f32 %v3254, %v3255
        %v3273 = vcombine.low %v3136, %v3144
        %v3274 = vcombine.low %v3152, %v3160
        %v3275 = vcombine.low %v3168, %v3176
        %v3276 = vcombine.low %v3184, %v3192
        %v3277 = vcombine.low %v3200, %v3208
        %v3278 = vcombine.low %v3216, %v3224
        %v3279 = vcombine.low %v3232, %v3240
        %v3280 = vcombine.low %v3248, %v3256
        %v3281 = vrot.slane %v3275, 7
        %v3282 = vsel %vm2864, %v3281, %v3273
        %v3283 = vsel %vm2866, %v3281, %v3282
        %v3284 = vrot.slane %v3277, 6
        %v3285 = vsel %vm2869, %v3284, %v3283
        %v3286 = vsel %vm2871, %v3284, %v3285
        %v3287 = vrot.slane %v3279, 5
        %v3288 = vsel %vm2874, %v3287, %v3286
        %v3289 = vsel %vm2876, %v3287, %v3288
        %v3290 = vrot.slane %v3276, 7
        %v3291 = vsel %vm2864, %v3290, %v3274
        %v3292 = vsel %vm2866, %v3290, %v3291
        %v3293 = vrot.slane %v3278, 6
        %v3294 = vsel %vm2869, %v3293, %v3292
        %v3295 = vsel %vm2871, %v3293, %v3294
        %v3296 = vrot.slane %v3280, 5
        %v3297 = vsel %vm2874, %v3296, %v3295
        %v3298 = vsel %vm2876, %v3296, %v3297
        %3301 = vst [vmem:[%s343] sm:$0xff] %v3289
        %3302 = vst [vmem:[%s343 + $0x8] sm:$0xff] %v3298
        %s3303 = sand.u32 %s84, 1
        %s3304 = sand.u32 %s84, 1
        %s3305 = smul.addr %s3304, 256
        %s3306 = scalar_lea.vmem [#allocation7], %s3305
        %s3307 = sand.u32 %s110, 1
        %s3308 = sand.u32 %s110, 1
        %s3309 = smul.addr %s3308, 256
        %s3310 = scalar_lea.vmem [#allocation8], %s3309
        %s3311 = sand.u32 %s136, 1
        %s3312 = sand.u32 %s136, 1
        %s3313 = smul.addr %s3312, 256
        %s3314 = scalar_lea.vmem [#allocation9], %s3313
        %s3315 = sand.u32 %s162, 1
        %s3316 = scalar_lea.sflag [#allocation4], %s3315
        %s3317 = sand.u32 %s162, 1
        %s3318 = smul.addr %s3317, 16
        %s3319 = scalar_lea.vmem [#allocation10], %s3318
        %s3320 = sand.u32 %s29, 1
        %s3321 = scalar_lea.sflag [#allocation12], %s3320
        %s3322 = sand.u32 %s188, 1
        %s3323 = smul.addr %s3322, 16
        %s3324 = scalar_lea.vmem [#allocation11], %s3323
        %s3325 = sand.u32 %s29, 1
        %s3326 = scalar_lea.sflag [#allocation12], %s3325
        %s3327 = sand.u32 %s214, 1
        %s3328 = smul.addr %s3327, 16
        %s3329 = scalar_lea.vmem [#allocation13], %s3328
        // Predicated region
        $region37: #{tpu_custom_call.1} parent=27 // pred_check
          %p3330 = pneg %p94
        $region38: #{tpu_custom_call.1} parent=27 // pred_check_branch
          %3332 = sbr.rel (%p3330) target = $region40
        $region39: #{tpu_custom_call.1} parent=27 // pred_region
          %s3333 = smul.u32 4, %s29
          %s3334 = smul.addr %s3333, 8
          %s3335 = scalar_lea.vmem %s2, %s3334
          // Predicated region
          $region41: #{tpu_custom_call.1} parent=39 // pred_check
            _
          $region42: #{tpu_custom_call.1} parent=39 // pred_check_branch
            %3337 = sbr.rel (0) target = $region44
          $region43: #{tpu_custom_call.1} parent=39 // pred_region
            // Predicated region
            $region45: #{tpu_custom_call.1} parent=43 // pred_check
              _
            $region46: #{tpu_custom_call.1} parent=43 // pred_check_branch
              %3339 = sbr.rel (0) target = $region48
            $region47: #{tpu_custom_call.1} parent=43 // pred_region
              loop: start=0, step=1, limit=1
              $region49: #{tpu_custom_call.1} parent=47 // loop_pre_header
                _
              $region50: #{tpu_custom_call.1} parent=47 // loop_header
                %s3341 = sphi 0, %s3345
                %p3342 = scmp.ge.s32.totalorder %s3341, 1
                %s3346 = sphi %s3306, %s3306
                %s3347 = sphi %s3335, %s3335
              $region51: #{tpu_custom_call.1} parent=47 // loop_header_branch
                %3344 = sbr.rel (%p3342) target = $region55
              $region52: #{tpu_custom_call.1} parent=47 // loop_body
                %v3348 = vld [vmem:[%s3346] sm:$0xff]
                %3349 = vst [vmem:[%s3347] sm:$0xff] %v3348
                %v3350 = vld [vmem:[%s3346 + $0x8] sm:$0xff]
                %3351 = vst [vmem:[%s3347 + $0x8] sm:$0xff] %v3350
                %v3352 = vld [vmem:[%s3346 + $0x10] sm:$0xff]
                %3353 = vst [vmem:[%s3347 + $0x10] sm:$0xff] %v3352
                %v3354 = vld [vmem:[%s3346 + $0x18] sm:$0xff]
                %3355 = vst [vmem:[%s3347 + $0x18] sm:$0xff] %v3354
                %v3356 = vld [vmem:[%s3346 + $0x20] sm:$0xff]
                %3357 = vst [vmem:[%s3347 + $0x40] sm:$0xff] %v3356
                %v3358 = vld [vmem:[%s3346 + $0x28] sm:$0xff]
                %3359 = vst [vmem:[%s3347 + $0x48] sm:$0xff] %v3358
                %v3360 = vld [vmem:[%s3346 + $0x30] sm:$0xff]
                %3361 = vst [vmem:[%s3347 + $0x50] sm:$0xff] %v3360
                %v3362 = vld [vmem:[%s3346 + $0x38] sm:$0xff]
                %3363 = vst [vmem:[%s3347 + $0x58] sm:$0xff] %v3362
                %v3364 = vld [vmem:[%s3346 + $0x40] sm:$0xff]
                %3365 = vst [vmem:[%s3347 + $0x80] sm:$0xff] %v3364
                %v3366 = vld [vmem:[%s3346 + $0x48] sm:$0xff]
                %3367 = vst [vmem:[%s3347 + $0x88] sm:$0xff] %v3366
                %v3368 = vld [vmem:[%s3346 + $0x50] sm:$0xff]
                %3369 = vst [vmem:[%s3347 + $0x90] sm:$0xff] %v3368
                %v3370 = vld [vmem:[%s3346 + $0x58] sm:$0xff]
                %3371 = vst [vmem:[%s3347 + $0x98] sm:$0xff] %v3370
                %v3372 = vld [vmem:[%s3346 + $0x60] sm:$0xff]
                %3373 = vst [vmem:[%s3347 + $0xc0] sm:$0xff] %v3372
                %v3374 = vld [vmem:[%s3346 + $0x68] sm:$0xff]
                %3375 = vst [vmem:[%s3347 + $0xc8] sm:$0xff] %v3374
                %v3376 = vld [vmem:[%s3346 + $0x70] sm:$0xff]
                %3377 = vst [vmem:[%s3347 + $0xd0] sm:$0xff] %v3376
                %v3378 = vld [vmem:[%s3346 + $0x78] sm:$0xff]
                %3379 = vst [vmem:[%s3347 + $0xd8] sm:$0xff] %v3378
                %v3380 = vld [vmem:[%s3346 + $0x80] sm:$0xff]
                %3381 = vst [vmem:[%s3347 + $0x100] sm:$0xff] %v3380
                %v3382 = vld [vmem:[%s3346 + $0x88] sm:$0xff]
                %3383 = vst [vmem:[%s3347 + $0x108] sm:$0xff] %v3382
                %v3384 = vld [vmem:[%s3346 + $0x90] sm:$0xff]
                %3385 = vst [vmem:[%s3347 + $0x110] sm:$0xff] %v3384
                %v3386 = vld [vmem:[%s3346 + $0x98] sm:$0xff]
                %3387 = vst [vmem:[%s3347 + $0x118] sm:$0xff] %v3386
                %v3388 = vld [vmem:[%s3346 + $0xa0] sm:$0xff]
                %3389 = vst [vmem:[%s3347 + $0x140] sm:$0xff] %v3388
                %v3390 = vld [vmem:[%s3346 + $0xa8] sm:$0xff]
                %3391 = vst [vmem:[%s3347 + $0x148] sm:$0xff] %v3390
                %v3392 = vld [vmem:[%s3346 + $0xb0] sm:$0xff]
                %3393 = vst [vmem:[%s3347 + $0x150] sm:$0xff] %v3392
                %v3394 = vld [vmem:[%s3346 + $0xb8] sm:$0xff]
                %3395 = vst [vmem:[%s3347 + $0x158] sm:$0xff] %v3394
                %v3396 = vld [vmem:[%s3346 + $0xc0] sm:$0xff]
                %3397 = vst [vmem:[%s3347 + $0x180] sm:$0xff] %v3396
                %v3398 = vld [vmem:[%s3346 + $0xc8] sm:$0xff]
                %3399 = vst [vmem:[%s3347 + $0x188] sm:$0xff] %v3398
                %v3400 = vld [vmem:[%s3346 + $0xd0] sm:$0xff]
                %3401 = vst [vmem:[%s3347 + $0x190] sm:$0xff] %v3400
                %v3402 = vld [vmem:[%s3346 + $0xd8] sm:$0xff]
                %3403 = vst [vmem:[%s3347 + $0x198] sm:$0xff] %v3402
                %v3404 = vld [vmem:[%s3346 + $0xe0] sm:$0xff]
                %3405 = vst [vmem:[%s3347 + $0x1c0] sm:$0xff] %v3404
                %v3406 = vld [vmem:[%s3346 + $0xe8] sm:$0xff]
                %3407 = vst [vmem:[%s3347 + $0x1c8] sm:$0xff] %v3406
                %v3408 = vld [vmem:[%s3346 + $0xf0] sm:$0xff]
                %3409 = vst [vmem:[%s3347 + $0x1d0] sm:$0xff] %v3408
                %v3410 = vld [vmem:[%s3346 + $0xf8] sm:$0xff]
                %3411 = vst [vmem:[%s3347 + $0x1d8] sm:$0xff] %v3410
              $region53: #{tpu_custom_call.1} parent=47 // loop_footer
                %s3345 = sadd.s32 1, %s3341
              $region54: #{tpu_custom_call.1} parent=47 // loop_footer_branch
                %3340 = sbr.rel target = $region50
              $region55: #{tpu_custom_call.1} parent=47 // loop_exit
                _
            $region48: #{tpu_custom_call.1} parent=43 // pred_fallthru
              _
            // Predicated region
            $region56: #{tpu_custom_call.1} parent=43 // pred_check
              _
            $region57: #{tpu_custom_call.1} parent=43 // pred_check_branch
              %3413 = sbr.rel target = $region59
            $region58: #{tpu_custom_call.1} parent=43 // pred_region
              _
            $region59: #{tpu_custom_call.1} parent=43 // pred_fallthru
              _
          $region44: #{tpu_custom_call.1} parent=39 // pred_fallthru
            _
          %3414 = vnop
        $region40: #{tpu_custom_call.1} parent=27 // pred_fallthru
          _
        // Predicated region
        $region60: #{tpu_custom_call.1} parent=27 // pred_check
          %p3415 = pneg %p120
        $region61: #{tpu_custom_call.1} parent=27 // pred_check_branch
          %3417 = sbr.rel (%p3415) target = $region63
        $region62: #{tpu_custom_call.1} parent=27 // pred_region
          %s3418 = smul.u32 4, %s29
          %s3419 = smul.addr %s3418, 8
          %s3420 = scalar_lea.vmem %s3, %s3419
          // Predicated region
          $region64: #{tpu_custom_call.1} parent=62 // pred_check
            _
          $region65: #{tpu_custom_call.1} parent=62 // pred_check_branch
            %3422 = sbr.rel (0) target = $region67
          $region66: #{tpu_custom_call.1} parent=62 // pred_region
            // Predicated region
            $region68: #{tpu_custom_call.1} parent=66 // pred_check
              _
            $region69: #{tpu_custom_call.1} parent=66 // pred_check_branch
              %3424 = sbr.rel (0) target = $region71
            $region70: #{tpu_custom_call.1} parent=66 // pred_region
              loop: start=0, step=1, limit=1
              $region72: #{tpu_custom_call.1} parent=70 // loop_pre_header
                _
              $region73: #{tpu_custom_call.1} parent=70 // loop_header
                %s3426 = sphi 0, %s3430
                %p3427 = scmp.ge.s32.totalorder %s3426, 1
                %s3431 = sphi %s3310, %s3310
                %s3432 = sphi %s3420, %s3420
              $region74: #{tpu_custom_call.1} parent=70 // loop_header_branch
                %3429 = sbr.rel (%p3427) target = $region78
              $region75: #{tpu_custom_call.1} parent=70 // loop_body
                %v3433 = vld [vmem:[%s3431] sm:$0xff]
                %3434 = vst [vmem:[%s3432] sm:$0xff] %v3433
                %v3435 = vld [vmem:[%s3431 + $0x8] sm:$0xff]
                %3436 = vst [vmem:[%s3432 + $0x8] sm:$0xff] %v3435
                %v3437 = vld [vmem:[%s3431 + $0x10] sm:$0xff]
                %3438 = vst [vmem:[%s3432 + $0x10] sm:$0xff] %v3437
                %v3439 = vld [vmem:[%s3431 + $0x18] sm:$0xff]
                %3440 = vst [vmem:[%s3432 + $0x18] sm:$0xff] %v3439
                %v3441 = vld [vmem:[%s3431 + $0x20] sm:$0xff]
                %3442 = vst [vmem:[%s3432 + $0x40] sm:$0xff] %v3441
                %v3443 = vld [vmem:[%s3431 + $0x28] sm:$0xff]
                %3444 = vst [vmem:[%s3432 + $0x48] sm:$0xff] %v3443
                %v3445 = vld [vmem:[%s3431 + $0x30] sm:$0xff]
                %3446 = vst [vmem:[%s3432 + $0x50] sm:$0xff] %v3445
                %v3447 = vld [vmem:[%s3431 + $0x38] sm:$0xff]
                %3448 = vst [vmem:[%s3432 + $0x58] sm:$0xff] %v3447
                %v3449 = vld [vmem:[%s3431 + $0x40] sm:$0xff]
                %3450 = vst [vmem:[%s3432 + $0x80] sm:$0xff] %v3449
                %v3451 = vld [vmem:[%s3431 + $0x48] sm:$0xff]
                %3452 = vst [vmem:[%s3432 + $0x88] sm:$0xff] %v3451
                %v3453 = vld [vmem:[%s3431 + $0x50] sm:$0xff]
                %3454 = vst [vmem:[%s3432 + $0x90] sm:$0xff] %v3453
                %v3455 = vld [vmem:[%s3431 + $0x58] sm:$0xff]
                %3456 = vst [vmem:[%s3432 + $0x98] sm:$0xff] %v3455
                %v3457 = vld [vmem:[%s3431 + $0x60] sm:$0xff]
                %3458 = vst [vmem:[%s3432 + $0xc0] sm:$0xff] %v3457
                %v3459 = vld [vmem:[%s3431 + $0x68] sm:$0xff]
                %3460 = vst [vmem:[%s3432 + $0xc8] sm:$0xff] %v3459
                %v3461 = vld [vmem:[%s3431 + $0x70] sm:$0xff]
                %3462 = vst [vmem:[%s3432 + $0xd0] sm:$0xff] %v3461
                %v3463 = vld [vmem:[%s3431 + $0x78] sm:$0xff]
                %3464 = vst [vmem:[%s3432 + $0xd8] sm:$0xff] %v3463
                %v3465 = vld [vmem:[%s3431 + $0x80] sm:$0xff]
                %3466 = vst [vmem:[%s3432 + $0x100] sm:$0xff] %v3465
                %v3467 = vld [vmem:[%s3431 + $0x88] sm:$0xff]
                %3468 = vst [vmem:[%s3432 + $0x108] sm:$0xff] %v3467
                %v3469 = vld [vmem:[%s3431 + $0x90] sm:$0xff]
                %3470 = vst [vmem:[%s3432 + $0x110] sm:$0xff] %v3469
                %v3471 = vld [vmem:[%s3431 + $0x98] sm:$0xff]
                %3472 = vst [vmem:[%s3432 + $0x118] sm:$0xff] %v3471
                %v3473 = vld [vmem:[%s3431 + $0xa0] sm:$0xff]
                %3474 = vst [vmem:[%s3432 + $0x140] sm:$0xff] %v3473
                %v3475 = vld [vmem:[%s3431 + $0xa8] sm:$0xff]
                %3476 = vst [vmem:[%s3432 + $0x148] sm:$0xff] %v3475
                %v3477 = vld [vmem:[%s3431 + $0xb0] sm:$0xff]
                %3478 = vst [vmem:[%s3432 + $0x150] sm:$0xff] %v3477
                %v3479 = vld [vmem:[%s3431 + $0xb8] sm:$0xff]
                %3480 = vst [vmem:[%s3432 + $0x158] sm:$0xff] %v3479
                %v3481 = vld [vmem:[%s3431 + $0xc0] sm:$0xff]
                %3482 = vst [vmem:[%s3432 + $0x180] sm:$0xff] %v3481
                %v3483 = vld [vmem:[%s3431 + $0xc8] sm:$0xff]
                %3484 = vst [vmem:[%s3432 + $0x188] sm:$0xff] %v3483
                %v3485 = vld [vmem:[%s3431 + $0xd0] sm:$0xff]
                %3486 = vst [vmem:[%s3432 + $0x190] sm:$0xff] %v3485
                %v3487 = vld [vmem:[%s3431 + $0xd8] sm:$0xff]
                %3488 = vst [vmem:[%s3432 + $0x198] sm:$0xff] %v3487
                %v3489 = vld [vmem:[%s3431 + $0xe0] sm:$0xff]
                %3490 = vst [vmem:[%s3432 + $0x1c0] sm:$0xff] %v3489
                %v3491 = vld [vmem:[%s3431 + $0xe8] sm:$0xff]
                %3492 = vst [vmem:[%s3432 + $0x1c8] sm:$0xff] %v3491
                %v3493 = vld [vmem:[%s3431 + $0xf0] sm:$0xff]
                %3494 = vst [vmem:[%s3432 + $0x1d0] sm:$0xff] %v3493
                %v3495 = vld [vmem:[%s3431 + $0xf8] sm:$0xff]
                %3496 = vst [vmem:[%s3432 + $0x1d8] sm:$0xff] %v3495
              $region76: #{tpu_custom_call.1} parent=70 // loop_footer
                %s3430 = sadd.s32 1, %s3426
              $region77: #{tpu_custom_call.1} parent=70 // loop_footer_branch
                %3425 = sbr.rel target = $region73
              $region78: #{tpu_custom_call.1} parent=70 // loop_exit
                _
            $region71: #{tpu_custom_call.1} parent=66 // pred_fallthru
              _
            // Predicated region
            $region79: #{tpu_custom_call.1} parent=66 // pred_check
              _
            $region80: #{tpu_custom_call.1} parent=66 // pred_check_branch
              %3498 = sbr.rel target = $region82
            $region81: #{tpu_custom_call.1} parent=66 // pred_region
              _
            $region82: #{tpu_custom_call.1} parent=66 // pred_fallthru
              _
          $region67: #{tpu_custom_call.1} parent=62 // pred_fallthru
            _
          %3499 = vnop
        $region63: #{tpu_custom_call.1} parent=27 // pred_fallthru
          _
        // Predicated region
        $region83: #{tpu_custom_call.1} parent=27 // pred_check
          %p3500 = pneg %p146
        $region84: #{tpu_custom_call.1} parent=27 // pred_check_branch
          %3502 = sbr.rel (%p3500) target = $region86
        $region85: #{tpu_custom_call.1} parent=27 // pred_region
          %s3503 = smul.u32 4, %s29
          %s3504 = smul.addr %s3503, 8
          %s3505 = scalar_lea.vmem %s4, %s3504
          // Predicated region
          $region87: #{tpu_custom_call.1} parent=85 // pred_check
            _
          $region88: #{tpu_custom_call.1} parent=85 // pred_check_branch
            %3507 = sbr.rel (0) target = $region90
          $region89: #{tpu_custom_call.1} parent=85 // pred_region
            // Predicated region
            $region91: #{tpu_custom_call.1} parent=89 // pred_check
              _
            $region92: #{tpu_custom_call.1} parent=89 // pred_check_branch
              %3509 = sbr.rel (0) target = $region94
            $region93: #{tpu_custom_call.1} parent=89 // pred_region
              loop: start=0, step=1, limit=1
              $region95: #{tpu_custom_call.1} parent=93 // loop_pre_header
                _
              $region96: #{tpu_custom_call.1} parent=93 // loop_header
                %s3511 = sphi 0, %s3515
                %p3512 = scmp.ge.s32.totalorder %s3511, 1
                %s3516 = sphi %s3314, %s3314
                %s3517 = sphi %s3505, %s3505
              $region97: #{tpu_custom_call.1} parent=93 // loop_header_branch
                %3514 = sbr.rel (%p3512) target = $region101
              $region98: #{tpu_custom_call.1} parent=93 // loop_body
                %v3518 = vld [vmem:[%s3516] sm:$0xff]
                %3519 = vst [vmem:[%s3517] sm:$0xff] %v3518
                %v3520 = vld [vmem:[%s3516 + $0x8] sm:$0xff]
                %3521 = vst [vmem:[%s3517 + $0x8] sm:$0xff] %v3520
                %v3522 = vld [vmem:[%s3516 + $0x10] sm:$0xff]
                %3523 = vst [vmem:[%s3517 + $0x10] sm:$0xff] %v3522
                %v3524 = vld [vmem:[%s3516 + $0x18] sm:$0xff]
                %3525 = vst [vmem:[%s3517 + $0x18] sm:$0xff] %v3524
                %v3526 = vld [vmem:[%s3516 + $0x20] sm:$0xff]
                %3527 = vst [vmem:[%s3517 + $0x40] sm:$0xff] %v3526
                %v3528 = vld [vmem:[%s3516 + $0x28] sm:$0xff]
                %3529 = vst [vmem:[%s3517 + $0x48] sm:$0xff] %v3528
                %v3530 = vld [vmem:[%s3516 + $0x30] sm:$0xff]
                %3531 = vst [vmem:[%s3517 + $0x50] sm:$0xff] %v3530
                %v3532 = vld [vmem:[%s3516 + $0x38] sm:$0xff]
                %3533 = vst [vmem:[%s3517 + $0x58] sm:$0xff] %v3532
                %v3534 = vld [vmem:[%s3516 + $0x40] sm:$0xff]
                %3535 = vst [vmem:[%s3517 + $0x80] sm:$0xff] %v3534
                %v3536 = vld [vmem:[%s3516 + $0x48] sm:$0xff]
                %3537 = vst [vmem:[%s3517 + $0x88] sm:$0xff] %v3536
                %v3538 = vld [vmem:[%s3516 + $0x50] sm:$0xff]
                %3539 = vst [vmem:[%s3517 + $0x90] sm:$0xff] %v3538
                %v3540 = vld [vmem:[%s3516 + $0x58] sm:$0xff]
                %3541 = vst [vmem:[%s3517 + $0x98] sm:$0xff] %v3540
                %v3542 = vld [vmem:[%s3516 + $0x60] sm:$0xff]
                %3543 = vst [vmem:[%s3517 + $0xc0] sm:$0xff] %v3542
                %v3544 = vld [vmem:[%s3516 + $0x68] sm:$0xff]
                %3545 = vst [vmem:[%s3517 + $0xc8] sm:$0xff] %v3544
                %v3546 = vld [vmem:[%s3516 + $0x70] sm:$0xff]
                %3547 = vst [vmem:[%s3517 + $0xd0] sm:$0xff] %v3546
                %v3548 = vld [vmem:[%s3516 + $0x78] sm:$0xff]
                %3549 = vst [vmem:[%s3517 + $0xd8] sm:$0xff] %v3548
                %v3550 = vld [vmem:[%s3516 + $0x80] sm:$0xff]
                %3551 = vst [vmem:[%s3517 + $0x100] sm:$0xff] %v3550
                %v3552 = vld [vmem:[%s3516 + $0x88] sm:$0xff]
                %3553 = vst [vmem:[%s3517 + $0x108] sm:$0xff] %v3552
                %v3554 = vld [vmem:[%s3516 + $0x90] sm:$0xff]
                %3555 = vst [vmem:[%s3517 + $0x110] sm:$0xff] %v3554
                %v3556 = vld [vmem:[%s3516 + $0x98] sm:$0xff]
                %3557 = vst [vmem:[%s3517 + $0x118] sm:$0xff] %v3556
                %v3558 = vld [vmem:[%s3516 + $0xa0] sm:$0xff]
                %3559 = vst [vmem:[%s3517 + $0x140] sm:$0xff] %v3558
                %v3560 = vld [vmem:[%s3516 + $0xa8] sm:$0xff]
                %3561 = vst [vmem:[%s3517 + $0x148] sm:$0xff] %v3560
                %v3562 = vld [vmem:[%s3516 + $0xb0] sm:$0xff]
                %3563 = vst [vmem:[%s3517 + $0x150] sm:$0xff] %v3562
                %v3564 = vld [vmem:[%s3516 + $0xb8] sm:$0xff]
                %3565 = vst [vmem:[%s3517 + $0x158] sm:$0xff] %v3564
                %v3566 = vld [vmem:[%s3516 + $0xc0] sm:$0xff]
                %3567 = vst [vmem:[%s3517 + $0x180] sm:$0xff] %v3566
                %v3568 = vld [vmem:[%s3516 + $0xc8] sm:$0xff]
                %3569 = vst [vmem:[%s3517 + $0x188] sm:$0xff] %v3568
                %v3570 = vld [vmem:[%s3516 + $0xd0] sm:$0xff]
                %3571 = vst [vmem:[%s3517 + $0x190] sm:$0xff] %v3570
                %v3572 = vld [vmem:[%s3516 + $0xd8] sm:$0xff]
                %3573 = vst [vmem:[%s3517 + $0x198] sm:$0xff] %v3572
                %v3574 = vld [vmem:[%s3516 + $0xe0] sm:$0xff]
                %3575 = vst [vmem:[%s3517 + $0x1c0] sm:$0xff] %v3574
                %v3576 = vld [vmem:[%s3516 + $0xe8] sm:$0xff]
                %3577 = vst [vmem:[%s3517 + $0x1c8] sm:$0xff] %v3576
                %v3578 = vld [vmem:[%s3516 + $0xf0] sm:$0xff]
                %3579 = vst [vmem:[%s3517 + $0x1d0] sm:$0xff] %v3578
                %v3580 = vld [vmem:[%s3516 + $0xf8] sm:$0xff]
                %3581 = vst [vmem:[%s3517 + $0x1d8] sm:$0xff] %v3580
              $region99: #{tpu_custom_call.1} parent=93 // loop_footer
                %s3515 = sadd.s32 1, %s3511
              $region100: #{tpu_custom_call.1} parent=93 // loop_footer_branch
                %3510 = sbr.rel target = $region96
              $region101: #{tpu_custom_call.1} parent=93 // loop_exit
                _
            $region94: #{tpu_custom_call.1} parent=89 // pred_fallthru
              _
            // Predicated region
            $region102: #{tpu_custom_call.1} parent=89 // pred_check
              _
            $region103: #{tpu_custom_call.1} parent=89 // pred_check_branch
              %3583 = sbr.rel target = $region105
            $region104: #{tpu_custom_call.1} parent=89 // pred_region
              _
            $region105: #{tpu_custom_call.1} parent=89 // pred_fallthru
              _
          $region90: #{tpu_custom_call.1} parent=85 // pred_fallthru
            _
          %3584 = vnop
        $region86: #{tpu_custom_call.1} parent=27 // pred_fallthru
          _
        // Predicated region
        $region106: #{tpu_custom_call.1} parent=27 // pred_check
          %p3585 = pneg %p172
        $region107: #{tpu_custom_call.1} parent=27 // pred_check_branch
          %3587 = sbr.rel (%p3585) target = $region109
        $region108: #{tpu_custom_call.1} parent=27 // pred_region
          %s3588 = smul.u32 4, %s29
          %s3590 = ssub.s32 256, 256
          %3591 = vsyncadd %s3316, %s3590
          %s3592 = smul.addr %s3588, 64
          %s3593 = scalar_lea.hbm %s5, %s3592
          %s3595 = sshll.u32 %s3319, 4
          %s3596 = int_to_ptr.vmem [resolvable:$true] %s3595
          %3598 = dma.vmem_to_hbm [thread:$0]  %s3596, 256, %s3593, %s3316
        $region109: #{tpu_custom_call.1} parent=27 // pred_fallthru
          _
        // Predicated region
        $region110: #{tpu_custom_call.1} parent=27 // pred_check
          %p3599 = pneg %p198
        $region111: #{tpu_custom_call.1} parent=27 // pred_check_branch
          %3601 = sbr.rel (%p3599) target = $region113
        $region112: #{tpu_custom_call.1} parent=27 // pred_region
          %s3602 = smul.u32 4, %s29
          %s3604 = ssub.s32 256, 256
          %3605 = vsyncadd %s3321, %s3604
          %s3606 = smul.addr %s3602, 64
          %s3607 = scalar_lea.hbm %s6, %s3606
          %s3609 = sshll.u32 %s3324, 4
          %s3610 = int_to_ptr.vmem [resolvable:$true] %s3609
          %3612 = dma.vmem_to_hbm [thread:$0]  %s3610, 256, %s3607, %s3321
        $region113: #{tpu_custom_call.1} parent=27 // pred_fallthru
          _
        // Predicated region
        $region114: #{tpu_custom_call.1} parent=27 // pred_check
          %p3613 = pneg %p224
        $region115: #{tpu_custom_call.1} parent=27 // pred_check_branch
          %3615 = sbr.rel (%p3613) target = $region117
        $region116: #{tpu_custom_call.1} parent=27 // pred_region
          %s3616 = smul.u32 4, %s29
          %s3618 = ssub.s32 256, 256
          %3619 = vsyncadd %s3326, %s3618
          %s3620 = smul.addr %s3616, 64
          %s3621 = scalar_lea.hbm %s7, %s3620
          %s3623 = sshll.u32 %s3329, 4
          %s3624 = int_to_ptr.vmem [resolvable:$true] %s3623
          %3626 = dma.vmem_to_hbm [thread:$0]  %s3624, 256, %s3621, %s3326
        $region117: #{tpu_custom_call.1} parent=27 // pred_fallthru
          _
      $region28: #{tpu_custom_call.1} parent=5 // pred_fallthru
        _
      %p3627 = scmp.le.s32.totalorder 2, %s24
      // Predicated region
      $region118: #{tpu_custom_call.1} parent=5 // pred_check
        %p3628 = pneg %p3627
      $region119: #{tpu_custom_call.1} parent=5 // pred_check_branch
        %3630 = sbr.rel (%p3628) target = $region121
      $region120: #{tpu_custom_call.1} parent=5 // pred_region
        %s3631 = ssub.s32 %s24, 2
        // Predicated region
        $region122: #{tpu_custom_call.1} parent=120 // pred_check
          %p3632 = pneg %p100
        $region123: #{tpu_custom_call.1} parent=120 // pred_check_branch
          %3634 = sbr.rel (%p3632) target = $region125
        $region124: #{tpu_custom_call.1} parent=120 // pred_region
          %s3635 = sand.u32 %s85, 1
          %s3636 = sand.u32 %s85, 1
          %s3637 = smul.addr %s3636, 256
          %s3638 = scalar_lea.vmem [#allocation7], %s3637
        $region125: #{tpu_custom_call.1} parent=120 // pred_fallthru
          _
        // Predicated region
        $region126: #{tpu_custom_call.1} parent=120 // pred_check
          %p3639 = pneg %p126
        $region127: #{tpu_custom_call.1} parent=120 // pred_check_branch
          %3641 = sbr.rel (%p3639) target = $region129
        $region128: #{tpu_custom_call.1} parent=120 // pred_region
          %s3642 = sand.u32 %s111, 1
          %s3643 = sand.u32 %s111, 1
          %s3644 = smul.addr %s3643, 256
          %s3645 = scalar_lea.vmem [#allocation8], %s3644
        $region129: #{tpu_custom_call.1} parent=120 // pred_fallthru
          _
        // Predicated region
        $region130: #{tpu_custom_call.1} parent=120 // pred_check
          %p3646 = pneg %p152
        $region131: #{tpu_custom_call.1} parent=120 // pred_check_branch
          %3648 = sbr.rel (%p3646) target = $region133
        $region132: #{tpu_custom_call.1} parent=120 // pred_region
          %s3649 = sand.u32 %s137, 1
          %s3650 = sand.u32 %s137, 1
          %s3651 = smul.addr %s3650, 256
          %s3652 = scalar_lea.vmem [#allocation9], %s3651
        $region133: #{tpu_custom_call.1} parent=120 // pred_fallthru
          _
        // Predicated region
        $region134: #{tpu_custom_call.1} parent=120 // pred_check
          %p3653 = pneg %p178
        $region135: #{tpu_custom_call.1} parent=120 // pred_check_branch
          %3655 = sbr.rel (%p3653) target = $region137
        $region136: #{tpu_custom_call.1} parent=120 // pred_region
          %s3656 = sand.u32 %s163, 1
          %s3657 = scalar_lea.sflag [#allocation4], %s3656
          %s3658 = sand.u32 %s163, 1
          %s3659 = smul.addr %s3658, 16
          %s3660 = scalar_lea.vmem [#allocation10], %s3659
          %3661 = dma.done %s3657, 256
        $region137: #{tpu_custom_call.1} parent=120 // pred_fallthru
          _
        // Predicated region
        $region138: #{tpu_custom_call.1} parent=120 // pred_check
          %p3662 = pneg %p204
        $region139: #{tpu_custom_call.1} parent=120 // pred_check_branch
          %3664 = sbr.rel (%p3662) target = $region141
        $region140: #{tpu_custom_call.1} parent=120 // pred_region
          %s3665 = sand.u32 %s30, 1
          %s3666 = scalar_lea.sflag [#allocation12], %s3665
          %s3667 = sand.u32 %s189, 1
          %s3668 = smul.addr %s3667, 16
          %s3669 = scalar_lea.vmem [#allocation11], %s3668
          %3670 = dma.done %s3666, 256
        $region141: #{tpu_custom_call.1} parent=120 // pred_fallthru
          _
        // Predicated region
        $region142: #{tpu_custom_call.1} parent=120 // pred_check
          %p3671 = pneg %p230
        $region143: #{tpu_custom_call.1} parent=120 // pred_check_branch
          %3673 = sbr.rel (%p3671) target = $region145
        $region144: #{tpu_custom_call.1} parent=120 // pred_region
          %s3674 = sand.u32 %s30, 1
          %s3675 = scalar_lea.sflag [#allocation12], %s3674
          %s3676 = sand.u32 %s215, 1
          %s3677 = smul.addr %s3676, 16
          %s3678 = scalar_lea.vmem [#allocation13], %s3677
          %3679 = dma.done %s3675, 256
        $region145: #{tpu_custom_call.1} parent=120 // pred_fallthru
          _
      $region121: #{tpu_custom_call.1} parent=5 // pred_fallthru
        _
    $region6: #{tpu_custom_call.1} parent=1 // loop_footer
      %s28 = sadd.s32 1, %s24
    $region7: #{tpu_custom_call.1} parent=1 // loop_footer_branch
      %23 = sbr.rel target = $region3
    $region8: #{tpu_custom_call.1} parent=1 // loop_exit
      _
    %3680 = vsyncpa [#allocation3], 1
    %s3681 = scalar_lea.sflag [#allocation3], 1
    %3682 = vsyncpa %s3681, 1
    %3683 = vsyncpa [#allocation6], 1
    %3684 = vsyncpa [#allocation4], 1
    %s3685 = scalar_lea.sflag [#allocation4], 1
    %3686 = vsyncpa %s3685, 1
    %3687 = vsyncpa [#allocation12], 1
    %s3688 = scalar_lea.sflag [#allocation12], 1
    %3689 = vsyncpa %s3688, 1

</llo_original>
